<compile_context>
chip_gen: v7x
topology: tpu7x:2x2x1
jax: 0.10.0
libtpu: 0.0.40
codegen_flags: <defaults>
</compile_context>

<pallas_src>
import functools
import math

import jax
import jax.numpy as jnp
import numpy as np
from jax.experimental import pallas as pl
from jax.experimental.pallas import tpu as pltpu

_VMEM = pl.BlockSpec(memory_space=pltpu.MemorySpace.VMEM)
_BN_EPS = 1e-5
_LANE = 128


def _round_up(x, m):
    return (x + m - 1) // m * m


def _pick_tile(total, candidates):
    for c in candidates:
        if total % c == 0:
            return c
    return total


# ----------------------------- Pallas kernels -------------------------------

def _gemm_bn_act_kernel(x_ref, w_ref, scale_ref, shift_ref, o_ref, acc_ref, *, relu):
    # x: (tm, tk) bf16, w: (tk, tn) bf16, scale/shift: (1, tn) f32.
    @pl.when(pl.program_id(2) == 0)
    def _init():
        acc_ref[...] = jnp.zeros_like(acc_ref)

    acc_ref[...] += jnp.dot(x_ref[...], w_ref[...],
                            preferred_element_type=jnp.float32)

    @pl.when(pl.program_id(2) == pl.num_programs(2) - 1)
    def _finish():
        y = acc_ref[...] * scale_ref[...] + shift_ref[...]
        if relu:
            y = jnp.maximum(y, 0.0)
        o_ref[...] = y


def _context_kernel(q_ref, m_ref, c_ref):
    # q: (B, 1, D), m: (B, L, D) -> c: (B, D) (ReLU'd; downstream only uses relu(c))
    q = q_ref[...]
    m = m_ref[...]
    a = jnp.einsum('bld,bkd->blk', m, q,
                   preferred_element_type=jnp.float32)          # (B, L, 1), MXU
    a = a - jnp.max(a, axis=1, keepdims=True)
    e = jnp.exp(a)
    alpha = e * pl.reciprocal(jnp.sum(e, axis=1, keepdims=True), approx=True)
    c = jnp.sum(m * alpha, axis=1)                              # (B, D)
    c_ref[...] = jnp.maximum(c, 0.0)


def _gru_gate_kernel(gi_ref, gh_ref, h_ref, o_ref, *, gs):
    # gi/gh: (M, 3*gs) = [r | z | n] at lane-aligned offsets, h: (M, gs)
    gi = gi_ref[...]
    gh = gh_ref[...]
    r = jax.nn.sigmoid(gi[:, :gs] + gh[:, :gs])
    z = jax.nn.sigmoid(gi[:, gs:2 * gs] + gh[:, gs:2 * gs])
    n = jnp.tanh(gi[:, 2 * gs:] + r * gh[:, 2 * gs:])
    o_ref[...] = (1.0 - z) * n + z * h_ref[...]


# ----------------------------- kernel wrappers -------------------------------

def _gemm_fused(x_mat, w_pad, scale_pad, shift_pad, *, relu, n_out):
    # x_mat: (M, K) f32/bf16; w_pad: (Kp, Np) bf16 (128-padded); returns (M, n_out) f32.
    m_rows, k_dim = x_mat.shape
    kp, np_ = w_pad.shape

    m8 = _round_up(m_rows, 8)
    if m8 <= 512:
        tm, mp = m8, m8
    else:
        tm = min((512, 384, 256, 128), key=lambda t: _round_up(m8, t))
        mp = _round_up(m8, tm)
    tk = _pick_tile(kp, (512, 384, 256, 128))
    tn = _pick_tile(np_, (256, 128))

    x_p = x_mat.astype(jnp.bfloat16)
    if (mp, kp) != (m_rows, k_dim):
        x_p = jnp.pad(x_p, ((0, mp - m_rows), (0, kp - k_dim)))

    grid = (mp // tm, np_ // tn, kp // tk)
    out = pl.pallas_call(
        functools.partial(_gemm_bn_act_kernel, relu=relu),
        out_shape=jax.ShapeDtypeStruct((mp, np_), jnp.float32),
        grid_spec=pltpu.PrefetchScalarGridSpec(
            num_scalar_prefetch=0,
            grid=grid,
            in_specs=[
                pl.BlockSpec((tm, tk), lambda i, j, k: (i, k)),
                pl.BlockSpec((tk, tn), lambda i, j, k: (k, j)),
                pl.BlockSpec((1, tn), lambda i, j, k: (0, j)),
                pl.BlockSpec((1, tn), lambda i, j, k: (0, j)),
            ],
            out_specs=pl.BlockSpec((tm, tn), lambda i, j, k: (i, j)),
            scratch_shapes=[pltpu.VMEM((tm, tn), jnp.float32)],
        ),
        compiler_params=pltpu.CompilerParams(
            dimension_semantics=("parallel", "parallel", "arbitrary"),
            vmem_limit_bytes=32 * 1024 * 1024,
        ),
    )(x_p, w_pad, scale_pad, shift_pad)
    if mp != m_rows or np_ != n_out:
        out = out[:m_rows, :n_out]
    return out


def context_attention(q_vec, m_flat):
    b, _, d = q_vec.shape
    return pl.pallas_call(
        _context_kernel,
        out_shape=jax.ShapeDtypeStruct((b, d), jnp.float32),
        in_specs=[_VMEM, _VMEM],
        out_specs=_VMEM,
    )(q_vec, m_flat)


def gru_gates(gi, gh, h_pad, gate_stride):
    m_rows = h_pad.shape[0]
    return pl.pallas_call(
        functools.partial(_gru_gate_kernel, gs=gate_stride),
        out_shape=jax.ShapeDtypeStruct((m_rows, gate_stride), jnp.float32),
        in_specs=[_VMEM, _VMEM, _VMEM],
        out_specs=_VMEM,
    )(gi, gh, h_pad)


# ----------------------------- conv glue (channels-last) ---------------------

def _im2col(x_nhwc, k, pad):
    # TODO(synk): fold the k*k-tap gather into the GEMM kernel (manual DMA of
    # shifted NHWC slabs) to avoid materializing the expanded patch matrix in
    # HBM for large spatial sizes.
    b, h, w, c = x_nhwc.shape
    if k == 1:
        return x_nhwc.reshape(b * h * w, c)
    xp = jnp.pad(x_nhwc, ((0, 0), (pad, pad), (pad, pad), (0, 0)))
    cols = [xp[:, i:i + h, j:j + w, :].reshape(b * h * w, c)
            for i in range(k) for j in range(k)]
    return jnp.concatenate(cols, axis=1)


def conv2d_nhwc(x_nhwc, layer, *, k, pad, cout, relu):
    b, h, w, _ = x_nhwc.shape
    x_mat = _im2col(x_nhwc, k, pad)
    y = _gemm_fused(x_mat, layer['w'], layer['scale'], layer['shift'],
                    relu=relu, n_out=cout)
    return y.reshape(b, h, w, cout)


# ----------------------------- weight preparation (host, once) ---------------

def _conv_w_mat(w):
    # torch conv weight (Cout, Cin, kh, kw) -> (kh*kw*Cin, Cout); row order
    # (kh, kw, cin) matches _im2col column order.
    cout, cin, kh, kw = w.shape
    return jnp.transpose(w, (2, 3, 1, 0)).reshape(kh * kw * cin, cout)


def _bn_scale_shift(bias, bn, cout):
    if bn is None:
        return jnp.ones((cout,), jnp.float32), bias.astype(jnp.float32)
    gamma, beta, mean, var = bn
    inv = gamma / jnp.sqrt(var + _BN_EPS)
    return inv, beta - mean * inv + bias * inv   # BN(conv + bias) folded


def _pack_gemm_weights(w_mat, scale, shift):
    k_dim, n_dim = w_mat.shape
    kp, np_ = _round_up(k_dim, _LANE), _round_up(n_dim, _LANE)
    w_pad = jnp.zeros((kp, np_), jnp.bfloat16).at[:k_dim, :n_dim].set(
        w_mat.astype(jnp.bfloat16))
    scale_pad = jnp.zeros((1, np_), jnp.float32).at[0, :n_dim].set(scale)
    shift_pad = jnp.zeros((1, np_), jnp.float32).at[0, :n_dim].set(shift)
    return {'w': w_pad, 'scale': scale_pad, 'shift': shift_pad}


def _prep_conv(conv_p, bn=None, transpose=False):
    w = conv_p['w']
    if transpose:
        # ConvTranspose2d(k=3, stride=1, padding=1) == Conv2d(3, 1, 1) with the
        # channel axes swapped and the kernel spatially flipped.
        w = jnp.transpose(w, (1, 0, 2, 3))[:, :, ::-1, ::-1]
    cout = w.shape[0]
    scale, shift = _bn_scale_shift(conv_p['bias'], bn, cout)
    return _pack_gemm_weights(_conv_w_mat(w), scale, shift)


def _prep_q_writer_interface(q_p, wi_p):
    # q: Conv2d(32+F -> F); writer_interface: Conv2d(32 -> F).  Both read the
    # same s_r = concat([s, r]) activations, so stack them along Cout into one
    # GEMM (writer_interface gets zero weights on the r channels).
    f, cin_q = q_p['w'].shape[0], q_p['w'].shape[1]
    s_ch = wi_p['w'].shape[1]
    wi_full = jnp.zeros((f, cin_q, 3, 3), jnp.float32).at[:, :s_ch].set(wi_p['w'])
    w = jnp.concatenate([q_p['w'], wi_full], axis=0)
    bias = jnp.concatenate([q_p['bias'], wi_p['bias']])
    return _prep_conv({'w': w, 'bias': bias})


def _prep_gru_side(convs, gate_stride):
    # Fuse one GRU side's 3 gate convolutions (r, z, n) into a single GEMM.
    # Each gate's Cout block sits at a lane-aligned offset (gate_stride =
    # round_up(m_h, 128)) so the gate kernel slices are lane-dense.
    m_h = convs[0]['w'].shape[0]
    k_dim = 9 * m_h
    kp = _round_up(k_dim, _LANE)
    np_ = 3 * gate_stride
    w_pad = jnp.zeros((kp, np_), jnp.bfloat16)
    scale = jnp.zeros((1, np_), jnp.float32)
    shift = jnp.zeros((1, np_), jnp.float32)
    for g, c in enumerate(convs):
        off = g * gate_stride
        w_pad = w_pad.at[:k_dim, off:off + m_h].set(
            _conv_w_mat(c['w']).astype(jnp.bfloat16))
        scale = scale.at[0, off:off + m_h].set(1.0)
        shift = shift.at[0, off:off + m_h].set(c['bias'])
    return {'w': w_pad, 'scale': scale, 'shift': shift}


def prepare_params(params):
    m_h = params['w_i_r']['w'].shape[0]
    gate_stride = _round_up(m_h, _LANE)
    return {
        'reader': [_prep_conv(c, bn=b)
                   for c, b in zip(params['reader'], params['reader_bn'])],
        'q_wi': _prep_q_writer_interface(params['q'], params['writer_interface']),
        'writer': [_prep_conv(c, bn=b, transpose=True)
                   for c, b in zip(params['writer'], params['writer_bn'])],
        'output_interface': _prep_conv(params['output_interface']),
        'gru_i': _prep_gru_side(
            [params['w_i_r'], params['w_i_z'], params['w_i_n']], gate_stride),
        'gru_h': _prep_gru_side(
            [params['w_h_r'], params['w_h_z'], params['w_h_n']], gate_stride),
    }


# ----------------------------- raw parameters --------------------------------

def _orthogonal(key, shape, gain):
    rows = shape[0]
    cols = int(np.prod(shape[1:]))
    big, small = max(rows, cols), min(rows, cols)
    a = jax.random.normal(key, (big, small), dtype=jnp.float32)
    q, _ = jnp.linalg.qr(a)
    q = q if rows >= cols else q.T
    return (gain * q[:rows, :cols]).reshape(shape)


def init_params(key, m_features, m_h, s_ch=32):
    gain = math.sqrt(2.0)  # nn.init.calculate_gain('relu')
    c1 = int(m_h / 3 * 4)
    c2 = int(m_h / 3)
    keys = iter(jax.random.split(key, 32))

    def conv_p(cout, cin, k):
        return {'w': _orthogonal(next(keys), (cout, cin, k, k), gain),
                'bias': jnp.zeros((cout,), jnp.float32)}

    def convt_p(cin, cout, k):
        return {'w': _orthogonal(next(keys), (cin, cout, k, k), gain),
                'bias': jnp.zeros((cout,), jnp.float32)}

    def bn_p(c):  # (gamma, beta, running_mean, running_var)
        return (jnp.ones((c,), jnp.float32), jnp.zeros((c,), jnp.float32),
                jnp.zeros((c,), jnp.float32), jnp.ones((c,), jnp.float32))

    return {
        'reader': [conv_p(c1, m_h, 3), conv_p(c2, c1, 3), conv_p(m_features, c2, 3)],
        'reader_bn': [bn_p(c1), bn_p(c2), bn_p(m_features)],
        'q': conv_p(m_features, s_ch + m_features, 3),
        'writer_interface': conv_p(m_features, s_ch, 3),
        'writer': [convt_p(m_features * 3, c2, 3), convt_p(c2, c1, 3), convt_p(c1, m_h, 3)],
        'writer_bn': [bn_p(c2), bn_p(c1), bn_p(m_h)],
        'output_interface': conv_p(s_ch, s_ch + 2 * m_features, 1),
        'w_i_r': conv_p(m_h, m_h, 3), 'w_h_r': conv_p(m_h, m_h, 3),
        'w_i_z': conv_p(m_h, m_h, 3), 'w_h_z': conv_p(m_h, m_h, 3),
        'w_i_n': conv_p(m_h, m_h, 3), 'w_h_n': conv_p(m_h, m_h, 3),
    }


# ----------------------------- forward ---------------------------------------

def conv_map_cell_forward(prep, s_nchw, m):
    # s: (B, 32, X, Y) NCHW;  m: (B, F, L, X, Y)
    B, s_ch, X, Y = s_nchw.shape
    F_, L = m.shape[1], m.shape[2]
    m_h = F_ * L
    c1, c2 = m_h // 3 * 4, m_h // 3
    gate_stride = _round_up(m_h, _LANE)

    # channels-last everywhere inside the cell; NCHW only at the boundaries.
    s = jnp.transpose(s_nchw, (0, 2, 3, 1))                          # (B,X,Y,32)
    # merged memory, channel index = l*F + f (torch merge_memory ordering)
    m_merged = jnp.transpose(m, (0, 3, 4, 2, 1)).reshape(B, X, Y, m_h)

    # --- read ---
    x = conv2d_nhwc(m_merged, prep['reader'][0], k=3, pad=1, cout=c1, relu=True)
    x = conv2d_nhwc(x, prep['reader'][1], k=3, pad=1, cout=c2, relu=True)
    r_map = conv2d_nhwc(x, prep['reader'][2], k=3, pad=1, cout=F_, relu=True)

    # --- q + writer_interface (single fused GEMM on the same im2col) ---
    s_r = jnp.concatenate([s, r_map], axis=-1)                       # (B,X,Y,32+F)
    qs = conv2d_nhwc(s_r, prep['q_wi'], k=3, pad=1, cout=2 * F_, relu=True)
    q_map, s_in = qs[..., :F_], qs[..., F_:]

    # --- context attention over the L memory slots ---
    d = X * Y * F_
    q_vec = q_map.reshape(B, 1, d)                                   # (x,y,f) flatten
    m_flat = jnp.transpose(m, (0, 2, 3, 4, 1)).reshape(B, L, d)      # same flatten per slot
    c_map = context_attention(q_vec, m_flat).reshape(B, X, Y, F_)    # already ReLU'd

    # --- write (ConvTranspose2d k3 s1 p1 == flipped Conv2d) ---
    layer_in = jnp.concatenate([c_map, r_map, s_in], axis=-1)        # (B,X,Y,3F)
    w = conv2d_nhwc(layer_in, prep['writer'][0], k=3, pad=1, cout=c2, relu=True)
    w = conv2d_nhwc(w, prep['writer'][1], k=3, pad=1, cout=c1, relu=True)
    w_map = conv2d_nhwc(w, prep['writer'][2], k=3, pad=1, cout=m_h, relu=True)

    # --- output interface (1x1 conv; uses the in-place-ReLU'd c and r) ---
    c_r_s = jnp.concatenate([c_map, r_map, s], axis=-1)              # (B,X,Y,2F+32)
    o = conv2d_nhwc(c_r_s, prep['output_interface'], k=1, pad=0, cout=s_ch, relu=True)

    # --- soft update (conv GRU: 6 convs fused into 2 GEMMs + 1 gate kernel) ---
    # writer output channel = f*L + l  ->  merged GRU channel = l*F + f
    x_m = jnp.transpose(w_map.reshape(B, X, Y, F_, L),
                        (0, 1, 2, 4, 3)).reshape(B, X, Y, m_h)
    gi = conv2d_nhwc(x_m, prep['gru_i'], k=3, pad=1,
                     cout=3 * gate_stride, relu=False)
    gh = conv2d_nhwc(m_merged, prep['gru_h'], k=3, pad=1,
                     cout=3 * gate_stride, relu=False)
    h_pad = jnp.pad(m_merged.reshape(B * X * Y, m_h),
                    ((0, 0), (0, gate_stride - m_h)))
    h_new = gru_gates(gi.reshape(B * X * Y, 3 * gate_stride),
                      gh.reshape(B * X * Y, 3 * gate_stride),
                      h_pad, gate_stride)[:, :m_h]
    h_new = h_new.reshape(B, X, Y, L, F_)
    w_out = jnp.transpose(h_new, (0, 4, 3, 1, 2))                    # (B,F,L,X,Y)

    return jnp.transpose(o, (0, 3, 1, 2)), w_out


# ----------------------------- main -------------------------------------------

if __name__ == "__main__":
    B = 2
    m_features = 1
    m_h = 12                 # small stand-in for 21*16; divisible by 3 and F
    m_x = m_y = 6
    s_ch = 32
    m_len = m_h // m_features

    key = jax.random.PRNGKey(0)
    k_params, k_s, k_m = jax.random.split(key, 3)
    params = init_params(k_params, m_features, m_h, s_ch)
    prep = prepare_params(params)          # weights packed/padded to bf16 once
    s = jax.random.normal(k_s, (B, s_ch, m_x, m_y), dtype=jnp.float32)
    m = jax.random.normal(k_m, (B, m_features, m_len, m_x, m_y), dtype=jnp.float32)

    fwd = jax.jit(conv_map_cell_forward)
    o, w = fwd(prep, s, m)
    jax.block_until_ready((o, w))

    assert o.shape == (B, s_ch, m_x, m_y), o.shape
    assert w.shape == (B, m_features, m_len, m_x, m_y), w.shape
    assert bool(jnp.all(jnp.isfinite(o))) and bool(jnp.all(jnp.isfinite(w)))
    print("KERNEL_OK")
</pallas_src>

<mosaic_0001>
module attributes {stable_mosaic.version = 11 : i64} {
  func.func @_gemm_bn_act_kernel(%arg0: i32, %arg1: i32, %arg2: i32, %arg3: memref<72x128xbf16, #tpu.memory_space<vmem>>, %arg4: memref<128x128xbf16, #tpu.memory_space<vmem>>, %arg5: memref<1x128xf32, #tpu.memory_space<vmem>>, %arg6: memref<1x128xf32, #tpu.memory_space<vmem>>, %arg7: memref<72x128xf32, #tpu.memory_space<vmem>>, %arg8: memref<72x128xf32, #tpu.memory_space<vmem>>) attributes {dimension_semantics = [#tpu.dimension_semantics<parallel>, #tpu.dimension_semantics<parallel>, #tpu.dimension_semantics<arbitrary>], iteration_bounds = array<i64: 1, 1, 1>, scalar_prefetch = 0 : i64, scratch_operands = 1 : i64, tpu.core_type = #tpu.core_type<tc>, window_params = [{transform_indices = @transform_0, window_bounds = array<i64: 72, 128>}, {transform_indices = @transform_1, window_bounds = array<i64: 128, 128>}, {transform_indices = @transform_2, window_bounds = array<i64: 1, 128>}, {transform_indices = @transform_3, window_bounds = array<i64: 1, 128>}, {transform_indices = @transform_4, window_bounds = array<i64: 72, 128>}]} {
    %c0_i32 = arith.constant 0 : i32
    %0 = arith.cmpi eq, %arg2, %c0_i32 : i32
    %1 = arith.extui %0 : i1 to i32
    %c0_i32_0 = arith.constant 0 : i32
    %2 = arith.cmpi ne, %1, %c0_i32_0 : i32
    scf.if %2 {
      %cst_10 = arith.constant 0.000000e+00 : f32
      %12 = vector.broadcast %cst_10 : f32 to vector<72x128xf32>
      %c0_11 = arith.constant 0 : index
      %c0_12 = arith.constant 0 : index
      %13 = vector.load %arg8[%c0_11, %c0_12] : memref<72x128xf32, #tpu.memory_space<vmem>>, vector<72x128xf32>
      tpu.vector_store %arg8[%c0_11, %c0_12], %12 {strides = array<i32>} : memref<72x128xf32, #tpu.memory_space<vmem>>, vector<72x128xf32>,
    } else {
    }
    %c0 = arith.constant 0 : index
    %c0_1 = arith.constant 0 : index
    %3 = vector.load %arg8[%c0, %c0_1] : memref<72x128xf32, #tpu.memory_space<vmem>>, vector<72x128xf32>
    %c0_2 = arith.constant 0 : index
    %c0_3 = arith.constant 0 : index
    %4 = vector.load %arg3[%c0_2, %c0_3] : memref<72x128xbf16, #tpu.memory_space<vmem>>, vector<72x128xbf16>
    %c0_4 = arith.constant 0 : index
    %c0_5 = arith.constant 0 : index
    %5 = vector.load %arg4[%c0_4, %c0_5] : memref<128x128xbf16, #tpu.memory_space<vmem>>, vector<128x128xbf16>
    %cst = arith.constant dense<0.000000e+00> : vector<72x128xf32>
    %6 = tpu.matmul %4, %5, %cst {dimension_numbers = #tpu.dot_dimension_numbers<[1], [0], [0], [1], [0, 0, 1, 1], [], []>} : vector<72x128xbf16>, vector<128x128xbf16>, vector<72x128xf32> -> vector<72x128xf32>
    %7 = arith.addf %3, %6 : vector<72x128xf32>
    %c0_6 = arith.constant 0 : index
    %c0_7 = arith.constant 0 : index
    %8 = vector.load %arg8[%c0_6, %c0_7] : memref<72x128xf32, #tpu.memory_space<vmem>>, vector<72x128xf32>
    tpu.vector_store %arg8[%c0_6, %c0_7], %7 {strides = array<i32>} : memref<72x128xf32, #tpu.memory_space<vmem>>, vector<72x128xf32>,
    %c0_i32_8 = arith.constant 0 : i32
    %9 = arith.cmpi eq, %arg2, %c0_i32_8 : i32
    %10 = arith.extui %9 : i1 to i32
    %c0_i32_9 = arith.constant 0 : i32
    %11 = arith.cmpi ne, %10, %c0_i32_9 : i32
    scf.if %11 {
      %c0_10 = arith.constant 0 : index
      %c0_11 = arith.constant 0 : index
      %12 = vector.load %arg8[%c0_10, %c0_11] : memref<72x128xf32, #tpu.memory_space<vmem>>, vector<72x128xf32>
      %c0_12 = arith.constant 0 : index
      %c0_13 = arith.constant 0 : index
      %13 = vector.load %arg5[%c0_12, %c0_13] : memref<1x128xf32, #tpu.memory_space<vmem>>, vector<1x128xf32>
      %14 = vector.broadcast %13 : vector<1x128xf32> to vector<72x128xf32>
      %15 = arith.mulf %12, %14 : vector<72x128xf32>
      %c0_14 = arith.constant 0 : index
      %c0_15 = arith.constant 0 : index
      %16 = vector.load %arg6[%c0_14, %c0_15] : memref<1x128xf32, #tpu.memory_space<vmem>>, vector<1x128xf32>
      %17 = vector.broadcast %16 : vector<1x128xf32> to vector<72x128xf32>
      %18 = arith.addf %15, %17 : vector<72x128xf32>
      %cst_16 = arith.constant 0.000000e+00 : f32
      %19 = vector.broadcast %cst_16 : f32 to vector<72x128xf32>
      %20 = arith.maximumf %18, %19 : vector<72x128xf32>
      %c0_17 = arith.constant 0 : index
      %c0_18 = arith.constant 0 : index
      %21 = vector.load %arg7[%c0_17, %c0_18] : memref<72x128xf32, #tpu.memory_space<vmem>>, vector<72x128xf32>
      tpu.vector_store %arg7[%c0_17, %c0_18], %20 {strides = array<i32>} : memref<72x128xf32, #tpu.memory_space<vmem>>, vector<72x128xf32>,
    } else {
    }
    return
  }
  func.func @transform_0(%arg0: i32, %arg1: i32, %arg2: i32) -> (i32, i32) {
    %c0_i32 = arith.constant 0 : i32
    return %arg0, %arg2 : i32, i32
  }
  func.func @transform_1(%arg0: i32, %arg1: i32, %arg2: i32) -> (i32, i32) {
    %c0_i32 = arith.constant 0 : i32
    return %arg2, %arg1 : i32, i32
  }
  func.func @transform_2(%arg0: i32, %arg1: i32, %arg2: i32) -> (i32, i32) {
    %c0_i32 = arith.constant 0 : i32
    %c0_i32_0 = arith.constant 0 : i32
    return %c0_i32, %arg1 : i32, i32
  }
  func.func @transform_3(%arg0: i32, %arg1: i32, %arg2: i32) -> (i32, i32) {
    %c0_i32 = arith.constant 0 : i32
    %c0_i32_0 = arith.constant 0 : i32
    return %c0_i32, %arg1 : i32, i32
  }
  func.func @transform_4(%arg0: i32, %arg1: i32, %arg2: i32) -> (i32, i32) {
    %c0_i32 = arith.constant 0 : i32
    return %arg0, %arg1 : i32, i32
  }
}

module attributes {stable_mosaic.version = 11 : i64} {
  func.func @_gemm_bn_act_kernel(%arg0: i32, %arg1: i32, %arg2: i32, %arg3: memref<72x256xbf16, #tpu.memory_space<vmem>>, %arg4: memref<256x128xbf16, #tpu.memory_space<vmem>>, %arg5: memref<1x128xf32, #tpu.memory_space<vmem>>, %arg6: memref<1x128xf32, #tpu.memory_space<vmem>>, %arg7: memref<72x128xf32, #tpu.memory_space<vmem>>, %arg8: memref<72x128xf32, #tpu.memory_space<vmem>>) attributes {dimension_semantics = [#tpu.dimension_semantics<parallel>, #tpu.dimension_semantics<parallel>, #tpu.dimension_semantics<arbitrary>], iteration_bounds = array<i64: 1, 1, 1>, scalar_prefetch = 0 : i64, scratch_operands = 1 : i64, tpu.core_type = #tpu.core_type<tc>, window_params = [{transform_indices = @transform_0, window_bounds = array<i64: 72, 256>}, {transform_indices = @transform_1, window_bounds = array<i64: 256, 128>}, {transform_indices = @transform_2, window_bounds = array<i64: 1, 128>}, {transform_indices = @transform_3, window_bounds = array<i64: 1, 128>}, {transform_indices = @transform_4, window_bounds = array<i64: 72, 128>}]} {
    %c0_i32 = arith.constant 0 : i32
    %0 = arith.cmpi eq, %arg2, %c0_i32 : i32
    %1 = arith.extui %0 : i1 to i32
    %c0_i32_0 = arith.constant 0 : i32
    %2 = arith.cmpi ne, %1, %c0_i32_0 : i32
    scf.if %2 {
      %cst_10 = arith.constant 0.000000e+00 : f32
      %12 = vector.broadcast %cst_10 : f32 to vector<72x128xf32>
      %c0_11 = arith.constant 0 : index
      %c0_12 = arith.constant 0 : index
      %13 = vector.load %arg8[%c0_11, %c0_12] : memref<72x128xf32, #tpu.memory_space<vmem>>, vector<72x128xf32>
      tpu.vector_store %arg8[%c0_11, %c0_12], %12 {strides = array<i32>} : memref<72x128xf32, #tpu.memory_space<vmem>>, vector<72x128xf32>,
    } else {
    }
    %c0 = arith.constant 0 : index
    %c0_1 = arith.constant 0 : index
    %3 = vector.load %arg8[%c0, %c0_1] : memref<72x128xf32, #tpu.memory_space<vmem>>, vector<72x128xf32>
    %c0_2 = arith.constant 0 : index
    %c0_3 = arith.constant 0 : index
    %4 = vector.load %arg3[%c0_2, %c0_3] : memref<72x256xbf16, #tpu.memory_space<vmem>>, vector<72x256xbf16>
    %c0_4 = arith.constant 0 : index
    %c0_5 = arith.constant 0 : index
    %5 = vector.load %arg4[%c0_4, %c0_5] : memref<256x128xbf16, #tpu.memory_space<vmem>>, vector<256x128xbf16>
    %cst = arith.constant dense<0.000000e+00> : vector<72x128xf32>
    %6 = tpu.matmul %4, %5, %cst {dimension_numbers = #tpu.dot_dimension_numbers<[1], [0], [0], [1], [0, 0, 1, 1], [], []>} : vector<72x256xbf16>, vector<256x128xbf16>, vector<72x128xf32> -> vector<72x128xf32>
    %7 = arith.addf %3, %6 : vector<72x128xf32>
    %c0_6 = arith.constant 0 : index
    %c0_7 = arith.constant 0 : index
    %8 = vector.load %arg8[%c0_6, %c0_7] : memref<72x128xf32, #tpu.memory_space<vmem>>, vector<72x128xf32>
    tpu.vector_store %arg8[%c0_6, %c0_7], %7 {strides = array<i32>} : memref<72x128xf32, #tpu.memory_space<vmem>>, vector<72x128xf32>,
    %c0_i32_8 = arith.constant 0 : i32
    %9 = arith.cmpi eq, %arg2, %c0_i32_8 : i32
    %10 = arith.extui %9 : i1 to i32
    %c0_i32_9 = arith.constant 0 : i32
    %11 = arith.cmpi ne, %10, %c0_i32_9 : i32
    scf.if %11 {
      %c0_10 = arith.constant 0 : index
      %c0_11 = arith.constant 0 : index
      %12 = vector.load %arg8[%c0_10, %c0_11] : memref<72x128xf32, #tpu.memory_space<vmem>>, vector<72x128xf32>
      %c0_12 = arith.constant 0 : index
      %c0_13 = arith.constant 0 : index
      %13 = vector.load %arg5[%c0_12, %c0_13] : memref<1x128xf32, #tpu.memory_space<vmem>>, vector<1x128xf32>
      %14 = vector.broadcast %13 : vector<1x128xf32> to vector<72x128xf32>
      %15 = arith.mulf %12, %14 : vector<72x128xf32>
      %c0_14 = arith.constant 0 : index
      %c0_15 = arith.constant 0 : index
      %16 = vector.load %arg6[%c0_14, %c0_15] : memref<1x128xf32, #tpu.memory_space<vmem>>, vector<1x128xf32>
      %17 = vector.broadcast %16 : vector<1x128xf32> to vector<72x128xf32>
      %18 = arith.addf %15, %17 : vector<72x128xf32>
      %cst_16 = arith.constant 0.000000e+00 : f32
      %19 = vector.broadcast %cst_16 : f32 to vector<72x128xf32>
      %20 = arith.maximumf %18, %19 : vector<72x128xf32>
      %c0_17 = arith.constant 0 : index
      %c0_18 = arith.constant 0 : index
      %21 = vector.load %arg7[%c0_17, %c0_18] : memref<72x128xf32, #tpu.memory_space<vmem>>, vector<72x128xf32>
      tpu.vector_store %arg7[%c0_17, %c0_18], %20 {strides = array<i32>} : memref<72x128xf32, #tpu.memory_space<vmem>>, vector<72x128xf32>,
    } else {
    }
    return
  }
  func.func @transform_0(%arg0: i32, %arg1: i32, %arg2: i32) -> (i32, i32) {
    %c0_i32 = arith.constant 0 : i32
    return %arg0, %arg2 : i32, i32
  }
  func.func @transform_1(%arg0: i32, %arg1: i32, %arg2: i32) -> (i32, i32) {
    %c0_i32 = arith.constant 0 : i32
    return %arg2, %arg1 : i32, i32
  }
  func.func @transform_2(%arg0: i32, %arg1: i32, %arg2: i32) -> (i32, i32) {
    %c0_i32 = arith.constant 0 : i32
    %c0_i32_0 = arith.constant 0 : i32
    return %c0_i32, %arg1 : i32, i32
  }
  func.func @transform_3(%arg0: i32, %arg1: i32, %arg2: i32) -> (i32, i32) {
    %c0_i32 = arith.constant 0 : i32
    %c0_i32_0 = arith.constant 0 : i32
    return %c0_i32, %arg1 : i32, i32
  }
  func.func @transform_4(%arg0: i32, %arg1: i32, %arg2: i32) -> (i32, i32) {
    %c0_i32 = arith.constant 0 : i32
    return %arg0, %arg1 : i32, i32
  }
}

module attributes {stable_mosaic.version = 11 : i64} {
  func.func @_gemm_bn_act_kernel(%arg0: i32, %arg1: i32, %arg2: i32, %arg3: memref<72x384xbf16, #tpu.memory_space<vmem>>, %arg4: memref<384x128xbf16, #tpu.memory_space<vmem>>, %arg5: memref<1x128xf32, #tpu.memory_space<vmem>>, %arg6: memref<1x128xf32, #tpu.memory_space<vmem>>, %arg7: memref<72x128xf32, #tpu.memory_space<vmem>>, %arg8: memref<72x128xf32, #tpu.memory_space<vmem>>) attributes {dimension_semantics = [#tpu.dimension_semantics<parallel>, #tpu.dimension_semantics<parallel>, #tpu.dimension_semantics<arbitrary>], iteration_bounds = array<i64: 1, 1, 1>, scalar_prefetch = 0 : i64, scratch_operands = 1 : i64, tpu.core_type = #tpu.core_type<tc>, window_params = [{transform_indices = @transform_0, window_bounds = array<i64: 72, 384>}, {transform_indices = @transform_1, window_bounds = array<i64: 384, 128>}, {transform_indices = @transform_2, window_bounds = array<i64: 1, 128>}, {transform_indices = @transform_3, window_bounds = array<i64: 1, 128>}, {transform_indices = @transform_4, window_bounds = array<i64: 72, 128>}]} {
    %c0_i32 = arith.constant 0 : i32
    %0 = arith.cmpi eq, %arg2, %c0_i32 : i32
    %1 = arith.extui %0 : i1 to i32
    %c0_i32_0 = arith.constant 0 : i32
    %2 = arith.cmpi ne, %1, %c0_i32_0 : i32
    scf.if %2 {
      %cst_10 = arith.constant 0.000000e+00 : f32
      %12 = vector.broadcast %cst_10 : f32 to vector<72x128xf32>
      %c0_11 = arith.constant 0 : index
      %c0_12 = arith.constant 0 : index
      %13 = vector.load %arg8[%c0_11, %c0_12] : memref<72x128xf32, #tpu.memory_space<vmem>>, vector<72x128xf32>
      tpu.vector_store %arg8[%c0_11, %c0_12], %12 {strides = array<i32>} : memref<72x128xf32, #tpu.memory_space<vmem>>, vector<72x128xf32>,
    } else {
    }
    %c0 = arith.constant 0 : index
    %c0_1 = arith.constant 0 : index
    %3 = vector.load %arg8[%c0, %c0_1] : memref<72x128xf32, #tpu.memory_space<vmem>>, vector<72x128xf32>
    %c0_2 = arith.constant 0 : index
    %c0_3 = arith.constant 0 : index
    %4 = vector.load %arg3[%c0_2, %c0_3] : memref<72x384xbf16, #tpu.memory_space<vmem>>, vector<72x384xbf16>
    %c0_4 = arith.constant 0 : index
    %c0_5 = arith.constant 0 : index
    %5 = vector.load %arg4[%c0_4, %c0_5] : memref<384x128xbf16, #tpu.memory_space<vmem>>, vector<384x128xbf16>
    %cst = arith.constant dense<0.000000e+00> : vector<72x128xf32>
    %6 = tpu.matmul %4, %5, %cst {dimension_numbers = #tpu.dot_dimension_numbers<[1], [0], [0], [1], [0, 0, 1, 1], [], []>} : vector<72x384xbf16>, vector<384x128xbf16>, vector<72x128xf32> -> vector<72x128xf32>
    %7 = arith.addf %3, %6 : vector<72x128xf32>
    %c0_6 = arith.constant 0 : index
    %c0_7 = arith.constant 0 : index
    %8 = vector.load %arg8[%c0_6, %c0_7] : memref<72x128xf32, #tpu.memory_space<vmem>>, vector<72x128xf32>
    tpu.vector_store %arg8[%c0_6, %c0_7], %7 {strides = array<i32>} : memref<72x128xf32, #tpu.memory_space<vmem>>, vector<72x128xf32>,
    %c0_i32_8 = arith.constant 0 : i32
    %9 = arith.cmpi eq, %arg2, %c0_i32_8 : i32
    %10 = arith.extui %9 : i1 to i32
    %c0_i32_9 = arith.constant 0 : i32
    %11 = arith.cmpi ne, %10, %c0_i32_9 : i32
    scf.if %11 {
      %c0_10 = arith.constant 0 : index
      %c0_11 = arith.constant 0 : index
      %12 = vector.load %arg8[%c0_10, %c0_11] : memref<72x128xf32, #tpu.memory_space<vmem>>, vector<72x128xf32>
      %c0_12 = arith.constant 0 : index
      %c0_13 = arith.constant 0 : index
      %13 = vector.load %arg5[%c0_12, %c0_13] : memref<1x128xf32, #tpu.memory_space<vmem>>, vector<1x128xf32>
      %14 = vector.broadcast %13 : vector<1x128xf32> to vector<72x128xf32>
      %15 = arith.mulf %12, %14 : vector<72x128xf32>
      %c0_14 = arith.constant 0 : index
      %c0_15 = arith.constant 0 : index
      %16 = vector.load %arg6[%c0_14, %c0_15] : memref<1x128xf32, #tpu.memory_space<vmem>>, vector<1x128xf32>
      %17 = vector.broadcast %16 : vector<1x128xf32> to vector<72x128xf32>
      %18 = arith.addf %15, %17 : vector<72x128xf32>
      %cst_16 = arith.constant 0.000000e+00 : f32
      %19 = vector.broadcast %cst_16 : f32 to vector<72x128xf32>
      %20 = arith.maximumf %18, %19 : vector<72x128xf32>
      %c0_17 = arith.constant 0 : index
      %c0_18 = arith.constant 0 : index
      %21 = vector.load %arg7[%c0_17, %c0_18] : memref<72x128xf32, #tpu.memory_space<vmem>>, vector<72x128xf32>
      tpu.vector_store %arg7[%c0_17, %c0_18], %20 {strides = array<i32>} : memref<72x128xf32, #tpu.memory_space<vmem>>, vector<72x128xf32>,
    } else {
    }
    return
  }
  func.func @transform_0(%arg0: i32, %arg1: i32, %arg2: i32) -> (i32, i32) {
    %c0_i32 = arith.constant 0 : i32
    return %arg0, %arg2 : i32, i32
  }
  func.func @transform_1(%arg0: i32, %arg1: i32, %arg2: i32) -> (i32, i32) {
    %c0_i32 = arith.constant 0 : i32
    return %arg2, %arg1 : i32, i32
  }
  func.func @transform_2(%arg0: i32, %arg1: i32, %arg2: i32) -> (i32, i32) {
    %c0_i32 = arith.constant 0 : i32
    %c0_i32_0 = arith.constant 0 : i32
    return %c0_i32, %arg1 : i32, i32
  }
  func.func @transform_3(%arg0: i32, %arg1: i32, %arg2: i32) -> (i32, i32) {
    %c0_i32 = arith.constant 0 : i32
    %c0_i32_0 = arith.constant 0 : i32
    return %c0_i32, %arg1 : i32, i32
  }
  func.func @transform_4(%arg0: i32, %arg1: i32, %arg2: i32) -> (i32, i32) {
    %c0_i32 = arith.constant 0 : i32
    return %arg0, %arg1 : i32, i32
  }
}

module attributes {stable_mosaic.version = 11 : i64} {
  func.func @_context_kernel(%arg0: memref<2x1x36xf32, #tpu.memory_space<vmem>>, %arg1: memref<2x12x36xf32, #tpu.memory_space<vmem>>, %arg2: memref<2x36xf32, #tpu.memory_space<vmem>>) attributes {dimension_semantics = [], scalar_prefetch = 0 : i64, scratch_operands = 0 : i64, tpu.core_type = #tpu.core_type<tc>} {
    %c0 = arith.constant 0 : index
    %c0_0 = arith.constant 0 : index
    %c0_1 = arith.constant 0 : index
    %0 = vector.load %arg0[%c0, %c0_0, %c0_1] : memref<2x1x36xf32, #tpu.memory_space<vmem>>, vector<2x1x36xf32>
    %c0_2 = arith.constant 0 : index
    %c0_3 = arith.constant 0 : index
    %c0_4 = arith.constant 0 : index
    %1 = vector.load %arg1[%c0_2, %c0_3, %c0_4] : memref<2x12x36xf32, #tpu.memory_space<vmem>>, vector<2x12x36xf32>
    "tpu.trace_start"() <{level = 10 : i32, message = "bld,bkd->blk"}> : () -> ()
    %cst = arith.constant dense<0.000000e+00> : vector<2x12x1xf32>
    %2 = tpu.matmul %1, %0, %cst {dimension_numbers = #tpu.dot_dimension_numbers<[2], [2], [1], [1], [0, 0, 0, 1, 1, 1], [0], [0]>} : vector<2x12x36xf32>, vector<2x1x36xf32>, vector<2x12x1xf32> -> vector<2x12x1xf32>
    "tpu.trace_stop"() : () -> ()
    %cst_5 = arith.constant dense<0xFF800000> : vector<2x1xf32>
    %3 = vector.multi_reduction <maximumf>, %2, %cst_5 [1] : vector<2x12x1xf32> to vector<2x1xf32>
    %4 = vector.shape_cast %3 : vector<2x1xf32> to vector<2x1x1xf32>
    %5 = vector.broadcast %4 : vector<2x1x1xf32> to vector<2x12x1xf32>
    %6 = arith.subf %2, %5 : vector<2x12x1xf32>
    %7 = math.exp %6 : vector<2x12x1xf32>
    %cst_6 = arith.constant dense<0.000000e+00> : vector<2x1xf32>
    %8 = vector.multi_reduction <add>, %7, %cst_6 [1] : vector<2x12x1xf32> to vector<2x1xf32>
    %9 = vector.shape_cast %8 : vector<2x1xf32> to vector<2x1x1xf32>
    %10 = tpu.reciprocal %9 {approx = true} : vector<2x1x1xf32> -> vector<2x1x1xf32>
    %11 = vector.broadcast %10 : vector<2x1x1xf32> to vector<2x12x1xf32>
    %12 = arith.mulf %7, %11 : vector<2x12x1xf32>
    %13 = vector.broadcast %12 : vector<2x12x1xf32> to vector<2x12x36xf32>
    %14 = arith.mulf %1, %13 : vector<2x12x36xf32>
    %cst_7 = arith.constant dense<0.000000e+00> : vector<2x36xf32>
    %15 = vector.multi_reduction <add>, %14, %cst_7 [1] : vector<2x12x36xf32> to vector<2x36xf32>
    %cst_8 = arith.constant 0.000000e+00 : f32
    %16 = vector.broadcast %cst_8 : f32 to vector<2x36xf32>
    %17 = arith.maximumf %15, %16 : vector<2x36xf32>
    %c0_9 = arith.constant 0 : index
    %c0_10 = arith.constant 0 : index
    %18 = vector.load %arg2[%c0_9, %c0_10] : memref<2x36xf32, #tpu.memory_space<vmem>>, vector<2x36xf32>
    tpu.vector_store %arg2[%c0_9, %c0_10], %17 {strides = array<i32>} : memref<2x36xf32, #tpu.memory_space<vmem>>, vector<2x36xf32>,
    return
  }
}

module attributes {stable_mosaic.version = 11 : i64} {
  func.func @_gemm_bn_act_kernel(%arg0: i32, %arg1: i32, %arg2: i32, %arg3: memref<72x128xbf16, #tpu.memory_space<vmem>>, %arg4: memref<128x128xbf16, #tpu.memory_space<vmem>>, %arg5: memref<1x128xf32, #tpu.memory_space<vmem>>, %arg6: memref<1x128xf32, #tpu.memory_space<vmem>>, %arg7: memref<72x128xf32, #tpu.memory_space<vmem>>, %arg8: memref<72x128xf32, #tpu.memory_space<vmem>>) attributes {dimension_semantics = [#tpu.dimension_semantics<parallel>, #tpu.dimension_semantics<parallel>, #tpu.dimension_semantics<arbitrary>], iteration_bounds = array<i64: 1, 3, 1>, scalar_prefetch = 0 : i64, scratch_operands = 1 : i64, tpu.core_type = #tpu.core_type<tc>, window_params = [{transform_indices = @transform_0, window_bounds = array<i64: 72, 128>}, {transform_indices = @transform_1, window_bounds = array<i64: 128, 128>}, {transform_indices = @transform_2, window_bounds = array<i64: 1, 128>}, {transform_indices = @transform_3, window_bounds = array<i64: 1, 128>}, {transform_indices = @transform_4, window_bounds = array<i64: 72, 128>}]} {
    %c0_i32 = arith.constant 0 : i32
    %0 = arith.cmpi eq, %arg2, %c0_i32 : i32
    %1 = arith.extui %0 : i1 to i32
    %c0_i32_0 = arith.constant 0 : i32
    %2 = arith.cmpi ne, %1, %c0_i32_0 : i32
    scf.if %2 {
      %cst_10 = arith.constant 0.000000e+00 : f32
      %12 = vector.broadcast %cst_10 : f32 to vector<72x128xf32>
      %c0_11 = arith.constant 0 : index
      %c0_12 = arith.constant 0 : index
      %13 = vector.load %arg8[%c0_11, %c0_12] : memref<72x128xf32, #tpu.memory_space<vmem>>, vector<72x128xf32>
      tpu.vector_store %arg8[%c0_11, %c0_12], %12 {strides = array<i32>} : memref<72x128xf32, #tpu.memory_space<vmem>>, vector<72x128xf32>,
    } else {
    }
    %c0 = arith.constant 0 : index
    %c0_1 = arith.constant 0 : index
    %3 = vector.load %arg8[%c0, %c0_1] : memref<72x128xf32, #tpu.memory_space<vmem>>, vector<72x128xf32>
    %c0_2 = arith.constant 0 : index
    %c0_3 = arith.constant 0 : index
    %4 = vector.load %arg3[%c0_2, %c0_3] : memref<72x128xbf16, #tpu.memory_space<vmem>>, vector<72x128xbf16>
    %c0_4 = arith.constant 0 : index
    %c0_5 = arith.constant 0 : index
    %5 = vector.load %arg4[%c0_4, %c0_5] : memref<128x128xbf16, #tpu.memory_space<vmem>>, vector<128x128xbf16>
    %cst = arith.constant dense<0.000000e+00> : vector<72x128xf32>
    %6 = tpu.matmul %4, %5, %cst {dimension_numbers = #tpu.dot_dimension_numbers<[1], [0], [0], [1], [0, 0, 1, 1], [], []>} : vector<72x128xbf16>, vector<128x128xbf16>, vector<72x128xf32> -> vector<72x128xf32>
    %7 = arith.addf %3, %6 : vector<72x128xf32>
    %c0_6 = arith.constant 0 : index
    %c0_7 = arith.constant 0 : index
    %8 = vector.load %arg8[%c0_6, %c0_7] : memref<72x128xf32, #tpu.memory_space<vmem>>, vector<72x128xf32>
    tpu.vector_store %arg8[%c0_6, %c0_7], %7 {strides = array<i32>} : memref<72x128xf32, #tpu.memory_space<vmem>>, vector<72x128xf32>,
    %c0_i32_8 = arith.constant 0 : i32
    %9 = arith.cmpi eq, %arg2, %c0_i32_8 : i32
    %10 = arith.extui %9 : i1 to i32
    %c0_i32_9 = arith.constant 0 : i32
    %11 = arith.cmpi ne, %10, %c0_i32_9 : i32
    scf.if %11 {
      %c0_10 = arith.constant 0 : index
      %c0_11 = arith.constant 0 : index
      %12 = vector.load %arg8[%c0_10, %c0_11] : memref<72x128xf32, #tpu.memory_space<vmem>>, vector<72x128xf32>
      %c0_12 = arith.constant 0 : index
      %c0_13 = arith.constant 0 : index
      %13 = vector.load %arg5[%c0_12, %c0_13] : memref<1x128xf32, #tpu.memory_space<vmem>>, vector<1x128xf32>
      %14 = vector.broadcast %13 : vector<1x128xf32> to vector<72x128xf32>
      %15 = arith.mulf %12, %14 : vector<72x128xf32>
      %c0_14 = arith.constant 0 : index
      %c0_15 = arith.constant 0 : index
      %16 = vector.load %arg6[%c0_14, %c0_15] : memref<1x128xf32, #tpu.memory_space<vmem>>, vector<1x128xf32>
      %17 = vector.broadcast %16 : vector<1x128xf32> to vector<72x128xf32>
      %18 = arith.addf %15, %17 : vector<72x128xf32>
      %c0_16 = arith.constant 0 : index
      %c0_17 = arith.constant 0 : index
      %19 = vector.load %arg7[%c0_16, %c0_17] : memref<72x128xf32, #tpu.memory_space<vmem>>, vector<72x128xf32>
      tpu.vector_store %arg7[%c0_16, %c0_17], %18 {strides = array<i32>} : memref<72x128xf32, #tpu.memory_space<vmem>>, vector<72x128xf32>,
    } else {
    }
    return
  }
  func.func @transform_0(%arg0: i32, %arg1: i32, %arg2: i32) -> (i32, i32) {
    %c0_i32 = arith.constant 0 : i32
    return %arg0, %arg2 : i32, i32
  }
  func.func @transform_1(%arg0: i32, %arg1: i32, %arg2: i32) -> (i32, i32) {
    %c0_i32 = arith.constant 0 : i32
    return %arg2, %arg1 : i32, i32
  }
  func.func @transform_2(%arg0: i32, %arg1: i32, %arg2: i32) -> (i32, i32) {
    %c0_i32 = arith.constant 0 : i32
    %c0_i32_0 = arith.constant 0 : i32
    return %c0_i32, %arg1 : i32, i32
  }
  func.func @transform_3(%arg0: i32, %arg1: i32, %arg2: i32) -> (i32, i32) {
    %c0_i32 = arith.constant 0 : i32
    %c0_i32_0 = arith.constant 0 : i32
    return %c0_i32, %arg1 : i32, i32
  }
  func.func @transform_4(%arg0: i32, %arg1: i32, %arg2: i32) -> (i32, i32) {
    %c0_i32 = arith.constant 0 : i32
    return %arg0, %arg1 : i32, i32
  }
}

module attributes {stable_mosaic.version = 11 : i64} {
  func.func @_gru_gate_kernel(%arg0: memref<72x384xf32, #tpu.memory_space<vmem>>, %arg1: memref<72x384xf32, #tpu.memory_space<vmem>>, %arg2: memref<72x128xf32, #tpu.memory_space<vmem>>, %arg3: memref<72x128xf32, #tpu.memory_space<vmem>>) attributes {dimension_semantics = [], scalar_prefetch = 0 : i64, scratch_operands = 0 : i64, tpu.core_type = #tpu.core_type<tc>} {
    %c0 = arith.constant 0 : index
    %c0_0 = arith.constant 0 : index
    %0 = vector.load %arg0[%c0, %c0_0] : memref<72x384xf32, #tpu.memory_space<vmem>>, vector<72x384xf32>
    %c0_1 = arith.constant 0 : index
    %c0_2 = arith.constant 0 : index
    %1 = vector.load %arg1[%c0_1, %c0_2] : memref<72x384xf32, #tpu.memory_space<vmem>>, vector<72x384xf32>
    %2 = vector.extract_strided_slice %0 {offsets = [0, 0], sizes = [72, 128], strides = [1, 1]} : vector<72x384xf32> to vector<72x128xf32>
    %3 = vector.extract_strided_slice %1 {offsets = [0, 0], sizes = [72, 128], strides = [1, 1]} : vector<72x384xf32> to vector<72x128xf32>
    %4 = arith.addf %2, %3 : vector<72x128xf32>
    %5 = arith.negf %4 : vector<72x128xf32>
    %6 = math.exp %5 : vector<72x128xf32>
    %cst = arith.constant 1.000000e+00 : f32
    %7 = vector.broadcast %cst : f32 to vector<72x128xf32>
    %8 = arith.addf %7, %6 : vector<72x128xf32>
    %9 = arith.divf %7, %8 : vector<72x128xf32>
    %10 = vector.extract_strided_slice %0 {offsets = [0, 128], sizes = [72, 128], strides = [1, 1]} : vector<72x384xf32> to vector<72x128xf32>
    %11 = vector.extract_strided_slice %1 {offsets = [0, 128], sizes = [72, 128], strides = [1, 1]} : vector<72x384xf32> to vector<72x128xf32>
    %12 = arith.addf %10, %11 : vector<72x128xf32>
    %13 = arith.negf %12 : vector<72x128xf32>
    %14 = math.exp %13 : vector<72x128xf32>
    %cst_3 = arith.constant 1.000000e+00 : f32
    %15 = vector.broadcast %cst_3 : f32 to vector<72x128xf32>
    %16 = arith.addf %15, %14 : vector<72x128xf32>
    %17 = arith.divf %15, %16 : vector<72x128xf32>
    %18 = vector.extract_strided_slice %0 {offsets = [0, 256], sizes = [72, 128], strides = [1, 1]} : vector<72x384xf32> to vector<72x128xf32>
    %19 = vector.extract_strided_slice %1 {offsets = [0, 256], sizes = [72, 128], strides = [1, 1]} : vector<72x384xf32> to vector<72x128xf32>
    %20 = arith.mulf %9, %19 : vector<72x128xf32>
    %21 = arith.addf %18, %20 : vector<72x128xf32>
    %22 = math.tanh %21 : vector<72x128xf32>
    %cst_4 = arith.constant 1.000000e+00 : f32
    %23 = vector.broadcast %cst_4 : f32 to vector<72x128xf32>
    %24 = arith.subf %23, %17 : vector<72x128xf32>
    %25 = arith.mulf %24, %22 : vector<72x128xf32>
    %c0_5 = arith.constant 0 : index
    %c0_6 = arith.constant 0 : index
    %26 = vector.load %arg2[%c0_5, %c0_6] : memref<72x128xf32, #tpu.memory_space<vmem>>, vector<72x128xf32>
    %27 = arith.mulf %17, %26 : vector<72x128xf32>
    %28 = arith.addf %25, %27 : vector<72x128xf32>
    %c0_7 = arith.constant 0 : index
    %c0_8 = arith.constant 0 : index
    %29 = vector.load %arg3[%c0_7, %c0_8] : memref<72x128xf32, #tpu.memory_space<vmem>>, vector<72x128xf32>
    tpu.vector_store %arg3[%c0_7, %c0_8], %28 {strides = array<i32>} : memref<72x128xf32, #tpu.memory_space<vmem>>, vector<72x128xf32>,
    return
  }
}

</mosaic_0001>

<llo_original>
// kernel: conv_map_cell_forward.12
$region0: #{conv_map_cell_forward.12}
  #allocation0 [shape = 'u32[]', space=smem, size = 0x4, offset = 0x4, fixed_abs, tag = 'smem constant byte address 0x4 - core index']
  #allocation1 [shape = 'u32[144,128]{1,0:T(1,128)}', space=vmem, size = 0x12000, scoped, tag = 'internal scratch']
  #allocation2 [shape = 'f32[72,128]{1,0:T(8,128)}', space=vmem, size = 0x9000, scoped, tag = 'scratch operand']
  %s0 = inlined_call_operand.vmem [shape: bf16[72,128], index: 0, kind: input, shape index: {}]
  %s1 = inlined_call_operand.vmem [shape: bf16[128,128], index: 1, kind: input, shape index: {}]
  %s2 = inlined_call_operand.vmem [shape: f32[1,128], index: 2, kind: input, shape index: {}]
  %s3 = inlined_call_operand.vmem [shape: f32[1,128], index: 3, kind: input, shape index: {}]
  %s4 = inlined_call_operand.vmem [shape: f32[72,128], index: 4, kind: output, shape index: {}]
  %s5 = sld [smem:[#allocation0]]
  $region34: #{conv_map_cell_forward.12} parent=0
    _
  %s7 = ssub.s32 1, %s5
  %s8 = scalar_select 0, %s7, %s5
  // Predicated region
  $region2: #{conv_map_cell_forward.12} parent=0 // pred_check
    _
  $region3: #{conv_map_cell_forward.12} parent=0 // pred_check_branch
    %10 = sbr.rel (0) target = $region5
  $region4: #{conv_map_cell_forward.12} parent=0 // pred_region
    _
  $region5: #{conv_map_cell_forward.12} parent=0 // pred_fallthru
    _
  // Predicated region
  $region6: #{conv_map_cell_forward.12} parent=0 // pred_check
    _
  $region7: #{conv_map_cell_forward.12} parent=0 // pred_check_branch
    %12 = sbr.rel (0) target = $region9
  $region8: #{conv_map_cell_forward.12} parent=0 // pred_region
    _
  $region9: #{conv_map_cell_forward.12} parent=0 // pred_fallthru
    _
  // Predicated region
  $region10: #{conv_map_cell_forward.12} parent=0 // pred_check
    _
  $region11: #{conv_map_cell_forward.12} parent=0 // pred_check_branch
    %14 = sbr.rel (0) target = $region13
  $region12: #{conv_map_cell_forward.12} parent=0 // pred_region
    _
  $region13: #{conv_map_cell_forward.12} parent=0 // pred_fallthru
    _
  // Predicated region
  $region14: #{conv_map_cell_forward.12} parent=0 // pred_check
    _
  $region15: #{conv_map_cell_forward.12} parent=0 // pred_check_branch
    %16 = sbr.rel (0) target = $region17
  $region16: #{conv_map_cell_forward.12} parent=0 // pred_region
    _
  $region17: #{conv_map_cell_forward.12} parent=0 // pred_fallthru
    _
  %p18 = scmp.eq.s32.totalorder 0, 0
  // Predicated region
  $region18: #{conv_map_cell_forward.12} parent=0 // pred_check
    %p19 = pneg %p18
  $region19: #{conv_map_cell_forward.12} parent=0 // pred_check_branch
    %21 = sbr.rel (%p19) target = $region21
  $region20: #{conv_map_cell_forward.12} parent=0 // pred_region
    %22 = vst [vmem:[#allocation2] sm:$0xff] 0.0
    %23 = vst [vmem:[#allocation2 + $0x8] sm:$0xff] 0.0
    %24 = vst [vmem:[#allocation2 + $0x10] sm:$0xff] 0.0
    %25 = vst [vmem:[#allocation2 + $0x18] sm:$0xff] 0.0
    %26 = vst [vmem:[#allocation2 + $0x20] sm:$0xff] 0.0
    %27 = vst [vmem:[#allocation2 + $0x28] sm:$0xff] 0.0
    %28 = vst [vmem:[#allocation2 + $0x30] sm:$0xff] 0.0
    %29 = vst [vmem:[#allocation2 + $0x38] sm:$0xff] 0.0
    %30 = vst [vmem:[#allocation2 + $0x40] sm:$0xff] 0.0
  $region21: #{conv_map_cell_forward.12} parent=0 // pred_fallthru
    _
  %v31 = vld [vmem:[#allocation2] sm:$0xff]
  %v32 = vld [vmem:[#allocation2 + $0x8] sm:$0xff]
  %v33 = vld [vmem:[#allocation2 + $0x10] sm:$0xff]
  %v34 = vld [vmem:[#allocation2 + $0x18] sm:$0xff]
  %v35 = vld [vmem:[#allocation2 + $0x20] sm:$0xff]
  %v36 = vld [vmem:[#allocation2 + $0x28] sm:$0xff]
  %v37 = vld [vmem:[#allocation2 + $0x30] sm:$0xff]
  %v38 = vld [vmem:[#allocation2 + $0x38] sm:$0xff]
  %v39 = vld [vmem:[#allocation2 + $0x40] sm:$0xff]
  %v40 = vld [vmem:[%s0] sm:$0xf]
  %v41 = vld [vmem:[%s0 + $0x4] sm:$0xf]
  %v42 = vld [vmem:[%s0 + $0x8] sm:$0xf]
  %v43 = vld [vmem:[%s0 + $0xc] sm:$0xf]
  %v44 = vld [vmem:[%s0 + $0x10] sm:$0xf]
  %v45 = vld [vmem:[%s0 + $0x14] sm:$0xf]
  %v46 = vld [vmem:[%s0 + $0x18] sm:$0xf]
  %v47 = vld [vmem:[%s0 + $0x1c] sm:$0xf]
  %v48 = vld [vmem:[%s0 + $0x20] sm:$0xf]
  %v49 = vld [vmem:[%s1] sm:$0xf]
  %v50 = vld [vmem:[%s1 + $0x4] sm:$0xf]
  %v51 = vld [vmem:[%s1 + $0x8] sm:$0xf]
  %v52 = vld [vmem:[%s1 + $0xc] sm:$0xf]
  %v53 = vld [vmem:[%s1 + $0x10] sm:$0xf]
  %v54 = vld [vmem:[%s1 + $0x14] sm:$0xf]
  %v55 = vld [vmem:[%s1 + $0x18] sm:$0xf]
  %v56 = vld [vmem:[%s1 + $0x1c] sm:$0xf]
  %v57 = vld [vmem:[%s1 + $0x20] sm:$0xf]
  %v58 = vld [vmem:[%s1 + $0x24] sm:$0xf]
  %v59 = vld [vmem:[%s1 + $0x28] sm:$0xf]
  %v60 = vld [vmem:[%s1 + $0x2c] sm:$0xf]
  %v61 = vld [vmem:[%s1 + $0x30] sm:$0xf]
  %v62 = vld [vmem:[%s1 + $0x34] sm:$0xf]
  %v63 = vld [vmem:[%s1 + $0x38] sm:$0xf]
  %v64 = vld [vmem:[%s1 + $0x3c] sm:$0xf]
  %v74 = vunpack.c.l.b16 %v40
  %v75 = vunpack.c.l.b16 %v41
  %v76 = vunpack.c.l.b16 %v42
  %v77 = vunpack.c.l.b16 %v43
  %v78 = vunpack.c.l.b16 %v44
  %v79 = vunpack.c.l.b16 %v45
  %v80 = vunpack.c.l.b16 %v46
  %v81 = vunpack.c.l.b16 %v47
  %v82 = vunpack.c.l.b16 %v48
  %v83 = vpack.c.b16 %v75, %v74
  %v84 = vpack.c.b16 %v77, %v76
  %v85 = vpack.c.b16 %v79, %v78
  %v86 = vpack.c.b16 %v81, %v80
  %v87 = vpack.c.b16 %v82, %v82
  %v109 = vunpack.c.l.b16 %v49
  %v110 = vunpack.c.l.b16 %v50
  %v111 = vunpack.c.l.b16 %v51
  %v112 = vunpack.c.l.b16 %v52
  %v113 = vunpack.c.l.b16 %v53
  %v114 = vunpack.c.l.b16 %v54
  %v115 = vunpack.c.l.b16 %v55
  %v116 = vunpack.c.l.b16 %v56
  %v117 = vunpack.c.l.b16 %v57
  %v118 = vunpack.c.l.b16 %v58
  %v119 = vunpack.c.l.b16 %v59
  %v120 = vunpack.c.l.b16 %v60
  %v121 = vunpack.c.l.b16 %v61
  %v122 = vunpack.c.l.b16 %v62
  %v123 = vunpack.c.l.b16 %v63
  %v124 = vunpack.c.l.b16 %v64
  %v125 = vpack.c.b16 %v110, %v109
  %v126 = vpack.c.b16 %v112, %v111
  %v127 = vpack.c.b16 %v114, %v113
  %v128 = vpack.c.b16 %v116, %v115
  %v129 = vpack.c.b16 %v118, %v117
  %v130 = vpack.c.b16 %v120, %v119
  %v131 = vpack.c.b16 %v122, %v121
  %v132 = vpack.c.b16 %v124, %v123
  %141 = vmatprep.subr.bf16.mxu0 0
  %142 = vmatpush1.bf16.msra.mxu0 %v125
  %143 = vmatprep.subr.bf16.mxu0 0
  %144 = vmatpush1.bf16.msra.mxu0 %v126
  %145 = vmatprep.subr.bf16.mxu0 0
  %146 = vmatpush1.bf16.msra.mxu0 %v127
  %147 = vmatprep.subr.bf16.mxu0 0
  %148 = vmatpush1.bf16.msra.mxu0 %v128
  %149 = vmatprep.subr.bf16.mxu0 0
  %150 = vmatpush1.bf16.msra.mxu0 %v129
  %151 = vmatprep.subr.bf16.mxu0 0
  %152 = vmatpush1.bf16.msra.mxu0 %v130
  %153 = vmatprep.subr.bf16.mxu0 0
  %154 = vmatpush1.bf16.msra.mxu0 %v131
  %155 = vmatprep.subr.bf16.mxu0 0
  %156 = vmatpush1.bf16.msra.mxu0 %v132
  %157 = vmatprep.subr.bf16.mxu0 0
  %158 = vmatpush1.bf16.msra.mxu0 0
  %159 = vmatprep.subr.bf16.mxu0 0
  %160 = vmatpush1.bf16.msra.mxu0 0
  %161 = vmatprep.subr.bf16.mxu0 0
  %162 = vmatpush1.bf16.msra.mxu0 0
  %163 = vmatprep.subr.bf16.mxu0 0
  %164 = vmatpush1.bf16.msra.mxu0 0
  %165 = vmatprep.subr.bf16.mxu0 0
  %166 = vmatpush1.bf16.msra.mxu0 0
  %167 = vmatprep.subr.bf16.mxu0 0
  %168 = vmatpush1.bf16.msra.mxu0 0
  %169 = vmatprep.subr.bf16.mxu0 0
  %170 = vmatpush1.bf16.msra.mxu0 0
  %171 = vmatprep.subr.bf16.mxu0 0
  %172 = vmatpush1.bf16.msra.mxu0 0
  %173 = vmatprep.mubr.bf16.mxu0 0
  %174 = vmatmul.mubr.bf16.gmra.mrb[0].mxu0 %v83
  %v175 = vpop.f32.mrb[0].mxu0
  %v176 = vadd.f32 0.0, %v175
  %v177 = vpop.f32.mrb[0].mxu0
  %v178 = vpop.f32.mrb[0].mxu0
  %v179 = vadd.f32 0.0, %v178
  %v180 = vpop.f32.mrb[0].mxu0
  %181 = vmatprep.mubr.bf16.mxu0 0
  %182 = vmatmul.mubr.bf16.gmra.mrb[0].mxu0 %v84
  %v183 = vpop.f32.mrb[0].mxu0
  %v184 = vadd.f32 0.0, %v183
  %v185 = vpop.f32.mrb[0].mxu0
  %v186 = vpop.f32.mrb[0].mxu0
  %v187 = vadd.f32 0.0, %v186
  %v188 = vpop.f32.mrb[0].mxu0
  %189 = vmatprep.mubr.bf16.mxu0 0
  %190 = vmatmul.mubr.bf16.gmra.mrb[0].mxu0 %v85
  %v191 = vpop.f32.mrb[0].mxu0
  %v192 = vadd.f32 0.0, %v191
  %v193 = vpop.f32.mrb[0].mxu0
  %v194 = vpop.f32.mrb[0].mxu0
  %v195 = vadd.f32 0.0, %v194
  %v196 = vpop.f32.mrb[0].mxu0
  %197 = vmatprep.mubr.bf16.mxu0 0
  %198 = vmatmul.mubr.bf16.gmra.mrb[0].mxu0 %v86
  %v199 = vpop.f32.mrb[0].mxu0
  %v200 = vadd.f32 0.0, %v199
  %v201 = vpop.f32.mrb[0].mxu0
  %v202 = vpop.f32.mrb[0].mxu0
  %v203 = vadd.f32 0.0, %v202
  %v204 = vpop.f32.mrb[0].mxu0
  %205 = vmatprep.mubr.bf16.mxu0 0
  %206 = vmatmul.mubr.bf16.gmra.mrb[0].mxu0 %v87
  %v207 = vpop.f32.mrb[0].mxu0
  %v208 = vadd.f32 0.0, %v207
  %v209 = vpop.f32.mrb[0].mxu0
  %v210 = vpop.f32.mrb[0].mxu0
  %v211 = vpop.f32.mrb[0].mxu0
  %212 = vdwg.mxu0
  %v213 = vadd.f32 %v31, %v176
  %v214 = vadd.f32 %v32, %v179
  %v215 = vadd.f32 %v33, %v184
  %v216 = vadd.f32 %v34, %v187
  %v217 = vadd.f32 %v35, %v192
  %v218 = vadd.f32 %v36, %v195
  %v219 = vadd.f32 %v37, %v200
  %v220 = vadd.f32 %v38, %v203
  %v221 = vadd.f32 %v39, %v208
  %222 = vst [vmem:[#allocation2] sm:$0xff] %v213
  %223 = vst [vmem:[#allocation2 + $0x8] sm:$0xff] %v214
  %224 = vst [vmem:[#allocation2 + $0x10] sm:$0xff] %v215
  %225 = vst [vmem:[#allocation2 + $0x18] sm:$0xff] %v216
  %226 = vst [vmem:[#allocation2 + $0x20] sm:$0xff] %v217
  %227 = vst [vmem:[#allocation2 + $0x28] sm:$0xff] %v218
  %228 = vst [vmem:[#allocation2 + $0x30] sm:$0xff] %v219
  %229 = vst [vmem:[#allocation2 + $0x38] sm:$0xff] %v220
  %230 = vst [vmem:[#allocation2 + $0x40] sm:$0xff] %v221
  // Predicated region
  $region22: #{conv_map_cell_forward.12} parent=0 // pred_check
    %p231 = pneg %p18
  $region23: #{conv_map_cell_forward.12} parent=0 // pred_check_branch
    %233 = sbr.rel (%p231) target = $region25
  $region24: #{conv_map_cell_forward.12} parent=0 // pred_region
    %v234 = vld [vmem:[#allocation2] sm:$0xff]
    %v235 = vld [vmem:[#allocation2 + $0x8] sm:$0xff]
    %v236 = vld [vmem:[#allocation2 + $0x10] sm:$0xff]
    %v237 = vld [vmem:[#allocation2 + $0x18] sm:$0xff]
    %v238 = vld [vmem:[#allocation2 + $0x20] sm:$0xff]
    %v239 = vld [vmem:[#allocation2 + $0x28] sm:$0xff]
    %v240 = vld [vmem:[#allocation2 + $0x30] sm:$0xff]
    %v241 = vld [vmem:[#allocation2 + $0x38] sm:$0xff]
    %v242 = vld [vmem:[#allocation2 + $0x40] sm:$0xff]
    %v243 = vld [vmem:[%s2] sm:$0x1]
    %v245 = vlaneseq
    %v246 = vshrl.u32 %v245, 7
    %v247 = vsub.s32 0, %v246
    %v248 = vrot.slane %v243, %v247
    %v250 = vmul.f32 %v234, %v248
    %v251 = vmul.f32 %v235, %v248
    %v252 = vmul.f32 %v236, %v248
    %v253 = vmul.f32 %v237, %v248
    %v254 = vmul.f32 %v238, %v248
    %v255 = vmul.f32 %v239, %v248
    %v256 = vmul.f32 %v240, %v248
    %v257 = vmul.f32 %v241, %v248
    %v258 = vmul.f32 %v242, %v248
    %v259 = vld [vmem:[%s3] sm:$0x1]
    %v261 = vlaneseq
    %v262 = vshrl.u32 %v261, 7
    %v263 = vsub.s32 0, %v262
    %v264 = vrot.slane %v259, %v263
    %v266 = vadd.f32 %v250, %v264
    %v267 = vadd.f32 %v251, %v264
    %v268 = vadd.f32 %v252, %v264
    %v269 = vadd.f32 %v253, %v264
    %v270 = vadd.f32 %v254, %v264
    %v271 = vadd.f32 %v255, %v264
    %v272 = vadd.f32 %v256, %v264
    %v273 = vadd.f32 %v257, %v264
    %v274 = vadd.f32 %v258, %v264
    %v275 = vmax.f32 %v266, 0.0
    %v276 = vmax.f32 %v267, 0.0
    %v277 = vmax.f32 %v268, 0.0
    %v278 = vmax.f32 %v269, 0.0
    %v279 = vmax.f32 %v270, 0.0
    %v280 = vmax.f32 %v271, 0.0
    %v281 = vmax.f32 %v272, 0.0
    %v282 = vmax.f32 %v273, 0.0
    %v283 = vmax.f32 %v274, 0.0
    %284 = vst [vmem:[%s4] sm:$0xff] %v275
    %285 = vst [vmem:[%s4 + $0x8] sm:$0xff] %v276
    %286 = vst [vmem:[%s4 + $0x10] sm:$0xff] %v277
    %287 = vst [vmem:[%s4 + $0x18] sm:$0xff] %v278
    %288 = vst [vmem:[%s4 + $0x20] sm:$0xff] %v279
    %289 = vst [vmem:[%s4 + $0x28] sm:$0xff] %v280
    %290 = vst [vmem:[%s4 + $0x30] sm:$0xff] %v281
    %291 = vst [vmem:[%s4 + $0x38] sm:$0xff] %v282
    %292 = vst [vmem:[%s4 + $0x40] sm:$0xff] %v283
  $region25: #{conv_map_cell_forward.12} parent=0 // pred_fallthru
    _
  // Predicated region
  $region26: #{conv_map_cell_forward.12} parent=0 // pred_check
    _
  $region27: #{conv_map_cell_forward.12} parent=0 // pred_check_branch
    %294 = sbr.rel (0) target = $region29
  $region28: #{conv_map_cell_forward.12} parent=0 // pred_region
    _
  $region29: #{conv_map_cell_forward.12} parent=0 // pred_fallthru
    _
  // Predicated region
  $region30: #{conv_map_cell_forward.12} parent=0 // pred_check
    _
  $region31: #{conv_map_cell_forward.12} parent=0 // pred_check_branch
    %296 = sbr.rel (0) target = $region33
  $region32: #{conv_map_cell_forward.12} parent=0 // pred_region
    _
  $region33: #{conv_map_cell_forward.12} parent=0 // pred_fallthru
    _

// kernel: conv_map_cell_forward.13
$region0: #{conv_map_cell_forward.13}
  #allocation0 [shape = 'u32[]', space=smem, size = 0x4, offset = 0x4, fixed_abs, tag = 'smem constant byte address 0x4 - core index']
  #allocation1 [shape = 'u32[144,128]{1,0:T(1,128)}', space=vmem, size = 0x12000, scoped, tag = 'internal scratch']
  #allocation2 [shape = 'f32[72,128]{1,0:T(8,128)}', space=vmem, size = 0x9000, scoped, tag = 'scratch operand']
  %s0 = inlined_call_operand.vmem [shape: bf16[72,256], index: 0, kind: input, shape index: {}]
  %s1 = inlined_call_operand.vmem [shape: bf16[256,128], index: 1, kind: input, shape index: {}]
  %s2 = inlined_call_operand.vmem [shape: f32[1,128], index: 2, kind: input, shape index: {}]
  %s3 = inlined_call_operand.vmem [shape: f32[1,128], index: 3, kind: input, shape index: {}]
  %s4 = inlined_call_operand.vmem [shape: f32[72,128], index: 4, kind: output, shape index: {}]
  %s5 = sld [smem:[#allocation0]]
  $region34: #{conv_map_cell_forward.13} parent=0
    _
  %s7 = ssub.s32 1, %s5
  %s8 = scalar_select 0, %s7, %s5
  // Predicated region
  $region2: #{conv_map_cell_forward.13} parent=0 // pred_check
    _
  $region3: #{conv_map_cell_forward.13} parent=0 // pred_check_branch
    %10 = sbr.rel (0) target = $region5
  $region4: #{conv_map_cell_forward.13} parent=0 // pred_region
    _
  $region5: #{conv_map_cell_forward.13} parent=0 // pred_fallthru
    _
  // Predicated region
  $region6: #{conv_map_cell_forward.13} parent=0 // pred_check
    _
  $region7: #{conv_map_cell_forward.13} parent=0 // pred_check_branch
    %12 = sbr.rel (0) target = $region9
  $region8: #{conv_map_cell_forward.13} parent=0 // pred_region
    _
  $region9: #{conv_map_cell_forward.13} parent=0 // pred_fallthru
    _
  // Predicated region
  $region10: #{conv_map_cell_forward.13} parent=0 // pred_check
    _
  $region11: #{conv_map_cell_forward.13} parent=0 // pred_check_branch
    %14 = sbr.rel (0) target = $region13
  $region12: #{conv_map_cell_forward.13} parent=0 // pred_region
    _
  $region13: #{conv_map_cell_forward.13} parent=0 // pred_fallthru
    _
  // Predicated region
  $region14: #{conv_map_cell_forward.13} parent=0 // pred_check
    _
  $region15: #{conv_map_cell_forward.13} parent=0 // pred_check_branch
    %16 = sbr.rel (0) target = $region17
  $region16: #{conv_map_cell_forward.13} parent=0 // pred_region
    _
  $region17: #{conv_map_cell_forward.13} parent=0 // pred_fallthru
    _
  %p18 = scmp.eq.s32.totalorder 0, 0
  // Predicated region
  $region18: #{conv_map_cell_forward.13} parent=0 // pred_check
    %p19 = pneg %p18
  $region19: #{conv_map_cell_forward.13} parent=0 // pred_check_branch
    %21 = sbr.rel (%p19) target = $region21
  $region20: #{conv_map_cell_forward.13} parent=0 // pred_region
    %22 = vst [vmem:[#allocation2] sm:$0xff] 0.0
    %23 = vst [vmem:[#allocation2 + $0x8] sm:$0xff] 0.0
    %24 = vst [vmem:[#allocation2 + $0x10] sm:$0xff] 0.0
    %25 = vst [vmem:[#allocation2 + $0x18] sm:$0xff] 0.0
    %26 = vst [vmem:[#allocation2 + $0x20] sm:$0xff] 0.0
    %27 = vst [vmem:[#allocation2 + $0x28] sm:$0xff] 0.0
    %28 = vst [vmem:[#allocation2 + $0x30] sm:$0xff] 0.0
    %29 = vst [vmem:[#allocation2 + $0x38] sm:$0xff] 0.0
    %30 = vst [vmem:[#allocation2 + $0x40] sm:$0xff] 0.0
  $region21: #{conv_map_cell_forward.13} parent=0 // pred_fallthru
    _
  %v31 = vld [vmem:[#allocation2] sm:$0xff]
  %v32 = vld [vmem:[#allocation2 + $0x8] sm:$0xff]
  %v33 = vld [vmem:[#allocation2 + $0x10] sm:$0xff]
  %v34 = vld [vmem:[#allocation2 + $0x18] sm:$0xff]
  %v35 = vld [vmem:[#allocation2 + $0x20] sm:$0xff]
  %v36 = vld [vmem:[#allocation2 + $0x28] sm:$0xff]
  %v37 = vld [vmem:[#allocation2 + $0x30] sm:$0xff]
  %v38 = vld [vmem:[#allocation2 + $0x38] sm:$0xff]
  %v39 = vld [vmem:[#allocation2 + $0x40] sm:$0xff]
  %v40 = vld [vmem:[%s0] sm:$0xff]
  %v41 = vld [vmem:[%s0 + $0x8] sm:$0xff]
  %v42 = vld [vmem:[%s0 + $0x10] sm:$0xff]
  %v43 = vld [vmem:[%s0 + $0x18] sm:$0xff]
  %v44 = vld [vmem:[%s0 + $0x20] sm:$0xff]
  %v45 = vld [vmem:[%s0 + $0x28] sm:$0xff]
  %v46 = vld [vmem:[%s0 + $0x30] sm:$0xff]
  %v47 = vld [vmem:[%s0 + $0x38] sm:$0xff]
  %v48 = vld [vmem:[%s0 + $0x40] sm:$0xff]
  %v49 = vld [vmem:[%s1] sm:$0xf]
  %v50 = vld [vmem:[%s1 + $0x4] sm:$0xf]
  %v51 = vld [vmem:[%s1 + $0x8] sm:$0xf]
  %v52 = vld [vmem:[%s1 + $0xc] sm:$0xf]
  %v53 = vld [vmem:[%s1 + $0x10] sm:$0xf]
  %v54 = vld [vmem:[%s1 + $0x14] sm:$0xf]
  %v55 = vld [vmem:[%s1 + $0x18] sm:$0xf]
  %v56 = vld [vmem:[%s1 + $0x1c] sm:$0xf]
  %v57 = vld [vmem:[%s1 + $0x20] sm:$0xf]
  %v58 = vld [vmem:[%s1 + $0x24] sm:$0xf]
  %v59 = vld [vmem:[%s1 + $0x28] sm:$0xf]
  %v60 = vld [vmem:[%s1 + $0x2c] sm:$0xf]
  %v61 = vld [vmem:[%s1 + $0x30] sm:$0xf]
  %v62 = vld [vmem:[%s1 + $0x34] sm:$0xf]
  %v63 = vld [vmem:[%s1 + $0x38] sm:$0xf]
  %v64 = vld [vmem:[%s1 + $0x3c] sm:$0xf]
  %v65 = vld [vmem:[%s1 + $0x40] sm:$0xf]
  %v66 = vld [vmem:[%s1 + $0x44] sm:$0xf]
  %v67 = vld [vmem:[%s1 + $0x48] sm:$0xf]
  %v68 = vld [vmem:[%s1 + $0x4c] sm:$0xf]
  %v69 = vld [vmem:[%s1 + $0x50] sm:$0xf]
  %v70 = vld [vmem:[%s1 + $0x54] sm:$0xf]
  %v71 = vld [vmem:[%s1 + $0x58] sm:$0xf]
  %v72 = vld [vmem:[%s1 + $0x5c] sm:$0xf]
  %v73 = vld [vmem:[%s1 + $0x60] sm:$0xf]
  %v74 = vld [vmem:[%s1 + $0x64] sm:$0xf]
  %v75 = vld [vmem:[%s1 + $0x68] sm:$0xf]
  %v76 = vld [vmem:[%s1 + $0x6c] sm:$0xf]
  %v77 = vld [vmem:[%s1 + $0x70] sm:$0xf]
  %v78 = vld [vmem:[%s1 + $0x74] sm:$0xf]
  %v79 = vld [vmem:[%s1 + $0x78] sm:$0xf]
  %v80 = vld [vmem:[%s1 + $0x7c] sm:$0xf]
  %v90 = vunpack.c.l.b16 %v40
  %v91 = vunpack.c.h.b16 %v40
  %v92 = vunpack.c.l.b16 %v41
  %v93 = vunpack.c.h.b16 %v41
  %v94 = vunpack.c.l.b16 %v42
  %v95 = vunpack.c.h.b16 %v42
  %v96 = vunpack.c.l.b16 %v43
  %v97 = vunpack.c.h.b16 %v43
  %v98 = vunpack.c.l.b16 %v44
  %v99 = vunpack.c.h.b16 %v44
  %v100 = vunpack.c.l.b16 %v45
  %v101 = vunpack.c.h.b16 %v45
  %v102 = vunpack.c.l.b16 %v46
  %v103 = vunpack.c.h.b16 %v46
  %v104 = vunpack.c.l.b16 %v47
  %v105 = vunpack.c.h.b16 %v47
  %v106 = vunpack.c.l.b16 %v48
  %v107 = vunpack.c.h.b16 %v48
  %v108 = vpack.c.b16 %v92, %v90
  %v109 = vpack.c.b16 %v93, %v91
  %v110 = vpack.c.b16 %v96, %v94
  %v111 = vpack.c.b16 %v97, %v95
  %v112 = vpack.c.b16 %v100, %v98
  %v113 = vpack.c.b16 %v101, %v99
  %v114 = vpack.c.b16 %v104, %v102
  %v115 = vpack.c.b16 %v105, %v103
  %v116 = vpack.c.b16 %v106, %v106
  %v117 = vpack.c.b16 %v107, %v107
  %v160 = vunpack.c.l.b16 %v49
  %v161 = vunpack.c.l.b16 %v50
  %v162 = vunpack.c.l.b16 %v51
  %v163 = vunpack.c.l.b16 %v52
  %v164 = vunpack.c.l.b16 %v53
  %v165 = vunpack.c.l.b16 %v54
  %v166 = vunpack.c.l.b16 %v55
  %v167 = vunpack.c.l.b16 %v56
  %v168 = vunpack.c.l.b16 %v57
  %v169 = vunpack.c.l.b16 %v58
  %v170 = vunpack.c.l.b16 %v59
  %v171 = vunpack.c.l.b16 %v60
  %v172 = vunpack.c.l.b16 %v61
  %v173 = vunpack.c.l.b16 %v62
  %v174 = vunpack.c.l.b16 %v63
  %v175 = vunpack.c.l.b16 %v64
  %v176 = vunpack.c.l.b16 %v65
  %v177 = vunpack.c.l.b16 %v66
  %v178 = vunpack.c.l.b16 %v67
  %v179 = vunpack.c.l.b16 %v68
  %v180 = vunpack.c.l.b16 %v69
  %v181 = vunpack.c.l.b16 %v70
  %v182 = vunpack.c.l.b16 %v71
  %v183 = vunpack.c.l.b16 %v72
  %v184 = vunpack.c.l.b16 %v73
  %v185 = vunpack.c.l.b16 %v74
  %v186 = vunpack.c.l.b16 %v75
  %v187 = vunpack.c.l.b16 %v76
  %v188 = vunpack.c.l.b16 %v77
  %v189 = vunpack.c.l.b16 %v78
  %v190 = vunpack.c.l.b16 %v79
  %v191 = vunpack.c.l.b16 %v80
  %v192 = vpack.c.b16 %v161, %v160
  %v193 = vpack.c.b16 %v163, %v162
  %v194 = vpack.c.b16 %v165, %v164
  %v195 = vpack.c.b16 %v167, %v166
  %v196 = vpack.c.b16 %v169, %v168
  %v197 = vpack.c.b16 %v171, %v170
  %v198 = vpack.c.b16 %v173, %v172
  %v199 = vpack.c.b16 %v175, %v174
  %v200 = vpack.c.b16 %v177, %v176
  %v201 = vpack.c.b16 %v179, %v178
  %v202 = vpack.c.b16 %v181, %v180
  %v203 = vpack.c.b16 %v183, %v182
  %v204 = vpack.c.b16 %v185, %v184
  %v205 = vpack.c.b16 %v187, %v186
  %v206 = vpack.c.b16 %v189, %v188
  %v207 = vpack.c.b16 %v191, %v190
  %224 = vmatprep.subr.bf16.mxu0 0
  %225 = vmatpush1.bf16.msra.mxu0 %v192
  %226 = vmatprep.subr.bf16.mxu0 0
  %227 = vmatpush1.bf16.msra.mxu0 %v193
  %228 = vmatprep.subr.bf16.mxu0 0
  %229 = vmatpush1.bf16.msra.mxu0 %v194
  %230 = vmatprep.subr.bf16.mxu0 0
  %231 = vmatpush1.bf16.msra.mxu0 %v195
  %232 = vmatprep.subr.bf16.mxu0 0
  %233 = vmatpush1.bf16.msra.mxu0 %v196
  %234 = vmatprep.subr.bf16.mxu0 0
  %235 = vmatpush1.bf16.msra.mxu0 %v197
  %236 = vmatprep.subr.bf16.mxu0 0
  %237 = vmatpush1.bf16.msra.mxu0 %v198
  %238 = vmatprep.subr.bf16.mxu0 0
  %239 = vmatpush1.bf16.msra.mxu0 %v199
  %240 = vmatprep.subr.bf16.mxu0 0
  %241 = vmatpush1.bf16.msra.mxu0 %v200
  %242 = vmatprep.subr.bf16.mxu0 0
  %243 = vmatpush1.bf16.msra.mxu0 %v201
  %244 = vmatprep.subr.bf16.mxu0 0
  %245 = vmatpush1.bf16.msra.mxu0 %v202
  %246 = vmatprep.subr.bf16.mxu0 0
  %247 = vmatpush1.bf16.msra.mxu0 %v203
  %248 = vmatprep.subr.bf16.mxu0 0
  %249 = vmatpush1.bf16.msra.mxu0 %v204
  %250 = vmatprep.subr.bf16.mxu0 0
  %251 = vmatpush1.bf16.msra.mxu0 %v205
  %252 = vmatprep.subr.bf16.mxu0 0
  %253 = vmatpush1.bf16.msra.mxu0 %v206
  %254 = vmatprep.subr.bf16.mxu0 0
  %255 = vmatpush1.bf16.msra.mxu0 %v207
  %256 = vmatprep.mubr.bf16.mxu0 %v109
  %257 = vmatmul.mubr.bf16.gmra.mrb[0].mxu0 %v108
  %v258 = vpop.f32.mrb[0].mxu0
  %v259 = vadd.f32 0.0, %v258
  %v260 = vpop.f32.mrb[0].mxu0
  %v261 = vpop.f32.mrb[0].mxu0
  %v262 = vadd.f32 0.0, %v261
  %v263 = vpop.f32.mrb[0].mxu0
  %264 = vmatprep.mubr.bf16.mxu0 %v111
  %265 = vmatmul.mubr.bf16.gmra.mrb[0].mxu0 %v110
  %v266 = vpop.f32.mrb[0].mxu0
  %v267 = vadd.f32 0.0, %v266
  %v268 = vpop.f32.mrb[0].mxu0
  %v269 = vpop.f32.mrb[0].mxu0
  %v270 = vadd.f32 0.0, %v269
  %v271 = vpop.f32.mrb[0].mxu0
  %272 = vmatprep.mubr.bf16.mxu0 %v113
  %273 = vmatmul.mubr.bf16.gmra.mrb[0].mxu0 %v112
  %v274 = vpop.f32.mrb[0].mxu0
  %v275 = vadd.f32 0.0, %v274
  %v276 = vpop.f32.mrb[0].mxu0
  %v277 = vpop.f32.mrb[0].mxu0
  %v278 = vadd.f32 0.0, %v277
  %v279 = vpop.f32.mrb[0].mxu0
  %280 = vmatprep.mubr.bf16.mxu0 %v115
  %281 = vmatmul.mubr.bf16.gmra.mrb[0].mxu0 %v114
  %v282 = vpop.f32.mrb[0].mxu0
  %v283 = vadd.f32 0.0, %v282
  %v284 = vpop.f32.mrb[0].mxu0
  %v285 = vpop.f32.mrb[0].mxu0
  %v286 = vadd.f32 0.0, %v285
  %v287 = vpop.f32.mrb[0].mxu0
  %288 = vmatprep.mubr.bf16.mxu0 %v117
  %289 = vmatmul.mubr.bf16.gmra.mrb[0].mxu0 %v116
  %v290 = vpop.f32.mrb[0].mxu0
  %v291 = vadd.f32 0.0, %v290
  %v292 = vpop.f32.mrb[0].mxu0
  %v293 = vpop.f32.mrb[0].mxu0
  %v294 = vpop.f32.mrb[0].mxu0
  %295 = vdwg.mxu0
  %v296 = vadd.f32 %v31, %v259
  %v297 = vadd.f32 %v32, %v262
  %v298 = vadd.f32 %v33, %v267
  %v299 = vadd.f32 %v34, %v270
  %v300 = vadd.f32 %v35, %v275
  %v301 = vadd.f32 %v36, %v278
  %v302 = vadd.f32 %v37, %v283
  %v303 = vadd.f32 %v38, %v286
  %v304 = vadd.f32 %v39, %v291
  %305 = vst [vmem:[#allocation2] sm:$0xff] %v296
  %306 = vst [vmem:[#allocation2 + $0x8] sm:$0xff] %v297
  %307 = vst [vmem:[#allocation2 + $0x10] sm:$0xff] %v298
  %308 = vst [vmem:[#allocation2 + $0x18] sm:$0xff] %v299
  %309 = vst [vmem:[#allocation2 + $0x20] sm:$0xff] %v300
  %310 = vst [vmem:[#allocation2 + $0x28] sm:$0xff] %v301
  %311 = vst [vmem:[#allocation2 + $0x30] sm:$0xff] %v302
  %312 = vst [vmem:[#allocation2 + $0x38] sm:$0xff] %v303
  %313 = vst [vmem:[#allocation2 + $0x40] sm:$0xff] %v304
  // Predicated region
  $region22: #{conv_map_cell_forward.13} parent=0 // pred_check
    %p314 = pneg %p18
  $region23: #{conv_map_cell_forward.13} parent=0 // pred_check_branch
    %316 = sbr.rel (%p314) target = $region25
  $region24: #{conv_map_cell_forward.13} parent=0 // pred_region
    %v317 = vld [vmem:[#allocation2] sm:$0xff]
    %v318 = vld [vmem:[#allocation2 + $0x8] sm:$0xff]
    %v319 = vld [vmem:[#allocation2 + $0x10] sm:$0xff]
    %v320 = vld [vmem:[#allocation2 + $0x18] sm:$0xff]
    %v321 = vld [vmem:[#allocation2 + $0x20] sm:$0xff]
    %v322 = vld [vmem:[#allocation2 + $0x28] sm:$0xff]
    %v323 = vld [vmem:[#allocation2 + $0x30] sm:$0xff]
    %v324 = vld [vmem:[#allocation2 + $0x38] sm:$0xff]
    %v325 = vld [vmem:[#allocation2 + $0x40] sm:$0xff]
    %v326 = vld [vmem:[%s2] sm:$0x1]
    %v328 = vlaneseq
    %v329 = vshrl.u32 %v328, 7
    %v330 = vsub.s32 0, %v329
    %v331 = vrot.slane %v326, %v330
    %v333 = vmul.f32 %v317, %v331
    %v334 = vmul.f32 %v318, %v331
    %v335 = vmul.f32 %v319, %v331
    %v336 = vmul.f32 %v320, %v331
    %v337 = vmul.f32 %v321, %v331
    %v338 = vmul.f32 %v322, %v331
    %v339 = vmul.f32 %v323, %v331
    %v340 = vmul.f32 %v324, %v331
    %v341 = vmul.f32 %v325, %v331
    %v342 = vld [vmem:[%s3] sm:$0x1]
    %v344 = vlaneseq
    %v345 = vshrl.u32 %v344, 7
    %v346 = vsub.s32 0, %v345
    %v347 = vrot.slane %v342, %v346
    %v349 = vadd.f32 %v333, %v347
    %v350 = vadd.f32 %v334, %v347
    %v351 = vadd.f32 %v335, %v347
    %v352 = vadd.f32 %v336, %v347
    %v353 = vadd.f32 %v337, %v347
    %v354 = vadd.f32 %v338, %v347
    %v355 = vadd.f32 %v339, %v347
    %v356 = vadd.f32 %v340, %v347
    %v357 = vadd.f32 %v341, %v347
    %v358 = vmax.f32 %v349, 0.0
    %v359 = vmax.f32 %v350, 0.0
    %v360 = vmax.f32 %v351, 0.0
    %v361 = vmax.f32 %v352, 0.0
    %v362 = vmax.f32 %v353, 0.0
    %v363 = vmax.f32 %v354, 0.0
    %v364 = vmax.f32 %v355, 0.0
    %v365 = vmax.f32 %v356, 0.0
    %v366 = vmax.f32 %v357, 0.0
    %367 = vst [vmem:[%s4] sm:$0xff] %v358
    %368 = vst [vmem:[%s4 + $0x8] sm:$0xff] %v359
    %369 = vst [vmem:[%s4 + $0x10] sm:$0xff] %v360
    %370 = vst [vmem:[%s4 + $0x18] sm:$0xff] %v361
    %371 = vst [vmem:[%s4 + $0x20] sm:$0xff] %v362
    %372 = vst [vmem:[%s4 + $0x28] sm:$0xff] %v363
    %373 = vst [vmem:[%s4 + $0x30] sm:$0xff] %v364
    %374 = vst [vmem:[%s4 + $0x38] sm:$0xff] %v365
    %375 = vst [vmem:[%s4 + $0x40] sm:$0xff] %v366
  $region25: #{conv_map_cell_forward.13} parent=0 // pred_fallthru
    _
  // Predicated region
  $region26: #{conv_map_cell_forward.13} parent=0 // pred_check
    _
  $region27: #{conv_map_cell_forward.13} parent=0 // pred_check_branch
    %377 = sbr.rel (0) target = $region29
  $region28: #{conv_map_cell_forward.13} parent=0 // pred_region
    _
  $region29: #{conv_map_cell_forward.13} parent=0 // pred_fallthru
    _
  // Predicated region
  $region30: #{conv_map_cell_forward.13} parent=0 // pred_check
    _
  $region31: #{conv_map_cell_forward.13} parent=0 // pred_check_branch
    %379 = sbr.rel (0) target = $region33
  $region32: #{conv_map_cell_forward.13} parent=0 // pred_region
    _
  $region33: #{conv_map_cell_forward.13} parent=0 // pred_fallthru
    _

// kernel: conv_map_cell_forward.15
$region0: #{conv_map_cell_forward.15}
  #allocation0 [shape = 'u32[]', space=smem, size = 0x4, offset = 0x4, fixed_abs, tag = 'smem constant byte address 0x4 - core index']
  #allocation1 [shape = 'u32[144,128]{1,0:T(1,128)}', space=vmem, size = 0x12000, scoped, tag = 'internal scratch']
  #allocation2 [shape = 'f32[72,128]{1,0:T(8,128)}', space=vmem, size = 0x9000, scoped, tag = 'scratch operand']
  %s0 = inlined_call_operand.vmem [shape: bf16[72,384], index: 0, kind: input, shape index: {}]
  %s1 = inlined_call_operand.vmem [shape: bf16[384,128], index: 1, kind: input, shape index: {}]
  %s2 = inlined_call_operand.vmem [shape: f32[1,128], index: 2, kind: input, shape index: {}]
  %s3 = inlined_call_operand.vmem [shape: f32[1,128], index: 3, kind: input, shape index: {}]
  %s4 = inlined_call_operand.vmem [shape: f32[72,128], index: 4, kind: output, shape index: {}]
  %s5 = sld [smem:[#allocation0]]
  $region34: #{conv_map_cell_forward.15} parent=0
    _
  %s7 = ssub.s32 1, %s5
  %s8 = scalar_select 0, %s7, %s5
  // Predicated region
  $region2: #{conv_map_cell_forward.15} parent=0 // pred_check
    _
  $region3: #{conv_map_cell_forward.15} parent=0 // pred_check_branch
    %10 = sbr.rel (0) target = $region5
  $region4: #{conv_map_cell_forward.15} parent=0 // pred_region
    _
  $region5: #{conv_map_cell_forward.15} parent=0 // pred_fallthru
    _
  // Predicated region
  $region6: #{conv_map_cell_forward.15} parent=0 // pred_check
    _
  $region7: #{conv_map_cell_forward.15} parent=0 // pred_check_branch
    %12 = sbr.rel (0) target = $region9
  $region8: #{conv_map_cell_forward.15} parent=0 // pred_region
    _
  $region9: #{conv_map_cell_forward.15} parent=0 // pred_fallthru
    _
  // Predicated region
  $region10: #{conv_map_cell_forward.15} parent=0 // pred_check
    _
  $region11: #{conv_map_cell_forward.15} parent=0 // pred_check_branch
    %14 = sbr.rel (0) target = $region13
  $region12: #{conv_map_cell_forward.15} parent=0 // pred_region
    _
  $region13: #{conv_map_cell_forward.15} parent=0 // pred_fallthru
    _
  // Predicated region
  $region14: #{conv_map_cell_forward.15} parent=0 // pred_check
    _
  $region15: #{conv_map_cell_forward.15} parent=0 // pred_check_branch
    %16 = sbr.rel (0) target = $region17
  $region16: #{conv_map_cell_forward.15} parent=0 // pred_region
    _
  $region17: #{conv_map_cell_forward.15} parent=0 // pred_fallthru
    _
  %p18 = scmp.eq.s32.totalorder 0, 0
  // Predicated region
  $region18: #{conv_map_cell_forward.15} parent=0 // pred_check
    %p19 = pneg %p18
  $region19: #{conv_map_cell_forward.15} parent=0 // pred_check_branch
    %21 = sbr.rel (%p19) target = $region21
  $region20: #{conv_map_cell_forward.15} parent=0 // pred_region
    %22 = vst [vmem:[#allocation2] sm:$0xff] 0.0
    %23 = vst [vmem:[#allocation2 + $0x8] sm:$0xff] 0.0
    %24 = vst [vmem:[#allocation2 + $0x10] sm:$0xff] 0.0
    %25 = vst [vmem:[#allocation2 + $0x18] sm:$0xff] 0.0
    %26 = vst [vmem:[#allocation2 + $0x20] sm:$0xff] 0.0
    %27 = vst [vmem:[#allocation2 + $0x28] sm:$0xff] 0.0
    %28 = vst [vmem:[#allocation2 + $0x30] sm:$0xff] 0.0
    %29 = vst [vmem:[#allocation2 + $0x38] sm:$0xff] 0.0
    %30 = vst [vmem:[#allocation2 + $0x40] sm:$0xff] 0.0
  $region21: #{conv_map_cell_forward.15} parent=0 // pred_fallthru
    _
  %v31 = vld [vmem:[#allocation2] sm:$0xff]
  %v32 = vld [vmem:[#allocation2 + $0x8] sm:$0xff]
  %v33 = vld [vmem:[#allocation2 + $0x10] sm:$0xff]
  %v34 = vld [vmem:[#allocation2 + $0x18] sm:$0xff]
  %v35 = vld [vmem:[#allocation2 + $0x20] sm:$0xff]
  %v36 = vld [vmem:[#allocation2 + $0x28] sm:$0xff]
  %v37 = vld [vmem:[#allocation2 + $0x30] sm:$0xff]
  %v38 = vld [vmem:[#allocation2 + $0x38] sm:$0xff]
  %v39 = vld [vmem:[#allocation2 + $0x40] sm:$0xff]
  %v40 = vld [vmem:[%s0] sm:$0xff]
  %v41 = vld [vmem:[%s0 + $0x8] sm:$0xf]
  %v42 = vld [vmem:[%s0 + $0xc] sm:$0xff]
  %v43 = vld [vmem:[%s0 + $0x14] sm:$0xf]
  %v44 = vld [vmem:[%s0 + $0x18] sm:$0xff]
  %v45 = vld [vmem:[%s0 + $0x20] sm:$0xf]
  %v46 = vld [vmem:[%s0 + $0x24] sm:$0xff]
  %v47 = vld [vmem:[%s0 + $0x2c] sm:$0xf]
  %v48 = vld [vmem:[%s0 + $0x30] sm:$0xff]
  %v49 = vld [vmem:[%s0 + $0x38] sm:$0xf]
  %v50 = vld [vmem:[%s0 + $0x3c] sm:$0xff]
  %v51 = vld [vmem:[%s0 + $0x44] sm:$0xf]
  %v52 = vld [vmem:[%s0 + $0x48] sm:$0xff]
  %v53 = vld [vmem:[%s0 + $0x50] sm:$0xf]
  %v54 = vld [vmem:[%s0 + $0x54] sm:$0xff]
  %v55 = vld [vmem:[%s0 + $0x5c] sm:$0xf]
  %v56 = vld [vmem:[%s0 + $0x60] sm:$0xff]
  %v57 = vld [vmem:[%s0 + $0x68] sm:$0xf]
  %v58 = vld [vmem:[%s1] sm:$0xf]
  %v59 = vld [vmem:[%s1 + $0x4] sm:$0xf]
  %v60 = vld [vmem:[%s1 + $0x8] sm:$0xf]
  %v61 = vld [vmem:[%s1 + $0xc] sm:$0xf]
  %v62 = vld [vmem:[%s1 + $0x10] sm:$0xf]
  %v63 = vld [vmem:[%s1 + $0x14] sm:$0xf]
  %v64 = vld [vmem:[%s1 + $0x18] sm:$0xf]
  %v65 = vld [vmem:[%s1 + $0x1c] sm:$0xf]
  %v66 = vld [vmem:[%s1 + $0x20] sm:$0xf]
  %v67 = vld [vmem:[%s1 + $0x24] sm:$0xf]
  %v68 = vld [vmem:[%s1 + $0x28] sm:$0xf]
  %v69 = vld [vmem:[%s1 + $0x2c] sm:$0xf]
  %v70 = vld [vmem:[%s1 + $0x30] sm:$0xf]
  %v71 = vld [vmem:[%s1 + $0x34] sm:$0xf]
  %v72 = vld [vmem:[%s1 + $0x38] sm:$0xf]
  %v73 = vld [vmem:[%s1 + $0x3c] sm:$0xf]
  %v74 = vld [vmem:[%s1 + $0x40] sm:$0xf]
  %v75 = vld [vmem:[%s1 + $0x44] sm:$0xf]
  %v76 = vld [vmem:[%s1 + $0x48] sm:$0xf]
  %v77 = vld [vmem:[%s1 + $0x4c] sm:$0xf]
  %v78 = vld [vmem:[%s1 + $0x50] sm:$0xf]
  %v79 = vld [vmem:[%s1 + $0x54] sm:$0xf]
  %v80 = vld [vmem:[%s1 + $0x58] sm:$0xf]
  %v81 = vld [vmem:[%s1 + $0x5c] sm:$0xf]
  %v82 = vld [vmem:[%s1 + $0x60] sm:$0xf]
  %v83 = vld [vmem:[%s1 + $0x64] sm:$0xf]
  %v84 = vld [vmem:[%s1 + $0x68] sm:$0xf]
  %v85 = vld [vmem:[%s1 + $0x6c] sm:$0xf]
  %v86 = vld [vmem:[%s1 + $0x70] sm:$0xf]
  %v87 = vld [vmem:[%s1 + $0x74] sm:$0xf]
  %v88 = vld [vmem:[%s1 + $0x78] sm:$0xf]
  %v89 = vld [vmem:[%s1 + $0x7c] sm:$0xf]
  %v90 = vld [vmem:[%s1 + $0x80] sm:$0xf]
  %v91 = vld [vmem:[%s1 + $0x84] sm:$0xf]
  %v92 = vld [vmem:[%s1 + $0x88] sm:$0xf]
  %v93 = vld [vmem:[%s1 + $0x8c] sm:$0xf]
  %v94 = vld [vmem:[%s1 + $0x90] sm:$0xf]
  %v95 = vld [vmem:[%s1 + $0x94] sm:$0xf]
  %v96 = vld [vmem:[%s1 + $0x98] sm:$0xf]
  %v97 = vld [vmem:[%s1 + $0x9c] sm:$0xf]
  %v98 = vld [vmem:[%s1 + $0xa0] sm:$0xf]
  %v99 = vld [vmem:[%s1 + $0xa4] sm:$0xf]
  %v100 = vld [vmem:[%s1 + $0xa8] sm:$0xf]
  %v101 = vld [vmem:[%s1 + $0xac] sm:$0xf]
  %v102 = vld [vmem:[%s1 + $0xb0] sm:$0xf]
  %v103 = vld [vmem:[%s1 + $0xb4] sm:$0xf]
  %v104 = vld [vmem:[%s1 + $0xb8] sm:$0xf]
  %v105 = vld [vmem:[%s1 + $0xbc] sm:$0xf]
  %v124 = vunpack.c.l.b16 %v40
  %v125 = vunpack.c.h.b16 %v40
  %v126 = vunpack.c.l.b16 %v41
  %v127 = vunpack.c.l.b16 %v42
  %v128 = vunpack.c.h.b16 %v42
  %v129 = vunpack.c.l.b16 %v43
  %v130 = vunpack.c.l.b16 %v44
  %v131 = vunpack.c.h.b16 %v44
  %v132 = vunpack.c.l.b16 %v45
  %v133 = vunpack.c.l.b16 %v46
  %v134 = vunpack.c.h.b16 %v46
  %v135 = vunpack.c.l.b16 %v47
  %v136 = vunpack.c.l.b16 %v48
  %v137 = vunpack.c.h.b16 %v48
  %v138 = vunpack.c.l.b16 %v49
  %v139 = vunpack.c.l.b16 %v50
  %v140 = vunpack.c.h.b16 %v50
  %v141 = vunpack.c.l.b16 %v51
  %v142 = vunpack.c.l.b16 %v52
  %v143 = vunpack.c.h.b16 %v52
  %v144 = vunpack.c.l.b16 %v53
  %v145 = vunpack.c.l.b16 %v54
  %v146 = vunpack.c.h.b16 %v54
  %v147 = vunpack.c.l.b16 %v55
  %v148 = vunpack.c.l.b16 %v56
  %v149 = vunpack.c.h.b16 %v56
  %v150 = vunpack.c.l.b16 %v57
  %v151 = vpack.c.b16 %v127, %v124
  %v152 = vpack.c.b16 %v128, %v125
  %v153 = vpack.c.b16 %v129, %v126
  %v154 = vpack.c.b16 %v133, %v130
  %v155 = vpack.c.b16 %v134, %v131
  %v156 = vpack.c.b16 %v135, %v132
  %v157 = vpack.c.b16 %v139, %v136
  %v158 = vpack.c.b16 %v140, %v137
  %v159 = vpack.c.b16 %v141, %v138
  %v160 = vpack.c.b16 %v145, %v142
  %v161 = vpack.c.b16 %v146, %v143
  %v162 = vpack.c.b16 %v147, %v144
  %v163 = vpack.c.b16 %v148, %v148
  %v164 = vpack.c.b16 %v149, %v149
  %v165 = vpack.c.b16 %v150, %v150
  %v229 = vunpack.c.l.b16 %v58
  %v230 = vunpack.c.l.b16 %v59
  %v231 = vunpack.c.l.b16 %v60
  %v232 = vunpack.c.l.b16 %v61
  %v233 = vunpack.c.l.b16 %v62
  %v234 = vunpack.c.l.b16 %v63
  %v235 = vunpack.c.l.b16 %v64
  %v236 = vunpack.c.l.b16 %v65
  %v237 = vunpack.c.l.b16 %v66
  %v238 = vunpack.c.l.b16 %v67
  %v239 = vunpack.c.l.b16 %v68
  %v240 = vunpack.c.l.b16 %v69
  %v241 = vunpack.c.l.b16 %v70
  %v242 = vunpack.c.l.b16 %v71
  %v243 = vunpack.c.l.b16 %v72
  %v244 = vunpack.c.l.b16 %v73
  %v245 = vunpack.c.l.b16 %v74
  %v246 = vunpack.c.l.b16 %v75
  %v247 = vunpack.c.l.b16 %v76
  %v248 = vunpack.c.l.b16 %v77
  %v249 = vunpack.c.l.b16 %v78
  %v250 = vunpack.c.l.b16 %v79
  %v251 = vunpack.c.l.b16 %v80
  %v252 = vunpack.c.l.b16 %v81
  %v253 = vunpack.c.l.b16 %v82
  %v254 = vunpack.c.l.b16 %v83
  %v255 = vunpack.c.l.b16 %v84
  %v256 = vunpack.c.l.b16 %v85
  %v257 = vunpack.c.l.b16 %v86
  %v258 = vunpack.c.l.b16 %v87
  %v259 = vunpack.c.l.b16 %v88
  %v260 = vunpack.c.l.b16 %v89
  %v261 = vunpack.c.l.b16 %v90
  %v262 = vunpack.c.l.b16 %v91
  %v263 = vunpack.c.l.b16 %v92
  %v264 = vunpack.c.l.b16 %v93
  %v265 = vunpack.c.l.b16 %v94
  %v266 = vunpack.c.l.b16 %v95
  %v267 = vunpack.c.l.b16 %v96
  %v268 = vunpack.c.l.b16 %v97
  %v269 = vunpack.c.l.b16 %v98
  %v270 = vunpack.c.l.b16 %v99
  %v271 = vunpack.c.l.b16 %v100
  %v272 = vunpack.c.l.b16 %v101
  %v273 = vunpack.c.l.b16 %v102
  %v274 = vunpack.c.l.b16 %v103
  %v275 = vunpack.c.l.b16 %v104
  %v276 = vunpack.c.l.b16 %v105
  %v277 = vpack.c.b16 %v230, %v229
  %v278 = vpack.c.b16 %v232, %v231
  %v279 = vpack.c.b16 %v234, %v233
  %v280 = vpack.c.b16 %v236, %v235
  %v281 = vpack.c.b16 %v238, %v237
  %v282 = vpack.c.b16 %v240, %v239
  %v283 = vpack.c.b16 %v242, %v241
  %v284 = vpack.c.b16 %v244, %v243
  %v285 = vpack.c.b16 %v246, %v245
  %v286 = vpack.c.b16 %v248, %v247
  %v287 = vpack.c.b16 %v250, %v249
  %v288 = vpack.c.b16 %v252, %v251
  %v289 = vpack.c.b16 %v254, %v253
  %v290 = vpack.c.b16 %v256, %v255
  %v291 = vpack.c.b16 %v258, %v257
  %v292 = vpack.c.b16 %v260, %v259
  %v293 = vpack.c.b16 %v262, %v261
  %v294 = vpack.c.b16 %v264, %v263
  %v295 = vpack.c.b16 %v266, %v265
  %v296 = vpack.c.b16 %v268, %v267
  %v297 = vpack.c.b16 %v270, %v269
  %v298 = vpack.c.b16 %v272, %v271
  %v299 = vpack.c.b16 %v274, %v273
  %v300 = vpack.c.b16 %v276, %v275
  %325 = vmatprep.subr.bf16.mxu0 0
  %326 = vmatpush1.bf16.msra.mxu0 %v277
  %327 = vmatprep.subr.bf16.mxu0 0
  %328 = vmatpush1.bf16.msra.mxu0 %v278
  %329 = vmatprep.subr.bf16.mxu0 0
  %330 = vmatpush1.bf16.msra.mxu0 %v279
  %331 = vmatprep.subr.bf16.mxu0 0
  %332 = vmatpush1.bf16.msra.mxu0 %v280
  %333 = vmatprep.subr.bf16.mxu0 0
  %334 = vmatpush1.bf16.msra.mxu0 %v281
  %335 = vmatprep.subr.bf16.mxu0 0
  %336 = vmatpush1.bf16.msra.mxu0 %v282
  %337 = vmatprep.subr.bf16.mxu0 0
  %338 = vmatpush1.bf16.msra.mxu0 %v283
  %339 = vmatprep.subr.bf16.mxu0 0
  %340 = vmatpush1.bf16.msra.mxu0 %v284
  %341 = vmatprep.subr.bf16.mxu0 0
  %342 = vmatpush1.bf16.msra.mxu0 %v285
  %343 = vmatprep.subr.bf16.mxu0 0
  %344 = vmatpush1.bf16.msra.mxu0 %v286
  %345 = vmatprep.subr.bf16.mxu0 0
  %346 = vmatpush1.bf16.msra.mxu0 %v287
  %347 = vmatprep.subr.bf16.mxu0 0
  %348 = vmatpush1.bf16.msra.mxu0 %v288
  %349 = vmatprep.subr.bf16.mxu0 0
  %350 = vmatpush1.bf16.msra.mxu0 %v289
  %351 = vmatprep.subr.bf16.mxu0 0
  %352 = vmatpush1.bf16.msra.mxu0 %v290
  %353 = vmatprep.subr.bf16.mxu0 0
  %354 = vmatpush1.bf16.msra.mxu0 %v291
  %355 = vmatprep.subr.bf16.mxu0 0
  %356 = vmatpush1.bf16.msra.mxu0 %v292
  %357 = vmatprep.mubr.bf16.mxu0 %v152
  %358 = vmatmul.mubr.bf16.gmra.mrb[0].mxu0 %v151
  %v359 = vpop.f32.mrb[0].mxu0
  %v360 = vadd.f32 0.0, %v359
  %v361 = vpop.f32.mrb[0].mxu0
  %v362 = vpop.f32.mrb[0].mxu0
  %v363 = vadd.f32 0.0, %v362
  %v364 = vpop.f32.mrb[0].mxu0
  %365 = vmatprep.mubr.bf16.mxu0 %v155
  %366 = vmatmul.mubr.bf16.gmra.mrb[0].mxu0 %v154
  %v367 = vpop.f32.mrb[0].mxu0
  %v368 = vadd.f32 0.0, %v367
  %v369 = vpop.f32.mrb[0].mxu0
  %v370 = vpop.f32.mrb[0].mxu0
  %v371 = vadd.f32 0.0, %v370
  %v372 = vpop.f32.mrb[0].mxu0
  %373 = vmatprep.mubr.bf16.mxu0 %v158
  %374 = vmatmul.mubr.bf16.gmra.mrb[0].mxu0 %v157
  %v375 = vpop.f32.mrb[0].mxu0
  %v376 = vadd.f32 0.0, %v375
  %v377 = vpop.f32.mrb[0].mxu0
  %v378 = vpop.f32.mrb[0].mxu0
  %v379 = vadd.f32 0.0, %v378
  %v380 = vpop.f32.mrb[0].mxu0
  %381 = vmatprep.mubr.bf16.mxu0 %v161
  %382 = vmatmul.mubr.bf16.gmra.mrb[0].mxu0 %v160
  %v383 = vpop.f32.mrb[0].mxu0
  %v384 = vadd.f32 0.0, %v383
  %v385 = vpop.f32.mrb[0].mxu0
  %v386 = vpop.f32.mrb[0].mxu0
  %v387 = vadd.f32 0.0, %v386
  %v388 = vpop.f32.mrb[0].mxu0
  %389 = vmatprep.mubr.bf16.mxu0 %v164
  %390 = vmatmul.mubr.bf16.gmra.mrb[0].mxu0 %v163
  %v391 = vpop.f32.mrb[0].mxu0
  %v392 = vadd.f32 0.0, %v391
  %v393 = vpop.f32.mrb[0].mxu0
  %v394 = vpop.f32.mrb[0].mxu0
  %v395 = vpop.f32.mrb[0].mxu0
  %396 = vdwg.mxu0
  %397 = vmatprep.subr.bf16.mxu0 0
  %398 = vmatpush1.bf16.msra.mxu0 %v293
  %399 = vmatprep.subr.bf16.mxu0 0
  %400 = vmatpush1.bf16.msra.mxu0 %v294
  %401 = vmatprep.subr.bf16.mxu0 0
  %402 = vmatpush1.bf16.msra.mxu0 %v295
  %403 = vmatprep.subr.bf16.mxu0 0
  %404 = vmatpush1.bf16.msra.mxu0 %v296
  %405 = vmatprep.subr.bf16.mxu0 0
  %406 = vmatpush1.bf16.msra.mxu0 %v297
  %407 = vmatprep.subr.bf16.mxu0 0
  %408 = vmatpush1.bf16.msra.mxu0 %v298
  %409 = vmatprep.subr.bf16.mxu0 0
  %410 = vmatpush1.bf16.msra.mxu0 %v299
  %411 = vmatprep.subr.bf16.mxu0 0
  %412 = vmatpush1.bf16.msra.mxu0 %v300
  %413 = vmatprep.subr.bf16.mxu0 0
  %414 = vmatpush1.bf16.msra.mxu0 0
  %415 = vmatprep.subr.bf16.mxu0 0
  %416 = vmatpush1.bf16.msra.mxu0 0
  %417 = vmatprep.subr.bf16.mxu0 0
  %418 = vmatpush1.bf16.msra.mxu0 0
  %419 = vmatprep.subr.bf16.mxu0 0
  %420 = vmatpush1.bf16.msra.mxu0 0
  %421 = vmatprep.subr.bf16.mxu0 0
  %422 = vmatpush1.bf16.msra.mxu0 0
  %423 = vmatprep.subr.bf16.mxu0 0
  %424 = vmatpush1.bf16.msra.mxu0 0
  %425 = vmatprep.subr.bf16.mxu0 0
  %426 = vmatpush1.bf16.msra.mxu0 0
  %427 = vmatprep.subr.bf16.mxu0 0
  %428 = vmatpush1.bf16.msra.mxu0 0
  %429 = vmatprep.mubr.bf16.mxu0 0
  %430 = vmatmul.mubr.bf16.gmra.mrb[0].mxu0 %v153
  %v431 = vpop.f32.mrb[0].mxu0
  %v432 = vadd.f32 %v360, %v431
  %v433 = vpop.f32.mrb[0].mxu0
  %v434 = vpop.f32.mrb[0].mxu0
  %v435 = vadd.f32 %v363, %v434
  %v436 = vpop.f32.mrb[0].mxu0
  %437 = vmatprep.mubr.bf16.mxu0 0
  %438 = vmatmul.mubr.bf16.gmra.mrb[0].mxu0 %v156
  %v439 = vpop.f32.mrb[0].mxu0
  %v440 = vadd.f32 %v368, %v439
  %v441 = vpop.f32.mrb[0].mxu0
  %v442 = vpop.f32.mrb[0].mxu0
  %v443 = vadd.f32 %v371, %v442
  %v444 = vpop.f32.mrb[0].mxu0
  %445 = vmatprep.mubr.bf16.mxu0 0
  %446 = vmatmul.mubr.bf16.gmra.mrb[0].mxu0 %v159
  %v447 = vpop.f32.mrb[0].mxu0
  %v448 = vadd.f32 %v376, %v447
  %v449 = vpop.f32.mrb[0].mxu0
  %v450 = vpop.f32.mrb[0].mxu0
  %v451 = vadd.f32 %v379, %v450
  %v452 = vpop.f32.mrb[0].mxu0
  %453 = vmatprep.mubr.bf16.mxu0 0
  %454 = vmatmul.mubr.bf16.gmra.mrb[0].mxu0 %v162
  %v455 = vpop.f32.mrb[0].mxu0
  %v456 = vadd.f32 %v384, %v455
  %v457 = vpop.f32.mrb[0].mxu0
  %v458 = vpop.f32.mrb[0].mxu0
  %v459 = vadd.f32 %v387, %v458
  %v460 = vpop.f32.mrb[0].mxu0
  %461 = vmatprep.mubr.bf16.mxu0 0
  %462 = vmatmul.mubr.bf16.gmra.mrb[0].mxu0 %v165
  %v463 = vpop.f32.mrb[0].mxu0
  %v464 = vadd.f32 %v392, %v463
  %v465 = vpop.f32.mrb[0].mxu0
  %v466 = vpop.f32.mrb[0].mxu0
  %v467 = vpop.f32.mrb[0].mxu0
  %468 = vdwg.mxu0
  %v469 = vadd.f32 %v31, %v432
  %v470 = vadd.f32 %v32, %v435
  %v471 = vadd.f32 %v33, %v440
  %v472 = vadd.f32 %v34, %v443
  %v473 = vadd.f32 %v35, %v448
  %v474 = vadd.f32 %v36, %v451
  %v475 = vadd.f32 %v37, %v456
  %v476 = vadd.f32 %v38, %v459
  %v477 = vadd.f32 %v39, %v464
  %478 = vst [vmem:[#allocation2] sm:$0xff] %v469
  %479 = vst [vmem:[#allocation2 + $0x8] sm:$0xff] %v470
  %480 = vst [vmem:[#allocation2 + $0x10] sm:$0xff] %v471
  %481 = vst [vmem:[#allocation2 + $0x18] sm:$0xff] %v472
  %482 = vst [vmem:[#allocation2 + $0x20] sm:$0xff] %v473
  %483 = vst [vmem:[#allocation2 + $0x28] sm:$0xff] %v474
  %484 = vst [vmem:[#allocation2 + $0x30] sm:$0xff] %v475
  %485 = vst [vmem:[#allocation2 + $0x38] sm:$0xff] %v476
  %486 = vst [vmem:[#allocation2 + $0x40] sm:$0xff] %v477
  // Predicated region
  $region22: #{conv_map_cell_forward.15} parent=0 // pred_check
    %p487 = pneg %p18
  $region23: #{conv_map_cell_forward.15} parent=0 // pred_check_branch
    %489 = sbr.rel (%p487) target = $region25
  $region24: #{conv_map_cell_forward.15} parent=0 // pred_region
    %v490 = vld [vmem:[#allocation2] sm:$0xff]
    %v491 = vld [vmem:[#allocation2 + $0x8] sm:$0xff]
    %v492 = vld [vmem:[#allocation2 + $0x10] sm:$0xff]
    %v493 = vld [vmem:[#allocation2 + $0x18] sm:$0xff]
    %v494 = vld [vmem:[#allocation2 + $0x20] sm:$0xff]
    %v495 = vld [vmem:[#allocation2 + $0x28] sm:$0xff]
    %v496 = vld [vmem:[#allocation2 + $0x30] sm:$0xff]
    %v497 = vld [vmem:[#allocation2 + $0x38] sm:$0xff]
    %v498 = vld [vmem:[#allocation2 + $0x40] sm:$0xff]
    %v499 = vld [vmem:[%s2] sm:$0x1]
    %v501 = vlaneseq
    %v502 = vshrl.u32 %v501, 7
    %v503 = vsub.s32 0, %v502
    %v504 = vrot.slane %v499, %v503
    %v506 = vmul.f32 %v490, %v504
    %v507 = vmul.f32 %v491, %v504
    %v508 = vmul.f32 %v492, %v504
    %v509 = vmul.f32 %v493, %v504
    %v510 = vmul.f32 %v494, %v504
    %v511 = vmul.f32 %v495, %v504
    %v512 = vmul.f32 %v496, %v504
    %v513 = vmul.f32 %v497, %v504
    %v514 = vmul.f32 %v498, %v504
    %v515 = vld [vmem:[%s3] sm:$0x1]
    %v517 = vlaneseq
    %v518 = vshrl.u32 %v517, 7
    %v519 = vsub.s32 0, %v518
    %v520 = vrot.slane %v515, %v519
    %v522 = vadd.f32 %v506, %v520
    %v523 = vadd.f32 %v507, %v520
    %v524 = vadd.f32 %v508, %v520
    %v525 = vadd.f32 %v509, %v520
    %v526 = vadd.f32 %v510, %v520
    %v527 = vadd.f32 %v511, %v520
    %v528 = vadd.f32 %v512, %v520
    %v529 = vadd.f32 %v513, %v520
    %v530 = vadd.f32 %v514, %v520
    %v531 = vmax.f32 %v522, 0.0
    %v532 = vmax.f32 %v523, 0.0
    %v533 = vmax.f32 %v524, 0.0
    %v534 = vmax.f32 %v525, 0.0
    %v535 = vmax.f32 %v526, 0.0
    %v536 = vmax.f32 %v527, 0.0
    %v537 = vmax.f32 %v528, 0.0
    %v538 = vmax.f32 %v529, 0.0
    %v539 = vmax.f32 %v530, 0.0
    %540 = vst [vmem:[%s4] sm:$0xff] %v531
    %541 = vst [vmem:[%s4 + $0x8] sm:$0xff] %v532
    %542 = vst [vmem:[%s4 + $0x10] sm:$0xff] %v533
    %543 = vst [vmem:[%s4 + $0x18] sm:$0xff] %v534
    %544 = vst [vmem:[%s4 + $0x20] sm:$0xff] %v535
    %545 = vst [vmem:[%s4 + $0x28] sm:$0xff] %v536
    %546 = vst [vmem:[%s4 + $0x30] sm:$0xff] %v537
    %547 = vst [vmem:[%s4 + $0x38] sm:$0xff] %v538
    %548 = vst [vmem:[%s4 + $0x40] sm:$0xff] %v539
  $region25: #{conv_map_cell_forward.15} parent=0 // pred_fallthru
    _
  // Predicated region
  $region26: #{conv_map_cell_forward.15} parent=0 // pred_check
    _
  $region27: #{conv_map_cell_forward.15} parent=0 // pred_check_branch
    %550 = sbr.rel (0) target = $region29
  $region28: #{conv_map_cell_forward.15} parent=0 // pred_region
    _
  $region29: #{conv_map_cell_forward.15} parent=0 // pred_fallthru
    _
  // Predicated region
  $region30: #{conv_map_cell_forward.15} parent=0 // pred_check
    _
  $region31: #{conv_map_cell_forward.15} parent=0 // pred_check_branch
    %552 = sbr.rel (0) target = $region33
  $region32: #{conv_map_cell_forward.15} parent=0 // pred_region
    _
  $region33: #{conv_map_cell_forward.15} parent=0 // pred_fallthru
    _

// kernel: conv_map_cell_forward.16
$region0: #{conv_map_cell_forward.16}
  #allocation0 [shape = 'u32[]', space=smem, size = 0x4, offset = 0x4, fixed_abs, tag = 'smem constant byte address 0x4 - core index']
  #allocation1 [shape = 'u32[144,128]{1,0:T(1,128)}', space=vmem, size = 0x12000, scoped, tag = 'internal scratch']
  %s0 = inlined_call_operand.vmem [shape: f32[2,1,36], index: 0, kind: input, shape index: {}]
  %s1 = inlined_call_operand.vmem [shape: f32[2,12,36], index: 1, kind: input, shape index: {}]
  %s2 = inlined_call_operand.vmem [shape: f32[2,36], index: 2, kind: output, shape index: {}]
  %s3 = sld [smem:[#allocation0]]
  $region18: #{conv_map_cell_forward.16} parent=0
    _
  %s5 = ssub.s32 1, %s3
  %s6 = scalar_select 0, %s5, %s3
  // Predicated region
  $region2: #{conv_map_cell_forward.16} parent=0 // pred_check
    _
  $region3: #{conv_map_cell_forward.16} parent=0 // pred_check_branch
    %8 = sbr.rel (0) target = $region5
  $region4: #{conv_map_cell_forward.16} parent=0 // pred_region
    _
  $region5: #{conv_map_cell_forward.16} parent=0 // pred_fallthru
    _
  // Predicated region
  $region6: #{conv_map_cell_forward.16} parent=0 // pred_check
    _
  $region7: #{conv_map_cell_forward.16} parent=0 // pred_check_branch
    %10 = sbr.rel (0) target = $region9
  $region8: #{conv_map_cell_forward.16} parent=0 // pred_region
    _
  $region9: #{conv_map_cell_forward.16} parent=0 // pred_fallthru
    _
  %v11 = vld [vmem:[%s0] sm:$0x1]
  %v12 = vld [vmem:[%s0 + $0x1] sm:$0x1]
  %v13 = vld [vmem:[%s1] sm:$0xff]
  %v14 = vld [vmem:[%s1 + $0x8] sm:$0xf]
  %v15 = vld [vmem:[%s1 + $0x10] sm:$0xff]
  %v16 = vld [vmem:[%s1 + $0x18] sm:$0xf]
  %v18 = vlaneseq
  %v19 = vshrl.u32 %v18, 7
  %v20 = vsub.s32 0, %v19
  %v21 = vrot.slane %v11, %v20
  %v23 = vmul.f32 %v13, %v21
  %v24 = vmul.f32 %v14, %v21
  %vm25 = vcmask 293888
  %v26 = vsel %vm25, %v23, 0.0
  %27 = vadd.xlane.f32.xlu0 %v26
  %v28 = vpop.xlane.xlu0 %27
  %vm29 = vcmask 289792
  %v30 = vsel %vm29, %v24, 0.0
  %31 = vadd.xlane.f32.xlu0 %v30
  %v32 = vpop.xlane.xlu0 %31
  %v34 = vlaneseq
  %v35 = vshrl.u32 %v34, 7
  %v36 = vsub.s32 0, %v35
  %v37 = vrot.slane %v12, %v36
  %v39 = vmul.f32 %v15, %v37
  %v40 = vmul.f32 %v16, %v37
  %v41 = vsel %vm25, %v39, 0.0
  %42 = vadd.xlane.f32.xlu0 %v41
  %v43 = vpop.xlane.xlu0 %42
  %v44 = vsel %vm29, %v40, 0.0
  %45 = vadd.xlane.f32.xlu0 %v44
  %v46 = vpop.xlane.xlu0 %45
  %vm47 = vcmask 7168
  %v48 = vsel %vm47, %v28, -inf
  %vm49 = vcmask 3072
  %v50 = vsel %vm49, %v32, -inf
  %v51 = vmax.f32 %v48, %v50
  %v52 = vrot.slane %v51, 4
  %v53 = vmax.f32 %v51, %v52
  %v54 = vrot.slane %v53, 2
  %v55 = vmax.f32 %v53, %v54
  %v56 = vrot.slane %v55, 1
  %v57 = vmax.f32 %v55, %v56
  %v58 = vsel %vm47, %v43, -inf
  %v59 = vsel %vm49, %v46, -inf
  %v60 = vmax.f32 %v58, %v59
  %v61 = vrot.slane %v60, 4
  %v62 = vmax.f32 %v60, %v61
  %v63 = vrot.slane %v62, 2
  %v64 = vmax.f32 %v62, %v63
  %v65 = vrot.slane %v64, 1
  %v66 = vmax.f32 %v64, %v65
  %v67 = vsub.f32 %v28, %v57
  %v68 = vsub.f32 %v32, %v57
  %v69 = vsub.f32 %v43, %v66
  %v70 = vsub.f32 %v46, %v66
  %v71 = vmul.f32 %v67, 1.442695
  %v72 = vpow.pop %v71
  %v73 = vmul.f32 %v68, 1.442695
  %v74 = vpow.pop %v73
  %v75 = vmul.f32 %v69, 1.442695
  %v76 = vpow.pop %v75
  %v77 = vmul.f32 %v70, 1.442695
  %v78 = vpow.pop %v77
  %v79 = vsel %vm47, %v72, 0.0
  %v80 = vsel %vm49, %v74, 0.0
  %v81 = vadd.f32 %v79, %v80
  %v82 = vrot.slane %v81, 4
  %v83 = vadd.f32 %v81, %v82
  %v84 = vrot.slane %v83, 2
  %v85 = vadd.f32 %v83, %v84
  %v86 = vrot.slane %v85, 1
  %v87 = vadd.f32 %v85, %v86
  %v88 = vsel %vm47, %v76, 0.0
  %v89 = vsel %vm49, %v78, 0.0
  %v90 = vadd.f32 %v88, %v89
  %v91 = vrot.slane %v90, 4
  %v92 = vadd.f32 %v90, %v91
  %v93 = vrot.slane %v92, 2
  %v94 = vadd.f32 %v92, %v93
  %v95 = vrot.slane %v94, 1
  %v96 = vadd.f32 %v94, %v95
  %v97 = vrcp.pop %v87
  %v98 = vrcp.pop %v96
  %v99 = vmul.f32 %v72, %v97
  %v100 = vmul.f32 %v74, %v97
  %v101 = vmul.f32 %v76, %v98
  %v102 = vmul.f32 %v78, %v98
  %104 = vset.pattern.permute.xlu0 0
  %105 = vperm.xlu0 %104, %v99
  %v106 = vpop.permute.xlu0 %105
  %109 = vset.pattern.permute.xlu0 0
  %110 = vperm.xlu0 %109, %v100
  %v111 = vpop.permute.xlu0 %110
  %114 = vset.pattern.permute.xlu0 0
  %115 = vperm.xlu0 %114, %v101
  %v116 = vpop.permute.xlu0 %115
  %119 = vset.pattern.permute.xlu0 0
  %120 = vperm.xlu0 %119, %v102
  %v121 = vpop.permute.xlu0 %120
  %v123 = vmul.f32 %v13, %v106
  %v124 = vmul.f32 %v14, %v111
  %v125 = vmul.f32 %v15, %v116
  %v126 = vmul.f32 %v16, %v121
  %v127 = vsel %vm25, %v123, 0.0
  %v128 = vsel %vm29, %v124, 0.0
  %v129 = vadd.f32 %v127, %v128
  %v130 = vrot.slane %v129, 4
  %v131 = vadd.f32 %v129, %v130
  %v132 = vrot.slane %v131, 2
  %v133 = vadd.f32 %v131, %v132
  %v134 = vrot.slane %v133, 1
  %v135 = vadd.f32 %v133, %v134
  %v136 = vsel %vm25, %v125, 0.0
  %v137 = vsel %vm29, %v126, 0.0
  %v138 = vadd.f32 %v136, %v137
  %v139 = vrot.slane %v138, 4
  %v140 = vadd.f32 %v138, %v139
  %v141 = vrot.slane %v140, 2
  %v142 = vadd.f32 %v140, %v141
  %v143 = vrot.slane %v142, 1
  %v144 = vadd.f32 %v142, %v143
  %v145 = vmax.f32 %v135, 0.0
  %v146 = vmax.f32 %v144, 0.0
  %vm149 = vcmask 1041409
  %v150 = vsel %vm149, %v146, %v145
  %vm152 = vcmask 287744
  %153 = vst.msk [vmem:[%s2] sm:$0x3] %vm152, %v150
  // Predicated region
  $region10: #{conv_map_cell_forward.16} parent=0 // pred_check
    _
  $region11: #{conv_map_cell_forward.16} parent=0 // pred_check_branch
    %155 = sbr.rel (0) target = $region13
  $region12: #{conv_map_cell_forward.16} parent=0 // pred_region
    _
  $region13: #{conv_map_cell_forward.16} parent=0 // pred_fallthru
    _
  // Predicated region
  $region14: #{conv_map_cell_forward.16} parent=0 // pred_check
    _
  $region15: #{conv_map_cell_forward.16} parent=0 // pred_check_branch
    %157 = sbr.rel (0) target = $region17
  $region16: #{conv_map_cell_forward.16} parent=0 // pred_region
    _
  $region17: #{conv_map_cell_forward.16} parent=0 // pred_fallthru
    _

// kernel: conv_map_cell_forward.23
$region0: #{conv_map_cell_forward.23}
  #allocation0 [shape = 'u32[]', space=smem, size = 0x4, offset = 0x4, fixed_abs, tag = 'smem constant byte address 0x4 - core index']
  #allocation1 [shape = 'u32[144,128]{1,0:T(1,128)}', space=vmem, size = 0x12000, scoped, tag = 'internal scratch']
  %s0 = inlined_call_operand.vmem [shape: f32[72,384], index: 0, kind: input, shape index: {}]
  %s1 = inlined_call_operand.vmem [shape: f32[72,384], index: 1, kind: input, shape index: {}]
  %s2 = inlined_call_operand.vmem [shape: f32[72,128], index: 2, kind: input, shape index: {}]
  %s3 = inlined_call_operand.vmem [shape: f32[72,128], index: 3, kind: output, shape index: {}]
  %s4 = sld [smem:[#allocation0]]
  $region22: #{conv_map_cell_forward.23} parent=0
    _
  %s6 = ssub.s32 1, %s4
  %s7 = scalar_select 0, %s6, %s4
  // Predicated region
  $region2: #{conv_map_cell_forward.23} parent=0 // pred_check
    _
  $region3: #{conv_map_cell_forward.23} parent=0 // pred_check_branch
    %9 = sbr.rel (0) target = $region5
  $region4: #{conv_map_cell_forward.23} parent=0 // pred_region
    _
  $region5: #{conv_map_cell_forward.23} parent=0 // pred_fallthru
    _
  // Predicated region
  $region6: #{conv_map_cell_forward.23} parent=0 // pred_check
    _
  $region7: #{conv_map_cell_forward.23} parent=0 // pred_check_branch
    %11 = sbr.rel (0) target = $region9
  $region8: #{conv_map_cell_forward.23} parent=0 // pred_region
    _
  $region9: #{conv_map_cell_forward.23} parent=0 // pred_fallthru
    _
  // Predicated region
  $region10: #{conv_map_cell_forward.23} parent=0 // pred_check
    _
  $region11: #{conv_map_cell_forward.23} parent=0 // pred_check_branch
    %13 = sbr.rel (0) target = $region13
  $region12: #{conv_map_cell_forward.23} parent=0 // pred_region
    _
  $region13: #{conv_map_cell_forward.23} parent=0 // pred_fallthru
    _
  %v14 = vld [vmem:[%s0] sm:$0xff]
  %v15 = vld [vmem:[%s0 + $0x8] sm:$0xff]
  %v16 = vld [vmem:[%s0 + $0x10] sm:$0xff]
  %v17 = vld [vmem:[%s0 + $0x18] sm:$0xff]
  %v18 = vld [vmem:[%s0 + $0x20] sm:$0xff]
  %v19 = vld [vmem:[%s0 + $0x28] sm:$0xff]
  %v20 = vld [vmem:[%s0 + $0x30] sm:$0xff]
  %v21 = vld [vmem:[%s0 + $0x38] sm:$0xff]
  %v22 = vld [vmem:[%s0 + $0x40] sm:$0xff]
  %v23 = vld [vmem:[%s0 + $0x48] sm:$0xff]
  %v24 = vld [vmem:[%s0 + $0x50] sm:$0xff]
  %v25 = vld [vmem:[%s0 + $0x58] sm:$0xff]
  %v26 = vld [vmem:[%s0 + $0x60] sm:$0xff]
  %v27 = vld [vmem:[%s0 + $0x68] sm:$0xff]
  %v28 = vld [vmem:[%s0 + $0x70] sm:$0xff]
  %v29 = vld [vmem:[%s0 + $0x78] sm:$0xff]
  %v30 = vld [vmem:[%s0 + $0x80] sm:$0xff]
  %v31 = vld [vmem:[%s0 + $0x88] sm:$0xff]
  %v32 = vld [vmem:[%s0 + $0x90] sm:$0xff]
  %v33 = vld [vmem:[%s0 + $0x98] sm:$0xff]
  %v34 = vld [vmem:[%s0 + $0xa0] sm:$0xff]
  %v35 = vld [vmem:[%s0 + $0xa8] sm:$0xff]
  %v36 = vld [vmem:[%s0 + $0xb0] sm:$0xff]
  %v37 = vld [vmem:[%s0 + $0xb8] sm:$0xff]
  %v38 = vld [vmem:[%s0 + $0xc0] sm:$0xff]
  %v39 = vld [vmem:[%s0 + $0xc8] sm:$0xff]
  %v40 = vld [vmem:[%s0 + $0xd0] sm:$0xff]
  %v41 = vld [vmem:[%s1] sm:$0xff]
  %v42 = vld [vmem:[%s1 + $0x8] sm:$0xff]
  %v43 = vld [vmem:[%s1 + $0x10] sm:$0xff]
  %v44 = vld [vmem:[%s1 + $0x18] sm:$0xff]
  %v45 = vld [vmem:[%s1 + $0x20] sm:$0xff]
  %v46 = vld [vmem:[%s1 + $0x28] sm:$0xff]
  %v47 = vld [vmem:[%s1 + $0x30] sm:$0xff]
  %v48 = vld [vmem:[%s1 + $0x38] sm:$0xff]
  %v49 = vld [vmem:[%s1 + $0x40] sm:$0xff]
  %v50 = vld [vmem:[%s1 + $0x48] sm:$0xff]
  %v51 = vld [vmem:[%s1 + $0x50] sm:$0xff]
  %v52 = vld [vmem:[%s1 + $0x58] sm:$0xff]
  %v53 = vld [vmem:[%s1 + $0x60] sm:$0xff]
  %v54 = vld [vmem:[%s1 + $0x68] sm:$0xff]
  %v55 = vld [vmem:[%s1 + $0x70] sm:$0xff]
  %v56 = vld [vmem:[%s1 + $0x78] sm:$0xff]
  %v57 = vld [vmem:[%s1 + $0x80] sm:$0xff]
  %v58 = vld [vmem:[%s1 + $0x88] sm:$0xff]
  %v59 = vld [vmem:[%s1 + $0x90] sm:$0xff]
  %v60 = vld [vmem:[%s1 + $0x98] sm:$0xff]
  %v61 = vld [vmem:[%s1 + $0xa0] sm:$0xff]
  %v62 = vld [vmem:[%s1 + $0xa8] sm:$0xff]
  %v63 = vld [vmem:[%s1 + $0xb0] sm:$0xff]
  %v64 = vld [vmem:[%s1 + $0xb8] sm:$0xff]
  %v65 = vld [vmem:[%s1 + $0xc0] sm:$0xff]
  %v66 = vld [vmem:[%s1 + $0xc8] sm:$0xff]
  %v67 = vld [vmem:[%s1 + $0xd0] sm:$0xff]
  %v68 = vadd.f32 %v14, %v41
  %v69 = vadd.f32 %v17, %v44
  %v70 = vadd.f32 %v20, %v47
  %v71 = vadd.f32 %v23, %v50
  %v72 = vadd.f32 %v26, %v53
  %v73 = vadd.f32 %v29, %v56
  %v74 = vadd.f32 %v32, %v59
  %v75 = vadd.f32 %v35, %v62
  %v76 = vadd.f32 %v38, %v65
  %v77 = vxor.u32 %v68, 2147483648
  %v78 = vxor.u32 %v69, 2147483648
  %v79 = vxor.u32 %v70, 2147483648
  %v80 = vxor.u32 %v71, 2147483648
  %v81 = vxor.u32 %v72, 2147483648
  %v82 = vxor.u32 %v73, 2147483648
  %v83 = vxor.u32 %v74, 2147483648
  %v84 = vxor.u32 %v75, 2147483648
  %v85 = vxor.u32 %v76, 2147483648
  %v86 = vmul.f32 %v77, 1.442695
  %v87 = vpow.pop %v86
  %v88 = vmul.f32 %v78, 1.442695
  %v89 = vpow.pop %v88
  %v90 = vmul.f32 %v79, 1.442695
  %v91 = vpow.pop %v90
  %v92 = vmul.f32 %v80, 1.442695
  %v93 = vpow.pop %v92
  %v94 = vmul.f32 %v81, 1.442695
  %v95 = vpow.pop %v94
  %v96 = vmul.f32 %v82, 1.442695
  %v97 = vpow.pop %v96
  %v98 = vmul.f32 %v83, 1.442695
  %v99 = vpow.pop %v98
  %v100 = vmul.f32 %v84, 1.442695
  %v101 = vpow.pop %v100
  %v102 = vmul.f32 %v85, 1.442695
  %v103 = vpow.pop %v102
  %v104 = vadd.f32 %v87, 1.0
  %v105 = vadd.f32 %v89, 1.0
  %v106 = vadd.f32 %v91, 1.0
  %v107 = vadd.f32 %v93, 1.0
  %v108 = vadd.f32 %v95, 1.0
  %v109 = vadd.f32 %v97, 1.0
  %v110 = vadd.f32 %v99, 1.0
  %v111 = vadd.f32 %v101, 1.0
  %v112 = vadd.f32 %v103, 1.0
  %v113 = vrcp.pop %v104
  %v114 = vmul.f32 1.0, %v113
  %v115 = vrcp.pop %v105
  %v116 = vmul.f32 1.0, %v115
  %v117 = vrcp.pop %v106
  %v118 = vmul.f32 1.0, %v117
  %v119 = vrcp.pop %v107
  %v120 = vmul.f32 1.0, %v119
  %v121 = vrcp.pop %v108
  %v122 = vmul.f32 1.0, %v121
  %v123 = vrcp.pop %v109
  %v124 = vmul.f32 1.0, %v123
  %v125 = vrcp.pop %v110
  %v126 = vmul.f32 1.0, %v125
  %v127 = vrcp.pop %v111
  %v128 = vmul.f32 1.0, %v127
  %v129 = vrcp.pop %v112
  %v130 = vmul.f32 1.0, %v129
  %v131 = vadd.f32 %v15, %v42
  %v132 = vadd.f32 %v18, %v45
  %v133 = vadd.f32 %v21, %v48
  %v134 = vadd.f32 %v24, %v51
  %v135 = vadd.f32 %v27, %v54
  %v136 = vadd.f32 %v30, %v57
  %v137 = vadd.f32 %v33, %v60
  %v138 = vadd.f32 %v36, %v63
  %v139 = vadd.f32 %v39, %v66
  %v140 = vxor.u32 %v131, 2147483648
  %v141 = vxor.u32 %v132, 2147483648
  %v142 = vxor.u32 %v133, 2147483648
  %v143 = vxor.u32 %v134, 2147483648
  %v144 = vxor.u32 %v135, 2147483648
  %v145 = vxor.u32 %v136, 2147483648
  %v146 = vxor.u32 %v137, 2147483648
  %v147 = vxor.u32 %v138, 2147483648
  %v148 = vxor.u32 %v139, 2147483648
  %v149 = vmul.f32 %v140, 1.442695
  %v150 = vpow.pop %v149
  %v151 = vmul.f32 %v141, 1.442695
  %v152 = vpow.pop %v151
  %v153 = vmul.f32 %v142, 1.442695
  %v154 = vpow.pop %v153
  %v155 = vmul.f32 %v143, 1.442695
  %v156 = vpow.pop %v155
  %v157 = vmul.f32 %v144, 1.442695
  %v158 = vpow.pop %v157
  %v159 = vmul.f32 %v145, 1.442695
  %v160 = vpow.pop %v159
  %v161 = vmul.f32 %v146, 1.442695
  %v162 = vpow.pop %v161
  %v163 = vmul.f32 %v147, 1.442695
  %v164 = vpow.pop %v163
  %v165 = vmul.f32 %v148, 1.442695
  %v166 = vpow.pop %v165
  %v167 = vadd.f32 %v150, 1.0
  %v168 = vadd.f32 %v152, 1.0
  %v169 = vadd.f32 %v154, 1.0
  %v170 = vadd.f32 %v156, 1.0
  %v171 = vadd.f32 %v158, 1.0
  %v172 = vadd.f32 %v160, 1.0
  %v173 = vadd.f32 %v162, 1.0
  %v174 = vadd.f32 %v164, 1.0
  %v175 = vadd.f32 %v166, 1.0
  %v176 = vrcp.pop %v167
  %v177 = vmul.f32 1.0, %v176
  %v178 = vrcp.pop %v168
  %v179 = vmul.f32 1.0, %v178
  %v180 = vrcp.pop %v169
  %v181 = vmul.f32 1.0, %v180
  %v182 = vrcp.pop %v170
  %v183 = vmul.f32 1.0, %v182
  %v184 = vrcp.pop %v171
  %v185 = vmul.f32 1.0, %v184
  %v186 = vrcp.pop %v172
  %v187 = vmul.f32 1.0, %v186
  %v188 = vrcp.pop %v173
  %v189 = vmul.f32 1.0, %v188
  %v190 = vrcp.pop %v174
  %v191 = vmul.f32 1.0, %v190
  %v192 = vrcp.pop %v175
  %v193 = vmul.f32 1.0, %v192
  %v194 = vmul.f32 %v114, %v43
  %v195 = vmul.f32 %v116, %v46
  %v196 = vmul.f32 %v118, %v49
  %v197 = vmul.f32 %v120, %v52
  %v198 = vmul.f32 %v122, %v55
  %v199 = vmul.f32 %v124, %v58
  %v200 = vmul.f32 %v126, %v61
  %v201 = vmul.f32 %v128, %v64
  %v202 = vmul.f32 %v130, %v67
  %v203 = vadd.f32 %v16, %v194
  %v204 = vadd.f32 %v19, %v195
  %v205 = vadd.f32 %v22, %v196
  %v206 = vadd.f32 %v25, %v197
  %v207 = vadd.f32 %v28, %v198
  %v208 = vadd.f32 %v31, %v199
  %v209 = vadd.f32 %v34, %v200
  %v210 = vadd.f32 %v37, %v201
  %v211 = vadd.f32 %v40, %v202
  %v212 = vtanh.pop %v203
  %v213 = vtanh.pop %v204
  %v214 = vtanh.pop %v205
  %v215 = vtanh.pop %v206
  %v216 = vtanh.pop %v207
  %v217 = vtanh.pop %v208
  %v218 = vtanh.pop %v209
  %v219 = vtanh.pop %v210
  %v220 = vtanh.pop %v211
  %v221 = vsub.f32 1.0, %v177
  %v222 = vsub.f32 1.0, %v179
  %v223 = vsub.f32 1.0, %v181
  %v224 = vsub.f32 1.0, %v183
  %v225 = vsub.f32 1.0, %v185
  %v226 = vsub.f32 1.0, %v187
  %v227 = vsub.f32 1.0, %v189
  %v228 = vsub.f32 1.0, %v191
  %v229 = vsub.f32 1.0, %v193
  %v230 = vmul.f32 %v221, %v212
  %v231 = vmul.f32 %v222, %v213
  %v232 = vmul.f32 %v223, %v214
  %v233 = vmul.f32 %v224, %v215
  %v234 = vmul.f32 %v225, %v216
  %v235 = vmul.f32 %v226, %v217
  %v236 = vmul.f32 %v227, %v218
  %v237 = vmul.f32 %v228, %v219
  %v238 = vmul.f32 %v229, %v220
  %v239 = vld [vmem:[%s2] sm:$0xff]
  %v240 = vld [vmem:[%s2 + $0x8] sm:$0xff]
  %v241 = vld [vmem:[%s2 + $0x10] sm:$0xff]
  %v242 = vld [vmem:[%s2 + $0x18] sm:$0xff]
  %v243 = vld [vmem:[%s2 + $0x20] sm:$0xff]
  %v244 = vld [vmem:[%s2 + $0x28] sm:$0xff]
  %v245 = vld [vmem:[%s2 + $0x30] sm:$0xff]
  %v246 = vld [vmem:[%s2 + $0x38] sm:$0xff]
  %v247 = vld [vmem:[%s2 + $0x40] sm:$0xff]
  %v248 = vmul.f32 %v177, %v239
  %v249 = vmul.f32 %v179, %v240
  %v250 = vmul.f32 %v181, %v241
  %v251 = vmul.f32 %v183, %v242
  %v252 = vmul.f32 %v185, %v243
  %v253 = vmul.f32 %v187, %v244
  %v254 = vmul.f32 %v189, %v245
  %v255 = vmul.f32 %v191, %v246
  %v256 = vmul.f32 %v193, %v247
  %v257 = vadd.f32 %v230, %v248
  %v258 = vadd.f32 %v231, %v249
  %v259 = vadd.f32 %v232, %v250
  %v260 = vadd.f32 %v233, %v251
  %v261 = vadd.f32 %v234, %v252
  %v262 = vadd.f32 %v235, %v253
  %v263 = vadd.f32 %v236, %v254
  %v264 = vadd.f32 %v237, %v255
  %v265 = vadd.f32 %v238, %v256
  %266 = vst [vmem:[%s3] sm:$0xff] %v257
  %267 = vst [vmem:[%s3 + $0x8] sm:$0xff] %v258
  %268 = vst [vmem:[%s3 + $0x10] sm:$0xff] %v259
  %269 = vst [vmem:[%s3 + $0x18] sm:$0xff] %v260
  %270 = vst [vmem:[%s3 + $0x20] sm:$0xff] %v261
  %271 = vst [vmem:[%s3 + $0x28] sm:$0xff] %v262
  %272 = vst [vmem:[%s3 + $0x30] sm:$0xff] %v263
  %273 = vst [vmem:[%s3 + $0x38] sm:$0xff] %v264
  %274 = vst [vmem:[%s3 + $0x40] sm:$0xff] %v265
  // Predicated region
  $region14: #{conv_map_cell_forward.23} parent=0 // pred_check
    _
  $region15: #{conv_map_cell_forward.23} parent=0 // pred_check_branch
    %276 = sbr.rel (0) target = $region17
  $region16: #{conv_map_cell_forward.23} parent=0 // pred_region
    _
  $region17: #{conv_map_cell_forward.23} parent=0 // pred_fallthru
    _
  // Predicated region
  $region18: #{conv_map_cell_forward.23} parent=0 // pred_check
    _
  $region19: #{conv_map_cell_forward.23} parent=0 // pred_check_branch
    %278 = sbr.rel (0) target = $region21
  $region20: #{conv_map_cell_forward.23} parent=0 // pred_region
    _
  $region21: #{conv_map_cell_forward.23} parent=0 // pred_fallthru
    _

// kernel: conv_map_cell_forward.21
$region0: #{conv_map_cell_forward.21}
  #allocation0 [shape = 'u32[]', space=smem, size = 0x4, offset = 0x4, fixed_abs, tag = 'smem constant byte address 0x4 - core index']
  #allocation1 [shape = 'u32[144,128]{1,0:T(1,128)}', space=vmem, size = 0x12000, scoped, tag = 'internal scratch']
  #allocation2 [shape = 'f32[72,128]{1,0:T(8,128)}', space=vmem, size = 0x9000, scoped, tag = 'scratch operand']
  %s0 = inlined_call_operand.vmem [shape: bf16[72,128], index: 0, kind: input, shape index: {}]
  %s1 = inlined_call_operand.vmem [shape: bf16[128,384], index: 1, kind: input, shape index: {}]
  %s2 = inlined_call_operand.vmem [shape: f32[1,384], index: 2, kind: input, shape index: {}]
  %s3 = inlined_call_operand.vmem [shape: f32[1,384], index: 3, kind: input, shape index: {}]
  %s4 = inlined_call_operand.vmem [shape: f32[72,384], index: 4, kind: output, shape index: {}]
  %s5 = sld [smem:[#allocation0]]
  $region132: #{conv_map_cell_forward.21} parent=0
    _
  %s7 = ssub.s32 1, %s5
  %s8 = scalar_select 0, %s7, %s5
  $region1: #{conv_map_cell_forward.21} parent=0
    #allocation3 [shape = 'u8[65536]{0}', space=vmem, size = 0x10000, scoped, tag = 'input window, operand 1']
    #allocation4 [shape = 'u8[73728]{0}', space=vmem, size = 0x12000, scoped, tag = 'output window, operand 0']
    loop: start=0, step=1, limit=5
    $region2: #{conv_map_cell_forward.21} parent=1 // loop_pre_header
      _
    $region3: #{conv_map_cell_forward.21} parent=1 // loop_header
      %s10 = sphi 0, %s14
      %p11 = scmp.ge.s32.totalorder %s10, 5
      %s17 = sphi 0, %s36
      %s18 = sphi 0, %s32
      %s19 = sphi 0, %s28
      %s20 = sphi 0, %s17
      %s21 = sphi 0, %s18
      %s22 = sphi 0, %s19
      %s23 = sphi 0, %s20
      %s24 = sphi 0, %s21
      %s25 = sphi 0, %s22
      %s41 = sphi 0, %s43
      %s44 = sphi 0, %s41
      %s45 = sphi 0, %s44
      %s61 = sphi 0, %s45
      %s69 = sphi 0, %s71
      %s72 = sphi 0, %s69
      %s73 = sphi 0, %s72
      %s89 = sphi 0, %s73
      %s95 = sphi 0, %s97
      %s98 = sphi 0, %s95
      %s99 = sphi 0, %s98
      %s115 = sphi 0, %s99
      %s121 = sphi 0, %s123
      %s124 = sphi 0, %s121
      %s125 = sphi 0, %s124
      %s141 = sphi 0, %s125
      %s149 = sphi 0, %s151
      %s152 = sphi 0, %s149
      %s153 = sphi 0, %s152
      %s169 = sphi 0, %s153
    $region4: #{conv_map_cell_forward.21} parent=1 // loop_header_branch
      %13 = sbr.rel (%p11) target = $region8
    $region5: #{conv_map_cell_forward.21} parent=1 // loop_body
      %s15 = ssub.s32 %s10, 1
      %s16 = ssub.s32 %s10, 2
      %s26 = sadd.s32 1, %s19
      %p27 = scmp.ge.s32.totalorder %s26, 1
      %s28 = scalar_select %p27, 0, %s26
      %s29 = sadd.s32 1, %s18
      %s30 = scalar_select %p27, %s29, %s18
      %p31 = scmp.ge.s32.totalorder %s30, 3
      %s32 = scalar_select %p31, 0, %s30
      %s33 = sadd.s32 1, %s17
      %s34 = scalar_select %p31, %s33, %s17
      %p35 = scmp.ge.s32.totalorder %s34, 1
      %s36 = scalar_select %p35, 0, %s34
      %s37 = ssub.s32 %s17, %s36
      %s38 = ssub.s32 %s19, %s28
      %s39 = sor.u32 %s37, %s38
      %p40 = scmp.eq.s32.totalorder %s39, 0
      %s42 = sadd.s32 %s41, 1
      %s43 = scalar_select %p40, %s41, %s42
      %p46 = pneg %p40
      %p47 = scmp.eq.s32.totalorder %s10, 2
      %p48 = por %p46, %p47
      %p49 = scmp.ne.s32.totalorder %s41, %s44
      %p50 = scmp.eq.s32.totalorder %s10, 0
      %p51 = por %p49, %p50
      %p52 = scmp.ne.s32.totalorder %s41, %s44
      %p53 = scmp.eq.s32.totalorder %s15, 2
      %p54 = por %p52, %p53
      %p55 = scmp.ne.s32.totalorder %s44, %s45
      %p56 = scmp.eq.s32.totalorder %s15, 0
      %p57 = por %p55, %p56
      %p58 = scmp.ne.s32.totalorder %s44, %s45
      %p59 = scmp.eq.s32.totalorder %s16, 2
      %p60 = por %p58, %p59
      %p62 = scmp.ne.s32.totalorder %s45, %s61
      %p63 = scmp.eq.s32.totalorder %s16, 0
      %p64 = por %p62, %p63
      %s65 = ssub.s32 %s19, %s28
      %s66 = ssub.s32 %s18, %s32
      %s67 = sor.u32 %s65, %s66
      %p68 = scmp.eq.s32.totalorder %s67, 0
      %s70 = sadd.s32 %s69, 1
      %s71 = scalar_select %p68, %s69, %s70
      %p74 = pneg %p68
      %p75 = scmp.eq.s32.totalorder %s10, 2
      %p76 = por %p74, %p75
      %p77 = scmp.ne.s32.totalorder %s69, %s72
      %p78 = scmp.eq.s32.totalorder %s10, 0
      %p79 = por %p77, %p78
      %p80 = scmp.ne.s32.totalorder %s69, %s72
      %p81 = scmp.eq.s32.totalorder %s15, 2
      %p82 = por %p80, %p81
      %p83 = scmp.ne.s32.totalorder %s72, %s73
      %p84 = scmp.eq.s32.totalorder %s15, 0
      %p85 = por %p83, %p84
      %p86 = scmp.ne.s32.totalorder %s72, %s73
      %p87 = scmp.eq.s32.totalorder %s16, 2
      %p88 = por %p86, %p87
      %p90 = scmp.ne.s32.totalorder %s73, %s89
      %p91 = scmp.eq.s32.totalorder %s16, 0
      %p92 = por %p90, %p91
      %s93 = ssub.s32 %s18, %s32
      %p94 = scmp.eq.s32.totalorder %s93, 0
      %s96 = sadd.s32 %s95, 1
      %s97 = scalar_select %p94, %s95, %s96
      %p100 = pneg %p94
      %p101 = scmp.eq.s32.totalorder %s10, 2
      %p102 = por %p100, %p101
      %p103 = scmp.ne.s32.totalorder %s95, %s98
      %p104 = scmp.eq.s32.totalorder %s10, 0
      %p105 = por %p103, %p104
      %p106 = scmp.ne.s32.totalorder %s95, %s98
      %p107 = scmp.eq.s32.totalorder %s15, 2
      %p108 = por %p106, %p107
      %p109 = scmp.ne.s32.totalorder %s98, %s99
      %p110 = scmp.eq.s32.totalorder %s15, 0
      %p111 = por %p109, %p110
      %p112 = scmp.ne.s32.totalorder %s98, %s99
      %p113 = scmp.eq.s32.totalorder %s16, 2
      %p114 = por %p112, %p113
      %p116 = scmp.ne.s32.totalorder %s99, %s115
      %p117 = scmp.eq.s32.totalorder %s16, 0
      %p118 = por %p116, %p117
      %s119 = ssub.s32 %s18, %s32
      %p120 = scmp.eq.s32.totalorder %s119, 0
      %s122 = sadd.s32 %s121, 1
      %s123 = scalar_select %p120, %s121, %s122
      %p126 = pneg %p120
      %p127 = scmp.eq.s32.totalorder %s10, 2
      %p128 = por %p126, %p127
      %p129 = scmp.ne.s32.totalorder %s121, %s124
      %p130 = scmp.eq.s32.totalorder %s10, 0
      %p131 = por %p129, %p130
      %p132 = scmp.ne.s32.totalorder %s121, %s124
      %p133 = scmp.eq.s32.totalorder %s15, 2
      %p134 = por %p132, %p133
      %p135 = scmp.ne.s32.totalorder %s124, %s125
      %p136 = scmp.eq.s32.totalorder %s15, 0
      %p137 = por %p135, %p136
      %p138 = scmp.ne.s32.totalorder %s124, %s125
      %p139 = scmp.eq.s32.totalorder %s16, 2
      %p140 = por %p138, %p139
      %p142 = scmp.ne.s32.totalorder %s125, %s141
      %p143 = scmp.eq.s32.totalorder %s16, 0
      %p144 = por %p142, %p143
      %s145 = ssub.s32 %s17, %s36
      %s146 = ssub.s32 %s18, %s32
      %s147 = sor.u32 %s145, %s146
      %p148 = scmp.eq.s32.totalorder %s147, 0
      %s150 = sadd.s32 %s149, 1
      %s151 = scalar_select %p148, %s149, %s150
      %p154 = pneg %p148
      %p155 = scmp.eq.s32.totalorder %s10, 2
      %p156 = por %p154, %p155
      %p157 = scmp.ne.s32.totalorder %s149, %s152
      %p158 = scmp.eq.s32.totalorder %s10, 0
      %p159 = por %p157, %p158
      %p160 = scmp.ne.s32.totalorder %s149, %s152
      %p161 = scmp.eq.s32.totalorder %s15, 2
      %p162 = por %p160, %p161
      %p163 = scmp.ne.s32.totalorder %s152, %s153
      %p164 = scmp.eq.s32.totalorder %s15, 0
      %p165 = por %p163, %p164
      %p166 = scmp.ne.s32.totalorder %s152, %s153
      %p167 = scmp.eq.s32.totalorder %s16, 2
      %p168 = por %p166, %p167
      %p170 = scmp.ne.s32.totalorder %s153, %s169
      %p171 = scmp.eq.s32.totalorder %s16, 0
      %p172 = por %p170, %p171
      %p173 = scmp.le.s32.totalorder 1, %s10
      %p174 = scmp.lt.s32.totalorder %s10, 4
      %p175 = pnand %p173, %p174
      %p176 = pneg %p175
      // Predicated region
      $region9: #{conv_map_cell_forward.21} parent=5 // pred_check
        _
      $region10: #{conv_map_cell_forward.21} parent=5 // pred_check_branch
        %178 = sbr.rel (%p175) target = $region12
      $region11: #{conv_map_cell_forward.21} parent=5 // pred_region
        %s179 = ssub.s32 %s10, 1
        // Predicated region
        $region13: #{conv_map_cell_forward.21} parent=11 // pred_check
          %p180 = pneg %p57
        $region14: #{conv_map_cell_forward.21} parent=11 // pred_check_branch
          %182 = sbr.rel (%p180) target = $region16
        $region15: #{conv_map_cell_forward.21} parent=11 // pred_region
          %s183 = smul.u32 9, %s20
          %p184 = scmp.lt.s32.totalorder %s183, 8
          %s185 = scalar_select %p184, %s183, 8
          %p186 = scmp.lt.s32.totalorder %s22, 0
          %s187 = scalar_select %p186, %s22, 0
          %s188 = sadd.s32 %s187, %s185
          %s189 = smul.addr %s188, 4
          %s190 = scalar_lea.vmem %s0, %s189
          %s191 = smul.u32 9, %s20
        $region16: #{conv_map_cell_forward.21} parent=11 // pred_fallthru
          _
      $region12: #{conv_map_cell_forward.21} parent=5 // pred_fallthru
        _
      %p192 = scmp.lt.s32.totalorder %s10, 3
      // Predicated region
      $region17: #{conv_map_cell_forward.21} parent=5 // pred_check
        %p193 = pneg %p192
      $region18: #{conv_map_cell_forward.21} parent=5 // pred_check_branch
        %195 = sbr.rel (%p193) target = $region20
      $region19: #{conv_map_cell_forward.21} parent=5 // pred_region
        // Predicated region
        $region21: #{conv_map_cell_forward.21} parent=19 // pred_check
          %p196 = pneg %p79
        $region22: #{conv_map_cell_forward.21} parent=19 // pred_check_branch
          %198 = sbr.rel (%p196) target = $region24
        $region23: #{conv_map_cell_forward.21} parent=19 // pred_region
          %s199 = sand.u32 %s69, 1
          %s200 = sand.u32 %s69, 1
          %s201 = smul.addr %s200, 64
          %s202 = scalar_lea.vmem [#allocation3], %s201
          %s203 = smul.u32 16, %s19
          %s204 = smul.addr %s203, 3
          %s205 = sadd.s32 %s18, %s204
          %s206 = smul.addr %s205, 4
          %s207 = scalar_lea.vmem %s1, %s206
          // Predicated region
          $region25: #{conv_map_cell_forward.21} parent=23 // pred_check
            _
          $region26: #{conv_map_cell_forward.21} parent=23 // pred_check_branch
            %209 = sbr.rel (0) target = $region28
          $region27: #{conv_map_cell_forward.21} parent=23 // pred_region
            // Predicated region
            $region29: #{conv_map_cell_forward.21} parent=27 // pred_check
              _
            $region30: #{conv_map_cell_forward.21} parent=27 // pred_check_branch
              %211 = sbr.rel target = $region32
            $region31: #{conv_map_cell_forward.21} parent=27 // pred_region
              // Predicated region
              $region44: #{conv_map_cell_forward.21} parent=31 // pred_check
                _
              $region45: #{conv_map_cell_forward.21} parent=31 // pred_check_branch
                %256 = sbr.rel (0) target = $region47
              $region46: #{conv_map_cell_forward.21} parent=31 // pred_region
                loop: start=0, step=1, limit=1
                $region48: #{conv_map_cell_forward.21} parent=46 // loop_pre_header
                  _
                $region49: #{conv_map_cell_forward.21} parent=46 // loop_header
                  %s258 = sphi 0, %s262
                  %p259 = scmp.ge.s32.totalorder %s258, 1
                  %s263 = sphi %s207, %s207
                  %s264 = sphi %s202, %s202
                $region50: #{conv_map_cell_forward.21} parent=46 // loop_header_branch
                  %261 = sbr.rel (%p259) target = $region54
                $region51: #{conv_map_cell_forward.21} parent=46 // loop_body
                  _
                $region52: #{conv_map_cell_forward.21} parent=46 // loop_footer
                  %s262 = sadd.s32 1, %s258
                $region53: #{conv_map_cell_forward.21} parent=46 // loop_footer_branch
                  %257 = sbr.rel target = $region49
                $region54: #{conv_map_cell_forward.21} parent=46 // loop_exit
                  _
                loop: start=0, step=1, limit=1
                $region55: #{conv_map_cell_forward.21} parent=46 // loop_pre_header
                  _
                $region56: #{conv_map_cell_forward.21} parent=46 // loop_header
                  %s267 = sphi 0, %s271
                  %p268 = scmp.ge.s32.totalorder %s267, 1
                  %s272 = sphi %s207, %s207
                  %s273 = sphi %s202, %s202
                $region57: #{conv_map_cell_forward.21} parent=46 // loop_header_branch
                  %270 = sbr.rel (%p268) target = $region61
                $region58: #{conv_map_cell_forward.21} parent=46 // loop_body
                  %v274 = vld [vmem:[%s272] sm:$0xf]
                  %275 = vst [vmem:[%s273] sm:$0xf] %v274
                  %v276 = vld [vmem:[%s272 + $0xc] sm:$0xf]
                  %277 = vst [vmem:[%s273 + $0x4] sm:$0xf] %v276
                  %v278 = vld [vmem:[%s272 + $0x18] sm:$0xf]
                  %279 = vst [vmem:[%s273 + $0x8] sm:$0xf] %v278
                  %v280 = vld [vmem:[%s272 + $0x24] sm:$0xf]
                  %281 = vst [vmem:[%s273 + $0xc] sm:$0xf] %v280
                  %v282 = vld [vmem:[%s272 + $0x30] sm:$0xf]
                  %283 = vst [vmem:[%s273 + $0x10] sm:$0xf] %v282
                  %v284 = vld [vmem:[%s272 + $0x3c] sm:$0xf]
                  %285 = vst [vmem:[%s273 + $0x14] sm:$0xf] %v284
                  %v286 = vld [vmem:[%s272 + $0x48] sm:$0xf]
                  %287 = vst [vmem:[%s273 + $0x18] sm:$0xf] %v286
                  %v288 = vld [vmem:[%s272 + $0x54] sm:$0xf]
                  %289 = vst [vmem:[%s273 + $0x1c] sm:$0xf] %v288
                  %v290 = vld [vmem:[%s272 + $0x60] sm:$0xf]
                  %291 = vst [vmem:[%s273 + $0x20] sm:$0xf] %v290
                  %v292 = vld [vmem:[%s272 + $0x6c] sm:$0xf]
                  %293 = vst [vmem:[%s273 + $0x24] sm:$0xf] %v292
                  %v294 = vld [vmem:[%s272 + $0x78] sm:$0xf]
                  %295 = vst [vmem:[%s273 + $0x28] sm:$0xf] %v294
                  %v296 = vld [vmem:[%s272 + $0x84] sm:$0xf]
                  %297 = vst [vmem:[%s273 + $0x2c] sm:$0xf] %v296
                  %v298 = vld [vmem:[%s272 + $0x90] sm:$0xf]
                  %299 = vst [vmem:[%s273 + $0x30] sm:$0xf] %v298
                  %v300 = vld [vmem:[%s272 + $0x9c] sm:$0xf]
                  %301 = vst [vmem:[%s273 + $0x34] sm:$0xf] %v300
                  %v302 = vld [vmem:[%s272 + $0xa8] sm:$0xf]
                  %303 = vst [vmem:[%s273 + $0x38] sm:$0xf] %v302
                  %v304 = vld [vmem:[%s272 + $0xb4] sm:$0xf]
                  %305 = vst [vmem:[%s273 + $0x3c] sm:$0xf] %v304
                $region59: #{conv_map_cell_forward.21} parent=46 // loop_footer
                  %s271 = sadd.s32 1, %s267
                $region60: #{conv_map_cell_forward.21} parent=46 // loop_footer_branch
                  %266 = sbr.rel target = $region56
                $region61: #{conv_map_cell_forward.21} parent=46 // loop_exit
                  _
              $region47: #{conv_map_cell_forward.21} parent=31 // pred_fallthru
                _
            $region32: #{conv_map_cell_forward.21} parent=27 // pred_fallthru
              _
            // Predicated region
            $region33: #{conv_map_cell_forward.21} parent=27 // pred_check
              _
            $region34: #{conv_map_cell_forward.21} parent=27 // pred_check_branch
              %213 = sbr.rel (0) target = $region36
            $region35: #{conv_map_cell_forward.21} parent=27 // pred_region
              loop: start=0, step=1, limit=1
              $region37: #{conv_map_cell_forward.21} parent=35 // loop_pre_header
                _
              $region38: #{conv_map_cell_forward.21} parent=35 // loop_header
                %s216 = sphi 0, %s220
                %p217 = scmp.ge.s32.totalorder %s216, 1
                %s221 = sphi %s207, %s207
                %s222 = sphi %s202, %s202
              $region39: #{conv_map_cell_forward.21} parent=35 // loop_header_branch
                %219 = sbr.rel (%p217) target = $region43
              $region40: #{conv_map_cell_forward.21} parent=35 // loop_body
                %v223 = vld [vmem:[%s221] sm:$0xf]
                %224 = vst [vmem:[%s222] sm:$0xf] %v223
                %v225 = vld [vmem:[%s221 + $0xc] sm:$0xf]
                %226 = vst [vmem:[%s222 + $0x4] sm:$0xf] %v225
                %v227 = vld [vmem:[%s221 + $0x18] sm:$0xf]
                %228 = vst [vmem:[%s222 + $0x8] sm:$0xf] %v227
                %v229 = vld [vmem:[%s221 + $0x24] sm:$0xf]
                %230 = vst [vmem:[%s222 + $0xc] sm:$0xf] %v229
                %v231 = vld [vmem:[%s221 + $0x30] sm:$0xf]
                %232 = vst [vmem:[%s222 + $0x10] sm:$0xf] %v231
                %v233 = vld [vmem:[%s221 + $0x3c] sm:$0xf]
                %234 = vst [vmem:[%s222 + $0x14] sm:$0xf] %v233
                %v235 = vld [vmem:[%s221 + $0x48] sm:$0xf]
                %236 = vst [vmem:[%s222 + $0x18] sm:$0xf] %v235
                %v237 = vld [vmem:[%s221 + $0x54] sm:$0xf]
                %238 = vst [vmem:[%s222 + $0x1c] sm:$0xf] %v237
                %v239 = vld [vmem:[%s221 + $0x60] sm:$0xf]
                %240 = vst [vmem:[%s222 + $0x20] sm:$0xf] %v239
                %v241 = vld [vmem:[%s221 + $0x6c] sm:$0xf]
                %242 = vst [vmem:[%s222 + $0x24] sm:$0xf] %v241
                %v243 = vld [vmem:[%s221 + $0x78] sm:$0xf]
                %244 = vst [vmem:[%s222 + $0x28] sm:$0xf] %v243
                %v245 = vld [vmem:[%s221 + $0x84] sm:$0xf]
                %246 = vst [vmem:[%s222 + $0x2c] sm:$0xf] %v245
                %v247 = vld [vmem:[%s221 + $0x90] sm:$0xf]
                %248 = vst [vmem:[%s222 + $0x30] sm:$0xf] %v247
                %v249 = vld [vmem:[%s221 + $0x9c] sm:$0xf]
                %250 = vst [vmem:[%s222 + $0x34] sm:$0xf] %v249
                %v251 = vld [vmem:[%s221 + $0xa8] sm:$0xf]
                %252 = vst [vmem:[%s222 + $0x38] sm:$0xf] %v251
                %v253 = vld [vmem:[%s221 + $0xb4] sm:$0xf]
                %254 = vst [vmem:[%s222 + $0x3c] sm:$0xf] %v253
              $region41: #{conv_map_cell_forward.21} parent=35 // loop_footer
                %s220 = sadd.s32 1, %s216
              $region42: #{conv_map_cell_forward.21} parent=35 // loop_footer_branch
                %215 = sbr.rel target = $region38
              $region43: #{conv_map_cell_forward.21} parent=35 // loop_exit
                _
            $region36: #{conv_map_cell_forward.21} parent=27 // pred_fallthru
              _
          $region28: #{conv_map_cell_forward.21} parent=23 // pred_fallthru
            _
          %306 = vnop
        $region24: #{conv_map_cell_forward.21} parent=19 // pred_fallthru
          _
        // Predicated region
        $region62: #{conv_map_cell_forward.21} parent=19 // pred_check
          %p307 = pneg %p105
        $region63: #{conv_map_cell_forward.21} parent=19 // pred_check_branch
          %309 = sbr.rel (%p307) target = $region65
        $region64: #{conv_map_cell_forward.21} parent=19 // pred_region
          %p310 = scmp.lt.s32.totalorder %s18, 2
          %s311 = scalar_select %p310, %s18, 2
          %s312 = scalar_lea.vmem %s2, %s311
        $region65: #{conv_map_cell_forward.21} parent=19 // pred_fallthru
          _
        // Predicated region
        $region66: #{conv_map_cell_forward.21} parent=19 // pred_check
          %p313 = pneg %p131
        $region67: #{conv_map_cell_forward.21} parent=19 // pred_check_branch
          %315 = sbr.rel (%p313) target = $region69
        $region68: #{conv_map_cell_forward.21} parent=19 // pred_region
          %p316 = scmp.lt.s32.totalorder %s18, 2
          %s317 = scalar_select %p316, %s18, 2
          %s318 = scalar_lea.vmem %s3, %s317
        $region69: #{conv_map_cell_forward.21} parent=19 // pred_fallthru
          _
      $region20: #{conv_map_cell_forward.21} parent=5 // pred_fallthru
        _
      %p319 = scmp.le.s32.totalorder 1, %s10
      %p320 = scmp.lt.s32.totalorder %s10, 4
      %p321 = pnand %p319, %p320
      %p322 = pneg %p321
      // Predicated region
      $region70: #{conv_map_cell_forward.21} parent=5 // pred_check
        _
      $region71: #{conv_map_cell_forward.21} parent=5 // pred_check_branch
        %324 = sbr.rel (%p321) target = $region73
      $region72: #{conv_map_cell_forward.21} parent=5 // pred_region
        %s325 = ssub.s32 %s10, 1
        %s326 = sand.u32 %s72, 1
        %s327 = sand.u32 %s72, 1
        %s328 = smul.addr %s327, 64
        %s329 = scalar_lea.vmem [#allocation3], %s328
        // Predicated region
        $region74: #{conv_map_cell_forward.21} parent=72 // pred_check
          %p330 = pneg %p85
        $region75: #{conv_map_cell_forward.21} parent=72 // pred_check_branch
          %332 = sbr.rel (%p330) target = $region77
        $region76: #{conv_map_cell_forward.21} parent=72 // pred_region
          _
        $region77: #{conv_map_cell_forward.21} parent=72 // pred_fallthru
          _
        %s333 = smul.u32 9, %s20
        %p334 = scmp.lt.s32.totalorder %s333, 8
        %s335 = scalar_select %p334, %s333, 8
        %p336 = scmp.lt.s32.totalorder %s22, 0
        %s337 = scalar_select %p336, %s22, 0
        %s338 = sadd.s32 %s337, %s335
        %s339 = smul.addr %s338, 4
        %s340 = scalar_lea.vmem %s0, %s339
        %p341 = pneg %p57
        %p342 = pneg %p54
        %s343 = sand.u32 %s72, 1
        %s344 = sand.u32 %s72, 1
        %s345 = smul.addr %s344, 64
        %s346 = scalar_lea.vmem [#allocation3], %s345
        %p347 = pneg %p85
        %p348 = pneg %p82
        %p349 = scmp.lt.s32.totalorder %s21, 2
        %s350 = scalar_select %p349, %s21, 2
        %s351 = scalar_lea.vmem %s2, %s350
        %p352 = pneg %p111
        %p353 = pneg %p108
        %p354 = scmp.lt.s32.totalorder %s21, 2
        %s355 = scalar_select %p354, %s21, 2
        %s356 = scalar_lea.vmem %s3, %s355
        %p357 = pneg %p137
        %p358 = pneg %p134
        %p359 = pneg %p165
        %p360 = pneg %p162
        %s361 = sand.u32 %s152, 1
        %s362 = sand.u32 %s152, 1
        %s363 = smul.addr %s362, 72
        %s364 = scalar_lea.vmem [#allocation4], %s363
        %s365 = smul.u32 9, %s20
        %p366 = scmp.lt.s32.totalorder %s365, 8
        %s367 = scalar_select %p366, %s365, 8
        %p368 = scmp.lt.s32.totalorder %s22, 0
        %s369 = scalar_select %p368, %s22, 0
        %s370 = sadd.s32 %s369, %s367
        %s371 = smul.addr %s370, 4
        %s372 = scalar_lea.vmem %s0, %s371
        %s373 = smul.u32 9, %s20
        %s374 = smul.u32 16, %s22
        %p375 = scmp.lt.s32.totalorder %s21, 2
        %s376 = scalar_select %p375, %s21, 2
        %s377 = scalar_lea.vmem %s2, %s376
        %p378 = scmp.lt.s32.totalorder %s21, 2
        %s379 = scalar_select %p378, %s21, 2
        %s380 = scalar_lea.vmem %s3, %s379
        %s381 = smul.u32 9, %s20
        %p383 = scmp.eq.s32.totalorder %s22, 0
        // Predicated region
        $region78: #{conv_map_cell_forward.21} parent=72 // pred_check
          %p384 = pneg %p383
        $region79: #{conv_map_cell_forward.21} parent=72 // pred_check_branch
          %386 = sbr.rel (%p384) target = $region81
        $region80: #{conv_map_cell_forward.21} parent=72 // pred_region
          %387 = vst [vmem:[#allocation2] sm:$0xff] 0.0
          %388 = vst [vmem:[#allocation2 + $0x8] sm:$0xff] 0.0
          %389 = vst [vmem:[#allocation2 + $0x10] sm:$0xff] 0.0
          %390 = vst [vmem:[#allocation2 + $0x18] sm:$0xff] 0.0
          %391 = vst [vmem:[#allocation2 + $0x20] sm:$0xff] 0.0
          %392 = vst [vmem:[#allocation2 + $0x28] sm:$0xff] 0.0
          %393 = vst [vmem:[#allocation2 + $0x30] sm:$0xff] 0.0
          %394 = vst [vmem:[#allocation2 + $0x38] sm:$0xff] 0.0
          %395 = vst [vmem:[#allocation2 + $0x40] sm:$0xff] 0.0
        $region81: #{conv_map_cell_forward.21} parent=72 // pred_fallthru
          _
        %v396 = vld [vmem:[#allocation2] sm:$0xff]
        %v397 = vld [vmem:[#allocation2 + $0x8] sm:$0xff]
        %v398 = vld [vmem:[#allocation2 + $0x10] sm:$0xff]
        %v399 = vld [vmem:[#allocation2 + $0x18] sm:$0xff]
        %v400 = vld [vmem:[#allocation2 + $0x20] sm:$0xff]
        %v401 = vld [vmem:[#allocation2 + $0x28] sm:$0xff]
        %v402 = vld [vmem:[#allocation2 + $0x30] sm:$0xff]
        %v403 = vld [vmem:[#allocation2 + $0x38] sm:$0xff]
        %v404 = vld [vmem:[#allocation2 + $0x40] sm:$0xff]
        %v405 = vld [vmem:[%s372] sm:$0xf]
        %v406 = vld [vmem:[%s372 + $0x4] sm:$0xf]
        %v407 = vld [vmem:[%s372 + $0x8] sm:$0xf]
        %v408 = vld [vmem:[%s372 + $0xc] sm:$0xf]
        %v409 = vld [vmem:[%s372 + $0x10] sm:$0xf]
        %v410 = vld [vmem:[%s372 + $0x14] sm:$0xf]
        %v411 = vld [vmem:[%s372 + $0x18] sm:$0xf]
        %v412 = vld [vmem:[%s372 + $0x1c] sm:$0xf]
        %v413 = vld [vmem:[%s372 + $0x20] sm:$0xf]
        %v414 = vld [vmem:[%s329] sm:$0xf]
        %v415 = vld [vmem:[%s329 + $0x4] sm:$0xf]
        %v416 = vld [vmem:[%s329 + $0x8] sm:$0xf]
        %v417 = vld [vmem:[%s329 + $0xc] sm:$0xf]
        %v418 = vld [vmem:[%s329 + $0x10] sm:$0xf]
        %v419 = vld [vmem:[%s329 + $0x14] sm:$0xf]
        %v420 = vld [vmem:[%s329 + $0x18] sm:$0xf]
        %v421 = vld [vmem:[%s329 + $0x1c] sm:$0xf]
        %v422 = vld [vmem:[%s329 + $0x20] sm:$0xf]
        %v423 = vld [vmem:[%s329 + $0x24] sm:$0xf]
        %v424 = vld [vmem:[%s329 + $0x28] sm:$0xf]
        %v425 = vld [vmem:[%s329 + $0x2c] sm:$0xf]
        %v426 = vld [vmem:[%s329 + $0x30] sm:$0xf]
        %v427 = vld [vmem:[%s329 + $0x34] sm:$0xf]
        %v428 = vld [vmem:[%s329 + $0x38] sm:$0xf]
        %v429 = vld [vmem:[%s329 + $0x3c] sm:$0xf]
        %v439 = vunpack.c.l.b16 %v405
        %v440 = vunpack.c.l.b16 %v406
        %v441 = vunpack.c.l.b16 %v407
        %v442 = vunpack.c.l.b16 %v408
        %v443 = vunpack.c.l.b16 %v409
        %v444 = vunpack.c.l.b16 %v410
        %v445 = vunpack.c.l.b16 %v411
        %v446 = vunpack.c.l.b16 %v412
        %v447 = vunpack.c.l.b16 %v413
        %v448 = vpack.c.b16 %v440, %v439
        %v449 = vpack.c.b16 %v442, %v441
        %v450 = vpack.c.b16 %v444, %v443
        %v451 = vpack.c.b16 %v446, %v445
        %v452 = vpack.c.b16 %v447, %v447
        %v474 = vunpack.c.l.b16 %v414
        %v475 = vunpack.c.l.b16 %v415
        %v476 = vunpack.c.l.b16 %v416
        %v477 = vunpack.c.l.b16 %v417
        %v478 = vunpack.c.l.b16 %v418
        %v479 = vunpack.c.l.b16 %v419
        %v480 = vunpack.c.l.b16 %v420
        %v481 = vunpack.c.l.b16 %v421
        %v482 = vunpack.c.l.b16 %v422
        %v483 = vunpack.c.l.b16 %v423
        %v484 = vunpack.c.l.b16 %v424
        %v485 = vunpack.c.l.b16 %v425
        %v486 = vunpack.c.l.b16 %v426
        %v487 = vunpack.c.l.b16 %v427
        %v488 = vunpack.c.l.b16 %v428
        %v489 = vunpack.c.l.b16 %v429
        %v490 = vpack.c.b16 %v475, %v474
        %v491 = vpack.c.b16 %v477, %v476
        %v492 = vpack.c.b16 %v479, %v478
        %v493 = vpack.c.b16 %v481, %v480
        %v494 = vpack.c.b16 %v483, %v482
        %v495 = vpack.c.b16 %v485, %v484
        %v496 = vpack.c.b16 %v487, %v486
        %v497 = vpack.c.b16 %v489, %v488
        %506 = vmatprep.subr.bf16.mxu0 0
        %507 = vmatpush1.bf16.msra.mxu0 %v490
        %508 = vmatprep.subr.bf16.mxu0 0
        %509 = vmatpush1.bf16.msra.mxu0 %v491
        %510 = vmatprep.subr.bf16.mxu0 0
        %511 = vmatpush1.bf16.msra.mxu0 %v492
        %512 = vmatprep.subr.bf16.mxu0 0
        %513 = vmatpush1.bf16.msra.mxu0 %v493
        %514 = vmatprep.subr.bf16.mxu0 0
        %515 = vmatpush1.bf16.msra.mxu0 %v494
        %516 = vmatprep.subr.bf16.mxu0 0
        %517 = vmatpush1.bf16.msra.mxu0 %v495
        %518 = vmatprep.subr.bf16.mxu0 0
        %519 = vmatpush1.bf16.msra.mxu0 %v496
        %520 = vmatprep.subr.bf16.mxu0 0
        %521 = vmatpush1.bf16.msra.mxu0 %v497
        %522 = vmatprep.subr.bf16.mxu0 0
        %523 = vmatpush1.bf16.msra.mxu0 0
        %524 = vmatprep.subr.bf16.mxu0 0
        %525 = vmatpush1.bf16.msra.mxu0 0
        %526 = vmatprep.subr.bf16.mxu0 0
        %527 = vmatpush1.bf16.msra.mxu0 0
        %528 = vmatprep.subr.bf16.mxu0 0
        %529 = vmatpush1.bf16.msra.mxu0 0
        %530 = vmatprep.subr.bf16.mxu0 0
        %531 = vmatpush1.bf16.msra.mxu0 0
        %532 = vmatprep.subr.bf16.mxu0 0
        %533 = vmatpush1.bf16.msra.mxu0 0
        %534 = vmatprep.subr.bf16.mxu0 0
        %535 = vmatpush1.bf16.msra.mxu0 0
        %536 = vmatprep.subr.bf16.mxu0 0
        %537 = vmatpush1.bf16.msra.mxu0 0
        %538 = vmatprep.mubr.bf16.mxu0 0
        %539 = vmatmul.mubr.bf16.gmra.mrb[0].mxu0 %v448
        %v540 = vpop.f32.mrb[0].mxu0
        %v541 = vadd.f32 0.0, %v540
        %v542 = vpop.f32.mrb[0].mxu0
        %v543 = vpop.f32.mrb[0].mxu0
        %v544 = vadd.f32 0.0, %v543
        %v545 = vpop.f32.mrb[0].mxu0
        %546 = vmatprep.mubr.bf16.mxu0 0
        %547 = vmatmul.mubr.bf16.gmra.mrb[0].mxu0 %v449
        %v548 = vpop.f32.mrb[0].mxu0
        %v549 = vadd.f32 0.0, %v548
        %v550 = vpop.f32.mrb[0].mxu0
        %v551 = vpop.f32.mrb[0].mxu0
        %v552 = vadd.f32 0.0, %v551
        %v553 = vpop.f32.mrb[0].mxu0
        %554 = vmatprep.mubr.bf16.mxu0 0
        %555 = vmatmul.mubr.bf16.gmra.mrb[0].mxu0 %v450
        %v556 = vpop.f32.mrb[0].mxu0
        %v557 = vadd.f32 0.0, %v556
        %v558 = vpop.f32.mrb[0].mxu0
        %v559 = vpop.f32.mrb[0].mxu0
        %v560 = vadd.f32 0.0, %v559
        %v561 = vpop.f32.mrb[0].mxu0
        %562 = vmatprep.mubr.bf16.mxu0 0
        %563 = vmatmul.mubr.bf16.gmra.mrb[0].mxu0 %v451
        %v564 = vpop.f32.mrb[0].mxu0
        %v565 = vadd.f32 0.0, %v564
        %v566 = vpop.f32.mrb[0].mxu0
        %v567 = vpop.f32.mrb[0].mxu0
        %v568 = vadd.f32 0.0, %v567
        %v569 = vpop.f32.mrb[0].mxu0
        %570 = vmatprep.mubr.bf16.mxu0 0
        %571 = vmatmul.mubr.bf16.gmra.mrb[0].mxu0 %v452
        %v572 = vpop.f32.mrb[0].mxu0
        %v573 = vadd.f32 0.0, %v572
        %v574 = vpop.f32.mrb[0].mxu0
        %v575 = vpop.f32.mrb[0].mxu0
        %v576 = vpop.f32.mrb[0].mxu0
        %577 = vdwg.mxu0
        %v578 = vadd.f32 %v396, %v541
        %v579 = vadd.f32 %v397, %v544
        %v580 = vadd.f32 %v398, %v549
        %v581 = vadd.f32 %v399, %v552
        %v582 = vadd.f32 %v400, %v557
        %v583 = vadd.f32 %v401, %v560
        %v584 = vadd.f32 %v402, %v565
        %v585 = vadd.f32 %v403, %v568
        %v586 = vadd.f32 %v404, %v573
        %587 = vst [vmem:[#allocation2] sm:$0xff] %v578
        %588 = vst [vmem:[#allocation2 + $0x8] sm:$0xff] %v579
        %589 = vst [vmem:[#allocation2 + $0x10] sm:$0xff] %v580
        %590 = vst [vmem:[#allocation2 + $0x18] sm:$0xff] %v581
        %591 = vst [vmem:[#allocation2 + $0x20] sm:$0xff] %v582
        %592 = vst [vmem:[#allocation2 + $0x28] sm:$0xff] %v583
        %593 = vst [vmem:[#allocation2 + $0x30] sm:$0xff] %v584
        %594 = vst [vmem:[#allocation2 + $0x38] sm:$0xff] %v585
        %595 = vst [vmem:[#allocation2 + $0x40] sm:$0xff] %v586
        // Predicated region
        $region82: #{conv_map_cell_forward.21} parent=72 // pred_check
          %p596 = pneg %p383
        $region83: #{conv_map_cell_forward.21} parent=72 // pred_check_branch
          %598 = sbr.rel (%p596) target = $region85
        $region84: #{conv_map_cell_forward.21} parent=72 // pred_region
          %v599 = vld [vmem:[#allocation2] sm:$0xff]
          %v600 = vld [vmem:[#allocation2 + $0x8] sm:$0xff]
          %v601 = vld [vmem:[#allocation2 + $0x10] sm:$0xff]
          %v602 = vld [vmem:[#allocation2 + $0x18] sm:$0xff]
          %v603 = vld [vmem:[#allocation2 + $0x20] sm:$0xff]
          %v604 = vld [vmem:[#allocation2 + $0x28] sm:$0xff]
          %v605 = vld [vmem:[#allocation2 + $0x30] sm:$0xff]
          %v606 = vld [vmem:[#allocation2 + $0x38] sm:$0xff]
          %v607 = vld [vmem:[#allocation2 + $0x40] sm:$0xff]
          %v608 = vld [vmem:[%s377] sm:$0x1]
          %v610 = vlaneseq
          %v611 = vshrl.u32 %v610, 7
          %v612 = vsub.s32 0, %v611
          %v613 = vrot.slane %v608, %v612
          %v615 = vmul.f32 %v599, %v613
          %v616 = vmul.f32 %v600, %v613
          %v617 = vmul.f32 %v601, %v613
          %v618 = vmul.f32 %v602, %v613
          %v619 = vmul.f32 %v603, %v613
          %v620 = vmul.f32 %v604, %v613
          %v621 = vmul.f32 %v605, %v613
          %v622 = vmul.f32 %v606, %v613
          %v623 = vmul.f32 %v607, %v613
          %v624 = vld [vmem:[%s380] sm:$0x1]
          %v626 = vlaneseq
          %v627 = vshrl.u32 %v626, 7
          %v628 = vsub.s32 0, %v627
          %v629 = vrot.slane %v624, %v628
          %v631 = vadd.f32 %v615, %v629
          %v632 = vadd.f32 %v616, %v629
          %v633 = vadd.f32 %v617, %v629
          %v634 = vadd.f32 %v618, %v629
          %v635 = vadd.f32 %v619, %v629
          %v636 = vadd.f32 %v620, %v629
          %v637 = vadd.f32 %v621, %v629
          %v638 = vadd.f32 %v622, %v629
          %v639 = vadd.f32 %v623, %v629
          %640 = vst [vmem:[%s364] sm:$0xff] %v631
          %641 = vst [vmem:[%s364 + $0x8] sm:$0xff] %v632
          %642 = vst [vmem:[%s364 + $0x10] sm:$0xff] %v633
          %643 = vst [vmem:[%s364 + $0x18] sm:$0xff] %v634
          %644 = vst [vmem:[%s364 + $0x20] sm:$0xff] %v635
          %645 = vst [vmem:[%s364 + $0x28] sm:$0xff] %v636
          %646 = vst [vmem:[%s364 + $0x30] sm:$0xff] %v637
          %647 = vst [vmem:[%s364 + $0x38] sm:$0xff] %v638
          %648 = vst [vmem:[%s364 + $0x40] sm:$0xff] %v639
        $region85: #{conv_map_cell_forward.21} parent=72 // pred_fallthru
          _
        %s649 = sand.u32 %s152, 1
        %s650 = sand.u32 %s152, 1
        %s651 = smul.addr %s650, 72
        %s652 = scalar_lea.vmem [#allocation4], %s651
        // Predicated region
        $region86: #{conv_map_cell_forward.21} parent=72 // pred_check
          %p653 = pneg %p162
        $region87: #{conv_map_cell_forward.21} parent=72 // pred_check_branch
          %655 = sbr.rel (%p653) target = $region89
        $region88: #{conv_map_cell_forward.21} parent=72 // pred_region
          %s656 = smul.u32 9, %s20
          %s657 = smul.addr %s656, 3
          %s658 = sadd.s32 %s21, %s657
          %s659 = smul.addr %s658, 8
          %s660 = scalar_lea.vmem %s4, %s659
          // Predicated region
          $region90: #{conv_map_cell_forward.21} parent=88 // pred_check
            _
          $region91: #{conv_map_cell_forward.21} parent=88 // pred_check_branch
            %662 = sbr.rel (0) target = $region93
          $region92: #{conv_map_cell_forward.21} parent=88 // pred_region
            // Predicated region
            $region94: #{conv_map_cell_forward.21} parent=92 // pred_check
              _
            $region95: #{conv_map_cell_forward.21} parent=92 // pred_check_branch
              %664 = sbr.rel (0) target = $region97
            $region96: #{conv_map_cell_forward.21} parent=92 // pred_region
              // Predicated region
              $region109: #{conv_map_cell_forward.21} parent=96 // pred_check
                _
              $region110: #{conv_map_cell_forward.21} parent=96 // pred_check_branch
                %695 = sbr.rel (0) target = $region112
              $region111: #{conv_map_cell_forward.21} parent=96 // pred_region
                loop: start=0, step=1, limit=1
                $region113: #{conv_map_cell_forward.21} parent=111 // loop_pre_header
                  _
                $region114: #{conv_map_cell_forward.21} parent=111 // loop_header
                  %s697 = sphi 0, %s701
                  %p698 = scmp.ge.s32.totalorder %s697, 1
                  %s702 = sphi %s652, %s652
                  %s703 = sphi %s660, %s660
                $region115: #{conv_map_cell_forward.21} parent=111 // loop_header_branch
                  %700 = sbr.rel (%p698) target = $region119
                $region116: #{conv_map_cell_forward.21} parent=111 // loop_body
                  %v704 = vld [vmem:[%s702] sm:$0xff]
                  %705 = vst [vmem:[%s703] sm:$0xff] %v704
                  %v706 = vld [vmem:[%s702 + $0x8] sm:$0xff]
                  %707 = vst [vmem:[%s703 + $0x18] sm:$0xff] %v706
                  %v708 = vld [vmem:[%s702 + $0x10] sm:$0xff]
                  %709 = vst [vmem:[%s703 + $0x30] sm:$0xff] %v708
                  %v710 = vld [vmem:[%s702 + $0x18] sm:$0xff]
                  %711 = vst [vmem:[%s703 + $0x48] sm:$0xff] %v710
                  %v712 = vld [vmem:[%s702 + $0x20] sm:$0xff]
                  %713 = vst [vmem:[%s703 + $0x60] sm:$0xff] %v712
                  %v714 = vld [vmem:[%s702 + $0x28] sm:$0xff]
                  %715 = vst [vmem:[%s703 + $0x78] sm:$0xff] %v714
                  %v716 = vld [vmem:[%s702 + $0x30] sm:$0xff]
                  %717 = vst [vmem:[%s703 + $0x90] sm:$0xff] %v716
                  %v718 = vld [vmem:[%s702 + $0x38] sm:$0xff]
                  %719 = vst [vmem:[%s703 + $0xa8] sm:$0xff] %v718
                  %v720 = vld [vmem:[%s702 + $0x40] sm:$0xff]
                  %721 = vst [vmem:[%s703 + $0xc0] sm:$0xff] %v720
                $region117: #{conv_map_cell_forward.21} parent=111 // loop_footer
                  %s701 = sadd.s32 1, %s697
                $region118: #{conv_map_cell_forward.21} parent=111 // loop_footer_branch
                  %696 = sbr.rel target = $region114
                $region119: #{conv_map_cell_forward.21} parent=111 // loop_exit
                  _
              $region112: #{conv_map_cell_forward.21} parent=96 // pred_fallthru
                _
              // Predicated region
              $region120: #{conv_map_cell_forward.21} parent=96 // pred_check
                _
              $region121: #{conv_map_cell_forward.21} parent=96 // pred_check_branch
                %723 = sbr.rel target = $region123
              $region122: #{conv_map_cell_forward.21} parent=96 // pred_region
                _
              $region123: #{conv_map_cell_forward.21} parent=96 // pred_fallthru
                _
            $region97: #{conv_map_cell_forward.21} parent=92 // pred_fallthru
              _
            // Predicated region
            $region98: #{conv_map_cell_forward.21} parent=92 // pred_check
              _
            $region99: #{conv_map_cell_forward.21} parent=92 // pred_check_branch
              %666 = sbr.rel target = $region101
            $region100: #{conv_map_cell_forward.21} parent=92 // pred_region
              loop: start=0, step=1, limit=1
              $region102: #{conv_map_cell_forward.21} parent=100 // loop_pre_header
                _
              $region103: #{conv_map_cell_forward.21} parent=100 // loop_header
                %s669 = sphi 0, %s673
                %p670 = scmp.ge.s32.totalorder %s669, 1
                %s674 = sphi %s652, %s652
                %s675 = sphi %s660, %s660
              $region104: #{conv_map_cell_forward.21} parent=100 // loop_header_branch
                %672 = sbr.rel (%p670) target = $region108
              $region105: #{conv_map_cell_forward.21} parent=100 // loop_body
                %v676 = vld [vmem:[%s674] sm:$0xff]
                %677 = vst [vmem:[%s675] sm:$0xff] %v676
                %v678 = vld [vmem:[%s674 + $0x8] sm:$0xff]
                %679 = vst [vmem:[%s675 + $0x18] sm:$0xff] %v678
                %v680 = vld [vmem:[%s674 + $0x10] sm:$0xff]
                %681 = vst [vmem:[%s675 + $0x30] sm:$0xff] %v680
                %v682 = vld [vmem:[%s674 + $0x18] sm:$0xff]
                %683 = vst [vmem:[%s675 + $0x48] sm:$0xff] %v682
                %v684 = vld [vmem:[%s674 + $0x20] sm:$0xff]
                %685 = vst [vmem:[%s675 + $0x60] sm:$0xff] %v684
                %v686 = vld [vmem:[%s674 + $0x28] sm:$0xff]
                %687 = vst [vmem:[%s675 + $0x78] sm:$0xff] %v686
                %v688 = vld [vmem:[%s674 + $0x30] sm:$0xff]
                %689 = vst [vmem:[%s675 + $0x90] sm:$0xff] %v688
                %v690 = vld [vmem:[%s674 + $0x38] sm:$0xff]
                %691 = vst [vmem:[%s675 + $0xa8] sm:$0xff] %v690
                %v692 = vld [vmem:[%s674 + $0x40] sm:$0xff]
                %693 = vst [vmem:[%s675 + $0xc0] sm:$0xff] %v692
              $region106: #{conv_map_cell_forward.21} parent=100 // loop_footer
                %s673 = sadd.s32 1, %s669
              $region107: #{conv_map_cell_forward.21} parent=100 // loop_footer_branch
                %668 = sbr.rel target = $region103
              $region108: #{conv_map_cell_forward.21} parent=100 // loop_exit
                _
            $region101: #{conv_map_cell_forward.21} parent=92 // pred_fallthru
              _
          $region93: #{conv_map_cell_forward.21} parent=88 // pred_fallthru
            _
          %724 = vnop
        $region89: #{conv_map_cell_forward.21} parent=72 // pred_fallthru
          _
      $region73: #{conv_map_cell_forward.21} parent=5 // pred_fallthru
        _
      %p725 = scmp.le.s32.totalorder 2, %s10
      // Predicated region
      $region124: #{conv_map_cell_forward.21} parent=5 // pred_check
        %p726 = pneg %p725
      $region125: #{conv_map_cell_forward.21} parent=5 // pred_check_branch
        %728 = sbr.rel (%p726) target = $region127
      $region126: #{conv_map_cell_forward.21} parent=5 // pred_region
        %s729 = ssub.s32 %s10, 2
        // Predicated region
        $region128: #{conv_map_cell_forward.21} parent=126 // pred_check
          %p730 = pneg %p168
        $region129: #{conv_map_cell_forward.21} parent=126 // pred_check_branch
          %732 = sbr.rel (%p730) target = $region131
        $region130: #{conv_map_cell_forward.21} parent=126 // pred_region
          %s733 = sand.u32 %s153, 1
          %s734 = sand.u32 %s153, 1
          %s735 = smul.addr %s734, 72
          %s736 = scalar_lea.vmem [#allocation4], %s735
        $region131: #{conv_map_cell_forward.21} parent=126 // pred_fallthru
          _
      $region127: #{conv_map_cell_forward.21} parent=5 // pred_fallthru
        _
    $region6: #{conv_map_cell_forward.21} parent=1 // loop_footer
      %s14 = sadd.s32 1, %s10
    $region7: #{conv_map_cell_forward.21} parent=1 // loop_footer_branch
      %9 = sbr.rel target = $region3
    $region8: #{conv_map_cell_forward.21} parent=1 // loop_exit
      _

</llo_original>
